<compile_context>
chip_gen: v7x
topology: tpu7x:2x2x1
jax: 0.10.0
libtpu: 0.0.40
codegen_flags: <defaults>
</compile_context>

<pallas_src>
import functools
import math

import jax
import jax.numpy as jnp
from jax.experimental import pallas as pl
from jax.experimental.pallas import tpu as pltpu


# ---------------------------------------------------------------------------
# Shared layer-norm math (used inside kernels and in plain-JAX glue)
# ---------------------------------------------------------------------------
def _ln(x, g, b, eps):
    mean = jnp.mean(x, axis=-1, keepdims=True)
    var = jnp.mean((x - mean) ** 2, axis=-1, keepdims=True)   # biased, like torch LN
    return (x - mean) * jax.lax.rsqrt(var + eps) * g + b


# ---------------------------------------------------------------------------
# Kernel 1: row-tiled linear (optional fused ReLU)
# ---------------------------------------------------------------------------
def _linear_kernel(x_ref, w_ref, b_ref, o_ref, *, relu):
    y = jnp.dot(x_ref[...], w_ref[...], preferred_element_type=jnp.float32) + b_ref[...]
    if relu:
        y = jnp.maximum(y, 0.0)
    o_ref[...] = y


def linear(x2d, w, b, *, relu=False, tm=512):
    """y = [relu](x2d @ w + b), tiled over rows (grid pipelined, weights resident)."""
    M, K = x2d.shape
    N = w.shape[1]
    tm = min(tm, M)          # tm == M (full) or 512 (multiple of 8) -> layout-legal
    return pl.pallas_call(
        functools.partial(_linear_kernel, relu=relu),
        out_shape=jax.ShapeDtypeStruct((M, N), jnp.float32),
        grid=(pl.cdiv(M, tm),),
        in_specs=[
            pl.BlockSpec((tm, K), lambda i: (i, 0)),
            pl.BlockSpec((K, N), lambda i: (0, 0)),
            pl.BlockSpec((1, N), lambda i: (0, 0)),
        ],
        out_specs=pl.BlockSpec((tm, N), lambda i: (i, 0)),
        compiler_params=pltpu.CompilerParams(dimension_semantics=("parallel",)),
    )(x2d, w, b.reshape(1, N))


# ---------------------------------------------------------------------------
# Kernel 2: fused NodeEdgeBlock hot path.
# Per grid point (b, qi): stream one (tq, n, de) edge block, project e_mul/e_add,
# build Y, project e_out -> newE (de-wide), masked softmax over keys, weighted V,
# FiLM with y, x_out projection -> newX.  E is read once; no dx-wide edge temps
# ever hit HBM.
# ---------------------------------------------------------------------------
def _attn_kernel(q_ref, k_ref, v_ref, e_ref, mq_ref, mk_ref,
                 yea_ref, yem1_ref, yxa_ref, yxm1_ref,
                 wem_ref, bem_ref, wea_ref, bea_ref,
                 weo_ref, beo_ref, wxo_ref, bxo_ref,
                 newe_ref, newx_ref, *, inv_sqrt_df):
    tq = q_ref.shape[1]
    n = k_ref.shape[1]
    dx = q_ref.shape[2]
    de = e_ref.shape[3]

    mq = mq_ref[0]                        # (tq, 1)  query-row mask
    mk = mk_ref[0]                        # (n, 1)   key mask
    q = q_ref[0] * mq                     # (tq, dx)
    k = k_ref[0] * mk                     # (n, dx)
    v = v_ref[0] * mk                     # (n, dx)
    emask = mq[:, None, :] * mk[None, :, :]        # (tq, n, 1)

    # --- fused edge projections (single streaming pass over the E block) ---
    e_flat = e_ref[0].reshape(tq * n, de)
    e_mul = (jnp.dot(e_flat, wem_ref[...], preferred_element_type=jnp.float32)
             + bem_ref[...]).reshape(tq, n, dx) * emask
    e_add = (jnp.dot(e_flat, wea_ref[...], preferred_element_type=jnp.float32)
             + bea_ref[...]).reshape(tq, n, dx) * emask

    # --- per-channel attention logits (heads are flattened; mask/scale are
    #     per-(head, df) channel so flat dx is exactly equivalent) ---
    Y = (q[:, None, :] * k[None, :, :]) * inv_sqrt_df
    Y = Y * (e_mul + 1.0) + e_add                  # (tq, n, dx)

    # --- edge output: FiLM with y, e_out back to de, edge mask ---
    newe = yea_ref[0][None] + yem1_ref[0][None] * Y     # (y_e_mul + 1) precomputed
    newe = (jnp.dot(newe.reshape(tq * n, dx), weo_ref[...],
                    preferred_element_type=jnp.float32)
            + beo_ref[...]).reshape(tq, n, de) * emask
    newe_ref[0] = newe
    # TODO(synk): de=16 makes this a lane-sparse masked vst; a lane-dense repack
    # of the (n, de) trailing dims would further help v5e store throughput.

    # --- masked softmax over keys (axis=1); key-only mask, scalar fill ---
    # TODO(synk): torch masked_softmax returns raw logits when mask.sum()==0 for
    # the whole tensor; that degenerate branch is not replicated here.
    logits = jnp.where(mk[None, :, :] > 0.0, Y, -1e30)
    mx = jnp.max(logits, axis=1, keepdims=True)
    p = jnp.exp(logits - mx)
    denom = jnp.sum(p, axis=1, keepdims=True)
    attn = p * pl.reciprocal(denom, approx=True)   # EUP slot, not VALU divide

    wv = jnp.sum(attn * v[None, :, :], axis=1)     # (tq, dx)

    # --- node output: FiLM with y, x_out projection, node mask ---
    xpre = yxa_ref[0] + yxm1_ref[0] * wv           # (y_x_mul + 1) precomputed
    newx_ref[0] = (jnp.dot(xpre, wxo_ref[...], preferred_element_type=jnp.float32)
                   + bxo_ref[...]) * mq


def _pick_tq(n):
    # Query-tile size: full n for small graphs; otherwise a multiple of 8 that
    # divides n so the mask/Q/E BlockSpecs stay (8,128)-legal.
    if n <= 128:
        return n
    for t in (128, 64, 32, 16, 8):
        if n % t == 0:
            return t
    return n


def node_edge_attention(Q, K, V, E, x_mask, yea, yem1, yxa, yxm1, p, n_head):
    bs, n, dx = Q.shape
    de = E.shape[-1]
    df = dx // n_head
    tq = _pick_tq(n)
    kern = functools.partial(_attn_kernel, inv_sqrt_df=1.0 / math.sqrt(df))
    newE, newX = pl.pallas_call(
        kern,
        out_shape=(
            jax.ShapeDtypeStruct((bs, n, n, de), jnp.float32),   # newE (already de-wide)
            jax.ShapeDtypeStruct((bs, n, dx), jnp.float32),      # newX (already projected)
        ),
        grid=(bs, pl.cdiv(n, tq)),
        in_specs=[
            pl.BlockSpec((1, tq, dx), lambda b, i: (b, i, 0)),        # Q (query tile)
            pl.BlockSpec((1, n, dx), lambda b, i: (b, 0, 0)),         # K (full keys)
            pl.BlockSpec((1, n, dx), lambda b, i: (b, 0, 0)),         # V (full keys)
            pl.BlockSpec((1, tq, n, de), lambda b, i: (b, i, 0, 0)),  # E (query-row tile)
            pl.BlockSpec((1, tq, 1), lambda b, i: (b, i, 0)),         # mask (query rows)
            pl.BlockSpec((1, n, 1), lambda b, i: (b, 0, 0)),          # mask (keys)
            pl.BlockSpec((1, 1, dx), lambda b, i: (b, 0, 0)),         # y_e_add(y)
            pl.BlockSpec((1, 1, dx), lambda b, i: (b, 0, 0)),         # y_e_mul(y) + 1
            pl.BlockSpec((1, 1, dx), lambda b, i: (b, 0, 0)),         # y_x_add(y)
            pl.BlockSpec((1, 1, dx), lambda b, i: (b, 0, 0)),         # y_x_mul(y) + 1
            pl.BlockSpec((de, dx), lambda b, i: (0, 0)),              # W e_mul
            pl.BlockSpec((1, dx), lambda b, i: (0, 0)),               # b e_mul
            pl.BlockSpec((de, dx), lambda b, i: (0, 0)),              # W e_add
            pl.BlockSpec((1, dx), lambda b, i: (0, 0)),               # b e_add
            pl.BlockSpec((dx, de), lambda b, i: (0, 0)),              # W e_out
            pl.BlockSpec((1, de), lambda b, i: (0, 0)),               # b e_out
            pl.BlockSpec((dx, dx), lambda b, i: (0, 0)),              # W x_out
            pl.BlockSpec((1, dx), lambda b, i: (0, 0)),               # b x_out
        ],
        out_specs=(
            pl.BlockSpec((1, tq, n, de), lambda b, i: (b, i, 0, 0)),
            pl.BlockSpec((1, tq, dx), lambda b, i: (b, i, 0)),
        ),
        compiler_params=pltpu.CompilerParams(
            dimension_semantics=("parallel", "parallel")),
    )(Q, K, V, E, x_mask, x_mask, yea, yem1, yxa, yxm1,
      p["e_mul"][0], p["e_mul"][1].reshape(1, dx),
      p["e_add"][0], p["e_add"][1].reshape(1, dx),
      p["e_out"][0], p["e_out"][1].reshape(1, de),
      p["x_out"][0], p["x_out"][1].reshape(1, dx))
    return newE, newX


# ---------------------------------------------------------------------------
# Kernel 3: fused residual + LN1 + FFN(ReLU) + residual + LN2 (per row block).
# The (tm, dim_ff) hidden activation and the LN1 output never hit HBM.
# ---------------------------------------------------------------------------
def _res_ln_ffn_ln_kernel(x_ref, r_ref, g1_ref, be1_ref, w1_ref, bw1_ref,
                          w2_ref, bw2_ref, g2_ref, be2_ref, o_ref, *, eps):
    h = _ln(x_ref[...] + r_ref[...], g1_ref[...], be1_ref[...], eps)
    f = jnp.maximum(
        jnp.dot(h, w1_ref[...], preferred_element_type=jnp.float32) + bw1_ref[...], 0.0)
    f = jnp.dot(f, w2_ref[...], preferred_element_type=jnp.float32) + bw2_ref[...]
    o_ref[...] = _ln(h + f, g2_ref[...], be2_ref[...], eps)


def res_ln_ffn_ln(x2d, res2d, g1, be1, w1, bw1, w2, bw2, g2, be2, *, eps=1e-5, tm=512):
    M, D = x2d.shape
    F = w1.shape[1]
    tm = min(tm, M)
    return pl.pallas_call(
        functools.partial(_res_ln_ffn_ln_kernel, eps=eps),
        out_shape=jax.ShapeDtypeStruct((M, D), jnp.float32),
        grid=(pl.cdiv(M, tm),),
        in_specs=[
            pl.BlockSpec((tm, D), lambda i: (i, 0)),    # x
            pl.BlockSpec((tm, D), lambda i: (i, 0)),    # residual
            pl.BlockSpec((1, D), lambda i: (0, 0)),     # LN1 gamma
            pl.BlockSpec((1, D), lambda i: (0, 0)),     # LN1 beta
            pl.BlockSpec((D, F), lambda i: (0, 0)),     # W1
            pl.BlockSpec((1, F), lambda i: (0, 0)),     # b1
            pl.BlockSpec((F, D), lambda i: (0, 0)),     # W2
            pl.BlockSpec((1, D), lambda i: (0, 0)),     # b2
            pl.BlockSpec((1, D), lambda i: (0, 0)),     # LN2 gamma
            pl.BlockSpec((1, D), lambda i: (0, 0)),     # LN2 beta
        ],
        out_specs=pl.BlockSpec((tm, D), lambda i: (i, 0)),
        compiler_params=pltpu.CompilerParams(dimension_semantics=("parallel",)),
    )(x2d, res2d, g1, be1, w1, bw1.reshape(1, F), w2, bw2.reshape(1, D), g2, be2)


# ---------------------------------------------------------------------------
# NodeEdgeBlock + XEyTransformerLayer forward (glue in plain JAX)
# ---------------------------------------------------------------------------
def node_edge_block(p, X, E, y, node_mask, n_head):
    bs, n, dx = X.shape
    de = E.shape[-1]
    x_mask = node_mask[..., None].astype(jnp.float32)            # (bs, n, 1)

    # Fused Q/K/V projection: one tiled MXU pass over X.
    qkv = linear(X.reshape(bs * n, dx), p["qkv_w"], p["qkv_b"]).reshape(bs, n, 3 * dx)
    Q, K, V = qkv[..., :dx], qkv[..., dx:2 * dx], qkv[..., 2 * dx:]

    # The four y->dx FiLM projections fused into one matmul; M = bs is tiny, so
    # this stays in plain JAX / XLA.  The "+1" FiLM constants are folded here so
    # the attention kernel doesn't redo them per tile.
    y4 = y @ p["y4_w"] + p["y4_b"]                               # (bs, 4*dx)
    yea = y4[:, None, 0 * dx:1 * dx]
    yem1 = y4[:, None, 1 * dx:2 * dx] + 1.0
    yxa = y4[:, None, 2 * dx:3 * dx]
    yxm1 = y4[:, None, 3 * dx:4 * dx] + 1.0

    # Fused attention + edge projections kernel (E streamed once).
    newE, newX = node_edge_attention(Q, K, V, E, x_mask, yea, yem1, yxa, yxm1, p, n_head)

    # Global-feature path: everything is (bs, dy)-sized -> plain JAX / XLA.
    # TODO(synk): the mean/min/max/std pooling re-reads X and E from HBM; it could
    # be folded as partial statistics into the attention kernel's streaming pass.
    yy = y @ p["y_y"][0] + p["y_y"][1]
    zx = jnp.concatenate(
        [X.mean(axis=1), X.min(axis=1), X.max(axis=1), jnp.std(X, axis=1, ddof=1)],
        axis=-1)
    x_y = zx @ p["x_y"][0] + p["x_y"][1]
    ze = jnp.concatenate(
        [E.mean(axis=(1, 2)), E.min(axis=(1, 2)), E.max(axis=(1, 2)),
         jnp.std(E.reshape(bs, n * n, de), axis=1, ddof=1)],
        axis=-1)
    e_y = ze @ p["e_y"][0] + p["e_y"][1]
    new_y = yy + x_y + e_y
    new_y = jnp.maximum(new_y @ p["y_out1"][0] + p["y_out1"][1], 0.0)
    new_y = new_y @ p["y_out2"][0] + p["y_out2"][1]
    return newX, newE, new_y


def xey_transformer_layer(params, X, E, y, node_mask, *, n_head, eps=1e-5):
    p = params
    bs, n, dx = X.shape
    de = E.shape[-1]

    newX, newE, new_y = node_edge_block(p["attn"], X, E, y, node_mask, n_head)

    # Dropout = identity (eval mode).
    # X path: residual + LN1 + FFN + residual + LN2 in one streaming kernel.
    Xo = res_ln_ffn_ln(
        X.reshape(bs * n, dx), newX.reshape(bs * n, dx),
        p["normX1_g"], p["normX1_b"], p["linX1"][0], p["linX1"][1],
        p["linX2"][0], p["linX2"][1], p["normX2_g"], p["normX2_b"],
        eps=eps).reshape(bs, n, dx)

    # E path: same fused kernel over bs*n*n rows (the dominant tensor).
    Eo = res_ln_ffn_ln(
        E.reshape(bs * n * n, de), newE.reshape(bs * n * n, de),
        p["normE1_g"], p["normE1_b"], p["linE1"][0], p["linE1"][1],
        p["linE2"][0], p["linE2"][1], p["normE2_g"], p["normE2_b"],
        eps=eps).reshape(bs, n, n, de)

    # y path: (bs, dy) is tiny -> plain JAX.
    yn = _ln(y + new_y, p["norm_y1_g"], p["norm_y1_b"], eps)
    ffy = jnp.maximum(yn @ p["lin_y1"][0] + p["lin_y1"][1], 0.0)
    ffy = ffy @ p["lin_y2"][0] + p["lin_y2"][1]
    yo = _ln(yn + ffy, p["norm_y2_g"], p["norm_y2_b"], eps)
    return Xo, Eo, yo


# ---------------------------------------------------------------------------
# Deterministic parameter initialization (shapes match the PyTorch __init__)
# ---------------------------------------------------------------------------
def init_params(key, dx, de, dy, n_head, dim_ffX, dim_ffE, dim_ffy):
    keys = iter(jax.random.split(key, 40))

    def lin(fan_in, fan_out):
        k = next(keys)
        kw, kb = jax.random.split(k)
        bound = 1.0 / math.sqrt(fan_in)
        W = jax.random.uniform(kw, (fan_in, fan_out), jnp.float32, -bound, bound)
        b = jax.random.uniform(kb, (fan_out,), jnp.float32, -bound, bound)
        return W, b

    q = lin(dx, dx); k_ = lin(dx, dx); v = lin(dx, dx)
    y_e_add = lin(dy, dx); y_e_mul = lin(dy, dx)
    y_x_add = lin(dy, dx); y_x_mul = lin(dy, dx)

    attn = {
        # q/k/v fused into (dx, 3*dx); y FiLM projections fused into (dy, 4*dx).
        "qkv_w": jnp.concatenate([q[0], k_[0], v[0]], axis=1),
        "qkv_b": jnp.concatenate([q[1], k_[1], v[1]], axis=0),
        "y4_w": jnp.concatenate([y_e_add[0], y_e_mul[0], y_x_add[0], y_x_mul[0]], axis=1),
        "y4_b": jnp.concatenate([y_e_add[1], y_e_mul[1], y_x_add[1], y_x_mul[1]], axis=0),
        "e_add": lin(de, dx), "e_mul": lin(de, dx),
        "y_y": lin(dy, dy),
        "x_y": lin(4 * dx, dy),     # Xtoy
        "e_y": lin(4 * de, dy),     # Etoy
        "x_out": lin(dx, dx), "e_out": lin(dx, de),
        "y_out1": lin(dy, dy), "y_out2": lin(dy, dy),
    }

    def ln_params(d):
        return jnp.ones((1, d), jnp.float32), jnp.zeros((1, d), jnp.float32)

    params = {"attn": attn}
    params["linX1"] = lin(dx, dim_ffX)
    params["linX2"] = lin(dim_ffX, dx)
    params["linE1"] = lin(de, dim_ffE)
    params["linE2"] = lin(dim_ffE, de)
    params["lin_y1"] = lin(dy, dim_ffy)
    params["lin_y2"] = lin(dim_ffy, dy)
    for name, d in [("normX1", dx), ("normX2", dx), ("normE1", de),
                    ("normE2", de), ("norm_y1", dy), ("norm_y2", dy)]:
        g, b = ln_params(d)
        params[f"{name}_g"] = g
        params[f"{name}_b"] = b
    return params


# ---------------------------------------------------------------------------
if __name__ == "__main__":
    bs, n = 2, 8
    dx, de, dy, n_head = 32, 16, 16, 4
    dim_ffX, dim_ffE, dim_ffy = 64, 32, 64

    root = jax.random.PRNGKey(0)
    kp, kx, ke, ky = jax.random.split(root, 4)

    params = init_params(kp, dx, de, dy, n_head, dim_ffX, dim_ffE, dim_ffy)

    X = jax.random.normal(kx, (bs, n, dx), jnp.float32)
    E = jax.random.normal(ke, (bs, n, n, de), jnp.float32)
    y = jax.random.normal(ky, (bs, dy), jnp.float32)
    node_mask = jnp.ones((bs, n), jnp.float32).at[1, -2:].set(0.0)

    fwd = jax.jit(functools.partial(xey_transformer_layer, params, n_head=n_head))
    outX, outE, outy = fwd(X, E, y, node_mask)
    jax.block_until_ready((outX, outE, outy))

    assert outX.shape == (bs, n, dx)
    assert outE.shape == (bs, n, n, de)
    assert outy.shape == (bs, dy)
    assert bool(jnp.isfinite(outX).all())
    assert bool(jnp.isfinite(outE).all())
    assert bool(jnp.isfinite(outy).all())
    print("KERNEL_OK")
</pallas_src>

<mosaic_0001>
module attributes {stable_mosaic.version = 11 : i64} {
  func.func @_linear_kernel(%arg0: i32, %arg1: memref<16x32xf32, #tpu.memory_space<vmem>>, %arg2: memref<32x96xf32, #tpu.memory_space<vmem>>, %arg3: memref<1x96xf32, #tpu.memory_space<vmem>>, %arg4: memref<16x96xf32, #tpu.memory_space<vmem>>) attributes {dimension_semantics = [#tpu.dimension_semantics<parallel>], iteration_bounds = array<i64: 1>, scalar_prefetch = 0 : i64, scratch_operands = 0 : i64, tpu.core_type = #tpu.core_type<tc>, window_params = [{transform_indices = @transform_0, window_bounds = array<i64: 16, 32>}, {pipeline_mode = #tpu.pipeline_mode<synchronous>, transform_indices = @transform_1, window_bounds = array<i64: 32, 96>}, {pipeline_mode = #tpu.pipeline_mode<synchronous>, transform_indices = @transform_2, window_bounds = array<i64: 1, 96>}, {transform_indices = @transform_3, window_bounds = array<i64: 16, 96>}]} {
    %c0 = arith.constant 0 : index
    %c0_0 = arith.constant 0 : index
    %0 = vector.load %arg1[%c0, %c0_0] : memref<16x32xf32, #tpu.memory_space<vmem>>, vector<16x32xf32>
    %c0_1 = arith.constant 0 : index
    %c0_2 = arith.constant 0 : index
    %1 = vector.load %arg2[%c0_1, %c0_2] : memref<32x96xf32, #tpu.memory_space<vmem>>, vector<32x96xf32>
    %cst = arith.constant dense<0.000000e+00> : vector<16x96xf32>
    %2 = tpu.matmul %0, %1, %cst {dimension_numbers = #tpu.dot_dimension_numbers<[1], [0], [0], [1], [0, 0, 1, 1], [], []>} : vector<16x32xf32>, vector<32x96xf32>, vector<16x96xf32> -> vector<16x96xf32>
    %c0_3 = arith.constant 0 : index
    %c0_4 = arith.constant 0 : index
    %3 = vector.load %arg3[%c0_3, %c0_4] : memref<1x96xf32, #tpu.memory_space<vmem>>, vector<1x96xf32>
    %4 = vector.broadcast %3 : vector<1x96xf32> to vector<16x96xf32>
    %5 = arith.addf %2, %4 : vector<16x96xf32>
    %c0_5 = arith.constant 0 : index
    %c0_6 = arith.constant 0 : index
    %6 = vector.load %arg4[%c0_5, %c0_6] : memref<16x96xf32, #tpu.memory_space<vmem>>, vector<16x96xf32>
    tpu.vector_store %arg4[%c0_5, %c0_6], %5 {strides = array<i32>} : memref<16x96xf32, #tpu.memory_space<vmem>>, vector<16x96xf32>,
    return
  }
  func.func @transform_0(%arg0: i32) -> (i32, i32) {
    %c0_i32 = arith.constant 0 : i32
    %c0_i32_0 = arith.constant 0 : i32
    return %arg0, %c0_i32 : i32, i32
  }
  func.func @transform_1(%arg0: i32) -> (i32, i32) {
    %c0_i32 = arith.constant 0 : i32
    %c0_i32_0 = arith.constant 0 : i32
    %c0_i32_1 = arith.constant 0 : i32
    return %c0_i32, %c0_i32_0 : i32, i32
  }
  func.func @transform_2(%arg0: i32) -> (i32, i32) {
    %c0_i32 = arith.constant 0 : i32
    %c0_i32_0 = arith.constant 0 : i32
    %c0_i32_1 = arith.constant 0 : i32
    return %c0_i32, %c0_i32_0 : i32, i32
  }
  func.func @transform_3(%arg0: i32) -> (i32, i32) {
    %c0_i32 = arith.constant 0 : i32
    %c0_i32_0 = arith.constant 0 : i32
    return %arg0, %c0_i32 : i32, i32
  }
}

module attributes {stable_mosaic.version = 11 : i64} {
  func.func @_res_ln_ffn_ln_kernel(%arg0: i32, %arg1: memref<16x32xf32, #tpu.memory_space<vmem>>, %arg2: memref<16x32xf32, #tpu.memory_space<vmem>>, %arg3: memref<1x32xf32, #tpu.memory_space<vmem>>, %arg4: memref<1x32xf32, #tpu.memory_space<vmem>>, %arg5: memref<32x64xf32, #tpu.memory_space<vmem>>, %arg6: memref<1x64xf32, #tpu.memory_space<vmem>>, %arg7: memref<64x32xf32, #tpu.memory_space<vmem>>, %arg8: memref<1x32xf32, #tpu.memory_space<vmem>>, %arg9: memref<1x32xf32, #tpu.memory_space<vmem>>, %arg10: memref<1x32xf32, #tpu.memory_space<vmem>>, %arg11: memref<16x32xf32, #tpu.memory_space<vmem>>) attributes {dimension_semantics = [#tpu.dimension_semantics<parallel>], iteration_bounds = array<i64: 1>, scalar_prefetch = 0 : i64, scratch_operands = 0 : i64, tpu.core_type = #tpu.core_type<tc>, window_params = [{transform_indices = @transform_0, window_bounds = array<i64: 16, 32>}, {transform_indices = @transform_1, window_bounds = array<i64: 16, 32>}, {pipeline_mode = #tpu.pipeline_mode<synchronous>, transform_indices = @transform_2, window_bounds = array<i64: 1, 32>}, {pipeline_mode = #tpu.pipeline_mode<synchronous>, transform_indices = @transform_3, window_bounds = array<i64: 1, 32>}, {pipeline_mode = #tpu.pipeline_mode<synchronous>, transform_indices = @transform_4, window_bounds = array<i64: 32, 64>}, {pipeline_mode = #tpu.pipeline_mode<synchronous>, transform_indices = @transform_5, window_bounds = array<i64: 1, 64>}, {pipeline_mode = #tpu.pipeline_mode<synchronous>, transform_indices = @transform_6, window_bounds = array<i64: 64, 32>}, {pipeline_mode = #tpu.pipeline_mode<synchronous>, transform_indices = @transform_7, window_bounds = array<i64: 1, 32>}, {pipeline_mode = #tpu.pipeline_mode<synchronous>, transform_indices = @transform_8, window_bounds = array<i64: 1, 32>}, {pipeline_mode = #tpu.pipeline_mode<synchronous>, transform_indices = @transform_9, window_bounds = array<i64: 1, 32>}, {transform_indices = @transform_10, window_bounds = array<i64: 16, 32>}]} {
    %c0 = arith.constant 0 : index
    %c0_0 = arith.constant 0 : index
    %0 = vector.load %arg1[%c0, %c0_0] : memref<16x32xf32, #tpu.memory_space<vmem>>, vector<16x32xf32>
    %c0_1 = arith.constant 0 : index
    %c0_2 = arith.constant 0 : index
    %1 = vector.load %arg2[%c0_1, %c0_2] : memref<16x32xf32, #tpu.memory_space<vmem>>, vector<16x32xf32>
    %2 = arith.addf %0, %1 : vector<16x32xf32>
    %c0_3 = arith.constant 0 : index
    %c0_4 = arith.constant 0 : index
    %3 = vector.load %arg3[%c0_3, %c0_4] : memref<1x32xf32, #tpu.memory_space<vmem>>, vector<1x32xf32>
    %c0_5 = arith.constant 0 : index
    %c0_6 = arith.constant 0 : index
    %4 = vector.load %arg4[%c0_5, %c0_6] : memref<1x32xf32, #tpu.memory_space<vmem>>, vector<1x32xf32>
    %cst = arith.constant dense<0.000000e+00> : vector<16xf32>
    %5 = vector.multi_reduction <add>, %2, %cst [1] : vector<16x32xf32> to vector<16xf32>
    %6 = vector.shape_cast %5 : vector<16xf32> to vector<16x1xf32>
    %cst_7 = arith.constant 3.200000e+01 : f32
    %7 = vector.broadcast %cst_7 : f32 to vector<16x1xf32>
    %8 = arith.divf %6, %7 : vector<16x1xf32>
    %9 = vector.broadcast %8 : vector<16x1xf32> to vector<16x32xf32>
    %10 = arith.subf %2, %9 : vector<16x32xf32>
    %11 = arith.mulf %10, %10 : vector<16x32xf32>
    %cst_8 = arith.constant dense<0.000000e+00> : vector<16xf32>
    %12 = vector.multi_reduction <add>, %11, %cst_8 [1] : vector<16x32xf32> to vector<16xf32>
    %13 = vector.shape_cast %12 : vector<16xf32> to vector<16x1xf32>
    %cst_9 = arith.constant 3.200000e+01 : f32
    %14 = vector.broadcast %cst_9 : f32 to vector<16x1xf32>
    %15 = arith.divf %13, %14 : vector<16x1xf32>
    %16 = vector.broadcast %8 : vector<16x1xf32> to vector<16x32xf32>
    %17 = arith.subf %2, %16 : vector<16x32xf32>
    %cst_10 = arith.constant 9.99999974E-6 : f32
    %18 = vector.broadcast %cst_10 : f32 to vector<16x1xf32>
    %19 = arith.addf %15, %18 : vector<16x1xf32>
    %20 = math.rsqrt %19 : vector<16x1xf32>
    %21 = vector.broadcast %20 : vector<16x1xf32> to vector<16x32xf32>
    %22 = arith.mulf %17, %21 : vector<16x32xf32>
    %23 = vector.broadcast %3 : vector<1x32xf32> to vector<16x32xf32>
    %24 = arith.mulf %22, %23 : vector<16x32xf32>
    %25 = vector.broadcast %4 : vector<1x32xf32> to vector<16x32xf32>
    %26 = arith.addf %24, %25 : vector<16x32xf32>
    %c0_11 = arith.constant 0 : index
    %c0_12 = arith.constant 0 : index
    %27 = vector.load %arg5[%c0_11, %c0_12] : memref<32x64xf32, #tpu.memory_space<vmem>>, vector<32x64xf32>
    %cst_13 = arith.constant dense<0.000000e+00> : vector<16x64xf32>
    %28 = tpu.matmul %26, %27, %cst_13 {dimension_numbers = #tpu.dot_dimension_numbers<[1], [0], [0], [1], [0, 0, 1, 1], [], []>} : vector<16x32xf32>, vector<32x64xf32>, vector<16x64xf32> -> vector<16x64xf32>
    %c0_14 = arith.constant 0 : index
    %c0_15 = arith.constant 0 : index
    %29 = vector.load %arg6[%c0_14, %c0_15] : memref<1x64xf32, #tpu.memory_space<vmem>>, vector<1x64xf32>
    %30 = vector.broadcast %29 : vector<1x64xf32> to vector<16x64xf32>
    %31 = arith.addf %28, %30 : vector<16x64xf32>
    %cst_16 = arith.constant 0.000000e+00 : f32
    %32 = vector.broadcast %cst_16 : f32 to vector<16x64xf32>
    %33 = arith.maximumf %31, %32 : vector<16x64xf32>
    %c0_17 = arith.constant 0 : index
    %c0_18 = arith.constant 0 : index
    %34 = vector.load %arg7[%c0_17, %c0_18] : memref<64x32xf32, #tpu.memory_space<vmem>>, vector<64x32xf32>
    %cst_19 = arith.constant dense<0.000000e+00> : vector<16x32xf32>
    %35 = tpu.matmul %33, %34, %cst_19 {dimension_numbers = #tpu.dot_dimension_numbers<[1], [0], [0], [1], [0, 0, 1, 1], [], []>} : vector<16x64xf32>, vector<64x32xf32>, vector<16x32xf32> -> vector<16x32xf32>
    %c0_20 = arith.constant 0 : index
    %c0_21 = arith.constant 0 : index
    %36 = vector.load %arg8[%c0_20, %c0_21] : memref<1x32xf32, #tpu.memory_space<vmem>>, vector<1x32xf32>
    %37 = vector.broadcast %36 : vector<1x32xf32> to vector<16x32xf32>
    %38 = arith.addf %35, %37 : vector<16x32xf32>
    %39 = arith.addf %26, %38 : vector<16x32xf32>
    %c0_22 = arith.constant 0 : index
    %c0_23 = arith.constant 0 : index
    %40 = vector.load %arg9[%c0_22, %c0_23] : memref<1x32xf32, #tpu.memory_space<vmem>>, vector<1x32xf32>
    %c0_24 = arith.constant 0 : index
    %c0_25 = arith.constant 0 : index
    %41 = vector.load %arg10[%c0_24, %c0_25] : memref<1x32xf32, #tpu.memory_space<vmem>>, vector<1x32xf32>
    %cst_26 = arith.constant dense<0.000000e+00> : vector<16xf32>
    %42 = vector.multi_reduction <add>, %39, %cst_26 [1] : vector<16x32xf32> to vector<16xf32>
    %43 = vector.shape_cast %42 : vector<16xf32> to vector<16x1xf32>
    %cst_27 = arith.constant 3.200000e+01 : f32
    %44 = vector.broadcast %cst_27 : f32 to vector<16x1xf32>
    %45 = arith.divf %43, %44 : vector<16x1xf32>
    %46 = vector.broadcast %45 : vector<16x1xf32> to vector<16x32xf32>
    %47 = arith.subf %39, %46 : vector<16x32xf32>
    %48 = arith.mulf %47, %47 : vector<16x32xf32>
    %cst_28 = arith.constant dense<0.000000e+00> : vector<16xf32>
    %49 = vector.multi_reduction <add>, %48, %cst_28 [1] : vector<16x32xf32> to vector<16xf32>
    %50 = vector.shape_cast %49 : vector<16xf32> to vector<16x1xf32>
    %cst_29 = arith.constant 3.200000e+01 : f32
    %51 = vector.broadcast %cst_29 : f32 to vector<16x1xf32>
    %52 = arith.divf %50, %51 : vector<16x1xf32>
    %53 = vector.broadcast %45 : vector<16x1xf32> to vector<16x32xf32>
    %54 = arith.subf %39, %53 : vector<16x32xf32>
    %cst_30 = arith.constant 9.99999974E-6 : f32
    %55 = vector.broadcast %cst_30 : f32 to vector<16x1xf32>
    %56 = arith.addf %52, %55 : vector<16x1xf32>
    %57 = math.rsqrt %56 : vector<16x1xf32>
    %58 = vector.broadcast %57 : vector<16x1xf32> to vector<16x32xf32>
    %59 = arith.mulf %54, %58 : vector<16x32xf32>
    %60 = vector.broadcast %40 : vector<1x32xf32> to vector<16x32xf32>
    %61 = arith.mulf %59, %60 : vector<16x32xf32>
    %62 = vector.broadcast %41 : vector<1x32xf32> to vector<16x32xf32>
    %63 = arith.addf %61, %62 : vector<16x32xf32>
    %c0_31 = arith.constant 0 : index
    %c0_32 = arith.constant 0 : index
    %64 = vector.load %arg11[%c0_31, %c0_32] : memref<16x32xf32, #tpu.memory_space<vmem>>, vector<16x32xf32>
    tpu.vector_store %arg11[%c0_31, %c0_32], %63 {strides = array<i32>} : memref<16x32xf32, #tpu.memory_space<vmem>>, vector<16x32xf32>,
    return
  }
  func.func @transform_0(%arg0: i32) -> (i32, i32) {
    %c0_i32 = arith.constant 0 : i32
    %c0_i32_0 = arith.constant 0 : i32
    return %arg0, %c0_i32 : i32, i32
  }
  func.func @transform_1(%arg0: i32) -> (i32, i32) {
    %c0_i32 = arith.constant 0 : i32
    %c0_i32_0 = arith.constant 0 : i32
    return %arg0, %c0_i32 : i32, i32
  }
  func.func @transform_2(%arg0: i32) -> (i32, i32) {
    %c0_i32 = arith.constant 0 : i32
    %c0_i32_0 = arith.constant 0 : i32
    %c0_i32_1 = arith.constant 0 : i32
    return %c0_i32, %c0_i32_0 : i32, i32
  }
  func.func @transform_3(%arg0: i32) -> (i32, i32) {
    %c0_i32 = arith.constant 0 : i32
    %c0_i32_0 = arith.constant 0 : i32
    %c0_i32_1 = arith.constant 0 : i32
    return %c0_i32, %c0_i32_0 : i32, i32
  }
  func.func @transform_4(%arg0: i32) -> (i32, i32) {
    %c0_i32 = arith.constant 0 : i32
    %c0_i32_0 = arith.constant 0 : i32
    %c0_i32_1 = arith.constant 0 : i32
    return %c0_i32, %c0_i32_0 : i32, i32
  }
  func.func @transform_5(%arg0: i32) -> (i32, i32) {
    %c0_i32 = arith.constant 0 : i32
    %c0_i32_0 = arith.constant 0 : i32
    %c0_i32_1 = arith.constant 0 : i32
    return %c0_i32, %c0_i32_0 : i32, i32
  }
  func.func @transform_6(%arg0: i32) -> (i32, i32) {
    %c0_i32 = arith.constant 0 : i32
    %c0_i32_0 = arith.constant 0 : i32
    %c0_i32_1 = arith.constant 0 : i32
    return %c0_i32, %c0_i32_0 : i32, i32
  }
  func.func @transform_7(%arg0: i32) -> (i32, i32) {
    %c0_i32 = arith.constant 0 : i32
    %c0_i32_0 = arith.constant 0 : i32
    %c0_i32_1 = arith.constant 0 : i32
    return %c0_i32, %c0_i32_0 : i32, i32
  }
  func.func @transform_8(%arg0: i32) -> (i32, i32) {
    %c0_i32 = arith.constant 0 : i32
    %c0_i32_0 = arith.constant 0 : i32
    %c0_i32_1 = arith.constant 0 : i32
    return %c0_i32, %c0_i32_0 : i32, i32
  }
  func.func @transform_9(%arg0: i32) -> (i32, i32) {
    %c0_i32 = arith.constant 0 : i32
    %c0_i32_0 = arith.constant 0 : i32
    %c0_i32_1 = arith.constant 0 : i32
    return %c0_i32, %c0_i32_0 : i32, i32
  }
  func.func @transform_10(%arg0: i32) -> (i32, i32) {
    %c0_i32 = arith.constant 0 : i32
    %c0_i32_0 = arith.constant 0 : i32
    return %arg0, %c0_i32 : i32, i32
  }
}

module attributes {stable_mosaic.version = 11 : i64} {
  func.func @_attn_kernel(%arg0: i32, %arg1: i32, %arg2: memref<1x8x32xf32, #tpu.memory_space<vmem>>, %arg3: memref<1x8x32xf32, #tpu.memory_space<vmem>>, %arg4: memref<1x8x32xf32, #tpu.memory_space<vmem>>, %arg5: memref<1x8x8x16xf32, #tpu.memory_space<vmem>>, %arg6: memref<1x8x1xf32, #tpu.memory_space<vmem>>, %arg7: memref<1x8x1xf32, #tpu.memory_space<vmem>>, %arg8: memref<1x1x32xf32, #tpu.memory_space<vmem>>, %arg9: memref<1x1x32xf32, #tpu.memory_space<vmem>>, %arg10: memref<1x1x32xf32, #tpu.memory_space<vmem>>, %arg11: memref<1x1x32xf32, #tpu.memory_space<vmem>>, %arg12: memref<16x32xf32, #tpu.memory_space<vmem>>, %arg13: memref<1x32xf32, #tpu.memory_space<vmem>>, %arg14: memref<16x32xf32, #tpu.memory_space<vmem>>, %arg15: memref<1x32xf32, #tpu.memory_space<vmem>>, %arg16: memref<32x16xf32, #tpu.memory_space<vmem>>, %arg17: memref<1x16xf32, #tpu.memory_space<vmem>>, %arg18: memref<32x32xf32, #tpu.memory_space<vmem>>, %arg19: memref<1x32xf32, #tpu.memory_space<vmem>>, %arg20: memref<1x8x8x16xf32, #tpu.memory_space<vmem>>, %arg21: memref<1x8x32xf32, #tpu.memory_space<vmem>>) attributes {dimension_semantics = [#tpu.dimension_semantics<parallel>, #tpu.dimension_semantics<parallel>], iteration_bounds = array<i64: 2, 1>, scalar_prefetch = 0 : i64, scratch_operands = 0 : i64, tpu.core_type = #tpu.core_type<tc>, window_params = [{transform_indices = @transform_0, window_bounds = array<i64: 1, 8, 32>}, {transform_indices = @transform_1, window_bounds = array<i64: 1, 8, 32>}, {transform_indices = @transform_2, window_bounds = array<i64: 1, 8, 32>}, {transform_indices = @transform_3, window_bounds = array<i64: 1, 8, 8, 16>}, {transform_indices = @transform_4, window_bounds = array<i64: 1, 8, 1>}, {transform_indices = @transform_5, window_bounds = array<i64: 1, 8, 1>}, {transform_indices = @transform_6, window_bounds = array<i64: 1, 1, 32>}, {transform_indices = @transform_7, window_bounds = array<i64: 1, 1, 32>}, {transform_indices = @transform_8, window_bounds = array<i64: 1, 1, 32>}, {transform_indices = @transform_9, window_bounds = array<i64: 1, 1, 32>}, {pipeline_mode = #tpu.pipeline_mode<synchronous>, transform_indices = @transform_10, window_bounds = array<i64: 16, 32>}, {pipeline_mode = #tpu.pipeline_mode<synchronous>, transform_indices = @transform_11, window_bounds = array<i64: 1, 32>}, {pipeline_mode = #tpu.pipeline_mode<synchronous>, transform_indices = @transform_12, window_bounds = array<i64: 16, 32>}, {pipeline_mode = #tpu.pipeline_mode<synchronous>, transform_indices = @transform_13, window_bounds = array<i64: 1, 32>}, {pipeline_mode = #tpu.pipeline_mode<synchronous>, transform_indices = @transform_14, window_bounds = array<i64: 32, 16>}, {pipeline_mode = #tpu.pipeline_mode<synchronous>, transform_indices = @transform_15, window_bounds = array<i64: 1, 16>}, {pipeline_mode = #tpu.pipeline_mode<synchronous>, transform_indices = @transform_16, window_bounds = array<i64: 32, 32>}, {pipeline_mode = #tpu.pipeline_mode<synchronous>, transform_indices = @transform_17, window_bounds = array<i64: 1, 32>}, {transform_indices = @transform_18, window_bounds = array<i64: 1, 8, 8, 16>}, {transform_indices = @transform_19, window_bounds = array<i64: 1, 8, 32>}]} {
    %c0 = arith.constant 0 : index
    %c0_0 = arith.constant 0 : index
    %c0_1 = arith.constant 0 : index
    %0 = vector.load %arg6[%c0, %c0_0, %c0_1] : memref<1x8x1xf32, #tpu.memory_space<vmem>>, vector<1x8x1xf32>
    %1 = vector.shape_cast %0 : vector<1x8x1xf32> to vector<8x1xf32>
    %c0_2 = arith.constant 0 : index
    %c0_3 = arith.constant 0 : index
    %c0_4 = arith.constant 0 : index
    %2 = vector.load %arg7[%c0_2, %c0_3, %c0_4] : memref<1x8x1xf32, #tpu.memory_space<vmem>>, vector<1x8x1xf32>
    %3 = vector.shape_cast %2 : vector<1x8x1xf32> to vector<8x1xf32>
    %c0_5 = arith.constant 0 : index
    %c0_6 = arith.constant 0 : index
    %c0_7 = arith.constant 0 : index
    %4 = vector.load %arg2[%c0_5, %c0_6, %c0_7] : memref<1x8x32xf32, #tpu.memory_space<vmem>>, vector<1x8x32xf32>
    %5 = vector.shape_cast %4 : vector<1x8x32xf32> to vector<8x32xf32>
    %6 = vector.broadcast %1 : vector<8x1xf32> to vector<8x32xf32>
    %7 = arith.mulf %5, %6 : vector<8x32xf32>
    %c0_8 = arith.constant 0 : index
    %c0_9 = arith.constant 0 : index
    %c0_10 = arith.constant 0 : index
    %8 = vector.load %arg3[%c0_8, %c0_9, %c0_10] : memref<1x8x32xf32, #tpu.memory_space<vmem>>, vector<1x8x32xf32>
    %9 = vector.shape_cast %8 : vector<1x8x32xf32> to vector<8x32xf32>
    %10 = vector.broadcast %3 : vector<8x1xf32> to vector<8x32xf32>
    %11 = arith.mulf %9, %10 : vector<8x32xf32>
    %c0_11 = arith.constant 0 : index
    %c0_12 = arith.constant 0 : index
    %c0_13 = arith.constant 0 : index
    %12 = vector.load %arg4[%c0_11, %c0_12, %c0_13] : memref<1x8x32xf32, #tpu.memory_space<vmem>>, vector<1x8x32xf32>
    %13 = vector.shape_cast %12 : vector<1x8x32xf32> to vector<8x32xf32>
    %14 = vector.broadcast %3 : vector<8x1xf32> to vector<8x32xf32>
    %15 = arith.mulf %13, %14 : vector<8x32xf32>
    %16 = vector.shape_cast %1 : vector<8x1xf32> to vector<8x1x1xf32>
    %17 = vector.shape_cast %3 : vector<8x1xf32> to vector<1x8x1xf32>
    %18 = vector.broadcast %16 : vector<8x1x1xf32> to vector<8x8x1xf32>
    %19 = vector.broadcast %17 : vector<1x8x1xf32> to vector<8x8x1xf32>
    %20 = arith.mulf %18, %19 : vector<8x8x1xf32>
    %c0_14 = arith.constant 0 : index
    %c0_15 = arith.constant 0 : index
    %c0_16 = arith.constant 0 : index
    %c0_17 = arith.constant 0 : index
    %21 = vector.load %arg5[%c0_14, %c0_15, %c0_16, %c0_17] : memref<1x8x8x16xf32, #tpu.memory_space<vmem>>, vector<1x8x8x16xf32>
    %22 = vector.shape_cast %21 : vector<1x8x8x16xf32> to vector<8x8x16xf32>
    %23 = vector.shape_cast %22 : vector<8x8x16xf32> to vector<64x16xf32>
    %c0_18 = arith.constant 0 : index
    %c0_19 = arith.constant 0 : index
    %24 = vector.load %arg12[%c0_18, %c0_19] : memref<16x32xf32, #tpu.memory_space<vmem>>, vector<16x32xf32>
    %cst = arith.constant dense<0.000000e+00> : vector<64x32xf32>
    %25 = tpu.matmul %23, %24, %cst {dimension_numbers = #tpu.dot_dimension_numbers<[1], [0], [0], [1], [0, 0, 1, 1], [], []>} : vector<64x16xf32>, vector<16x32xf32>, vector<64x32xf32> -> vector<64x32xf32>
    %c0_20 = arith.constant 0 : index
    %c0_21 = arith.constant 0 : index
    %26 = vector.load %arg13[%c0_20, %c0_21] : memref<1x32xf32, #tpu.memory_space<vmem>>, vector<1x32xf32>
    %27 = vector.broadcast %26 : vector<1x32xf32> to vector<64x32xf32>
    %28 = arith.addf %25, %27 : vector<64x32xf32>
    %29 = vector.shape_cast %28 : vector<64x32xf32> to vector<8x8x32xf32>
    %30 = vector.broadcast %20 : vector<8x8x1xf32> to vector<8x8x32xf32>
    %31 = arith.mulf %29, %30 : vector<8x8x32xf32>
    %c0_22 = arith.constant 0 : index
    %c0_23 = arith.constant 0 : index
    %32 = vector.load %arg14[%c0_22, %c0_23] : memref<16x32xf32, #tpu.memory_space<vmem>>, vector<16x32xf32>
    %cst_24 = arith.constant dense<0.000000e+00> : vector<64x32xf32>
    %33 = tpu.matmul %23, %32, %cst_24 {dimension_numbers = #tpu.dot_dimension_numbers<[1], [0], [0], [1], [0, 0, 1, 1], [], []>} : vector<64x16xf32>, vector<16x32xf32>, vector<64x32xf32> -> vector<64x32xf32>
    %c0_25 = arith.constant 0 : index
    %c0_26 = arith.constant 0 : index
    %34 = vector.load %arg15[%c0_25, %c0_26] : memref<1x32xf32, #tpu.memory_space<vmem>>, vector<1x32xf32>
    %35 = vector.broadcast %34 : vector<1x32xf32> to vector<64x32xf32>
    %36 = arith.addf %33, %35 : vector<64x32xf32>
    %37 = vector.shape_cast %36 : vector<64x32xf32> to vector<8x8x32xf32>
    %38 = vector.broadcast %20 : vector<8x8x1xf32> to vector<8x8x32xf32>
    %39 = arith.mulf %37, %38 : vector<8x8x32xf32>
    %40 = vector.shape_cast %7 : vector<8x32xf32> to vector<8x1x32xf32>
    %41 = vector.shape_cast %11 : vector<8x32xf32> to vector<1x8x32xf32>
    %42 = vector.broadcast %40 : vector<8x1x32xf32> to vector<8x8x32xf32>
    %43 = vector.broadcast %41 : vector<1x8x32xf32> to vector<8x8x32xf32>
    %44 = arith.mulf %42, %43 : vector<8x8x32xf32>
    %cst_27 = arith.constant 0.353553385 : f32
    %45 = vector.broadcast %cst_27 : f32 to vector<8x8x32xf32>
    %46 = arith.mulf %44, %45 : vector<8x8x32xf32>
    %cst_28 = arith.constant 1.000000e+00 : f32
    %47 = vector.broadcast %cst_28 : f32 to vector<8x8x32xf32>
    %48 = arith.addf %31, %47 : vector<8x8x32xf32>
    %49 = arith.mulf %46, %48 : vector<8x8x32xf32>
    %50 = arith.addf %49, %39 : vector<8x8x32xf32>
    %c0_29 = arith.constant 0 : index
    %c0_30 = arith.constant 0 : index
    %c0_31 = arith.constant 0 : index
    %51 = vector.load %arg8[%c0_29, %c0_30, %c0_31] : memref<1x1x32xf32, #tpu.memory_space<vmem>>, vector<1x1x32xf32>
    %52 = vector.shape_cast %51 : vector<1x1x32xf32> to vector<1x32xf32>
    %53 = vector.shape_cast %52 : vector<1x32xf32> to vector<1x1x32xf32>
    %c0_32 = arith.constant 0 : index
    %c0_33 = arith.constant 0 : index
    %c0_34 = arith.constant 0 : index
    %54 = vector.load %arg9[%c0_32, %c0_33, %c0_34] : memref<1x1x32xf32, #tpu.memory_space<vmem>>, vector<1x1x32xf32>
    %55 = vector.shape_cast %54 : vector<1x1x32xf32> to vector<1x32xf32>
    %56 = vector.shape_cast %55 : vector<1x32xf32> to vector<1x1x32xf32>
    %57 = vector.broadcast %56 : vector<1x1x32xf32> to vector<8x8x32xf32>
    %58 = arith.mulf %57, %50 : vector<8x8x32xf32>
    %59 = vector.broadcast %53 : vector<1x1x32xf32> to vector<8x8x32xf32>
    %60 = arith.addf %59, %58 : vector<8x8x32xf32>
    %61 = vector.shape_cast %60 : vector<8x8x32xf32> to vector<64x32xf32>
    %c0_35 = arith.constant 0 : index
    %c0_36 = arith.constant 0 : index
    %62 = vector.load %arg16[%c0_35, %c0_36] : memref<32x16xf32, #tpu.memory_space<vmem>>, vector<32x16xf32>
    %cst_37 = arith.constant dense<0.000000e+00> : vector<64x16xf32>
    %63 = tpu.matmul %61, %62, %cst_37 {dimension_numbers = #tpu.dot_dimension_numbers<[1], [0], [0], [1], [0, 0, 1, 1], [], []>} : vector<64x32xf32>, vector<32x16xf32>, vector<64x16xf32> -> vector<64x16xf32>
    %c0_38 = arith.constant 0 : index
    %c0_39 = arith.constant 0 : index
    %64 = vector.load %arg17[%c0_38, %c0_39] : memref<1x16xf32, #tpu.memory_space<vmem>>, vector<1x16xf32>
    %65 = vector.broadcast %64 : vector<1x16xf32> to vector<64x16xf32>
    %66 = arith.addf %63, %65 : vector<64x16xf32>
    %67 = vector.shape_cast %66 : vector<64x16xf32> to vector<8x8x16xf32>
    %68 = vector.broadcast %20 : vector<8x8x1xf32> to vector<8x8x16xf32>
    %69 = arith.mulf %67, %68 : vector<8x8x16xf32>
    %c0_40 = arith.constant 0 : index
    %c0_41 = arith.constant 0 : index
    %c0_42 = arith.constant 0 : index
    %c0_43 = arith.constant 0 : index
    %70 = vector.load %arg20[%c0_40, %c0_41, %c0_42, %c0_43] : memref<1x8x8x16xf32, #tpu.memory_space<vmem>>, vector<1x8x8x16xf32>
    %71 = vector.shape_cast %70 : vector<1x8x8x16xf32> to vector<8x8x16xf32>
    %72 = vector.shape_cast %69 : vector<8x8x16xf32> to vector<1x8x8x16xf32>
    tpu.vector_store %arg20[%c0_40, %c0_41, %c0_42, %c0_43], %72 {strides = array<i32>} : memref<1x8x8x16xf32, #tpu.memory_space<vmem>>, vector<1x8x8x16xf32>,
    %73 = vector.shape_cast %3 : vector<8x1xf32> to vector<1x8x1xf32>
    %cst_44 = arith.constant 0.000000e+00 : f32
    %74 = vector.broadcast %cst_44 : f32 to vector<1x8x1xf32>
    %75 = arith.cmpf ogt, %73, %74 : vector<1x8x1xf32>
    %cst_45 = arith.constant -1.000000e+30 : f32
    %76 = vector.shape_cast %75 : vector<1x8x1xi1> to vector<1x8x1xi1>
    %77 = vector.broadcast %76 : vector<1x8x1xi1> to vector<8x8x32xi1>
    %78 = vector.broadcast %cst_45 : f32 to vector<8x8x32xf32>
    %79 = arith.select %77, %50, %78 : vector<8x8x32xi1>, vector<8x8x32xf32>
    %cst_46 = arith.constant dense<0xFF800000> : vector<8x32xf32>
    %80 = vector.multi_reduction <maximumf>, %79, %cst_46 [1] : vector<8x8x32xf32> to vector<8x32xf32>
    %81 = vector.shape_cast %80 : vector<8x32xf32> to vector<8x1x32xf32>
    %82 = vector.broadcast %81 : vector<8x1x32xf32> to vector<8x8x32xf32>
    %83 = arith.subf %79, %82 : vector<8x8x32xf32>
    %84 = math.exp %83 : vector<8x8x32xf32>
    %cst_47 = arith.constant dense<0.000000e+00> : vector<8x32xf32>
    %85 = vector.multi_reduction <add>, %84, %cst_47 [1] : vector<8x8x32xf32> to vector<8x32xf32>
    %86 = vector.shape_cast %85 : vector<8x32xf32> to vector<8x1x32xf32>
    %87 = tpu.reciprocal %86 {approx = true} : vector<8x1x32xf32> -> vector<8x1x32xf32>
    %88 = vector.broadcast %87 : vector<8x1x32xf32> to vector<8x8x32xf32>
    %89 = arith.mulf %84, %88 : vector<8x8x32xf32>
    %90 = vector.shape_cast %15 : vector<8x32xf32> to vector<1x8x32xf32>
    %91 = vector.broadcast %90 : vector<1x8x32xf32> to vector<8x8x32xf32>
    %92 = arith.mulf %89, %91 : vector<8x8x32xf32>
    %cst_48 = arith.constant dense<0.000000e+00> : vector<8x32xf32>
    %93 = vector.multi_reduction <add>, %92, %cst_48 [1] : vector<8x8x32xf32> to vector<8x32xf32>
    %c0_49 = arith.constant 0 : index
    %c0_50 = arith.constant 0 : index
    %c0_51 = arith.constant 0 : index
    %94 = vector.load %arg10[%c0_49, %c0_50, %c0_51] : memref<1x1x32xf32, #tpu.memory_space<vmem>>, vector<1x1x32xf32>
    %95 = vector.shape_cast %94 : vector<1x1x32xf32> to vector<1x32xf32>
    %c0_52 = arith.constant 0 : index
    %c0_53 = arith.constant 0 : index
    %c0_54 = arith.constant 0 : index
    %96 = vector.load %arg11[%c0_52, %c0_53, %c0_54] : memref<1x1x32xf32, #tpu.memory_space<vmem>>, vector<1x1x32xf32>
    %97 = vector.shape_cast %96 : vector<1x1x32xf32> to vector<1x32xf32>
    %98 = vector.broadcast %97 : vector<1x32xf32> to vector<8x32xf32>
    %99 = arith.mulf %98, %93 : vector<8x32xf32>
    %100 = vector.broadcast %95 : vector<1x32xf32> to vector<8x32xf32>
    %101 = arith.addf %100, %99 : vector<8x32xf32>
    %c0_55 = arith.constant 0 : index
    %c0_56 = arith.constant 0 : index
    %102 = vector.load %arg18[%c0_55, %c0_56] : memref<32x32xf32, #tpu.memory_space<vmem>>, vector<32x32xf32>
    %cst_57 = arith.constant dense<0.000000e+00> : vector<8x32xf32>
    %103 = tpu.matmul %101, %102, %cst_57 {dimension_numbers = #tpu.dot_dimension_numbers<[1], [0], [0], [1], [0, 0, 1, 1], [], []>} : vector<8x32xf32>, vector<32x32xf32>, vector<8x32xf32> -> vector<8x32xf32>
    %c0_58 = arith.constant 0 : index
    %c0_59 = arith.constant 0 : index
    %104 = vector.load %arg19[%c0_58, %c0_59] : memref<1x32xf32, #tpu.memory_space<vmem>>, vector<1x32xf32>
    %105 = vector.broadcast %104 : vector<1x32xf32> to vector<8x32xf32>
    %106 = arith.addf %103, %105 : vector<8x32xf32>
    %107 = vector.broadcast %1 : vector<8x1xf32> to vector<8x32xf32>
    %108 = arith.mulf %106, %107 : vector<8x32xf32>
    %c0_60 = arith.constant 0 : index
    %c0_61 = arith.constant 0 : index
    %c0_62 = arith.constant 0 : index
    %109 = vector.load %arg21[%c0_60, %c0_61, %c0_62] : memref<1x8x32xf32, #tpu.memory_space<vmem>>, vector<1x8x32xf32>
    %110 = vector.shape_cast %109 : vector<1x8x32xf32> to vector<8x32xf32>
    %111 = vector.shape_cast %108 : vector<8x32xf32> to vector<1x8x32xf32>
    tpu.vector_store %arg21[%c0_60, %c0_61, %c0_62], %111 {strides = array<i32>} : memref<1x8x32xf32, #tpu.memory_space<vmem>>, vector<1x8x32xf32>,
    return
  }
  func.func @transform_0(%arg0: i32, %arg1: i32) -> (i32, i32, i32) {
    %c0_i32 = arith.constant 0 : i32
    %c0_i32_0 = arith.constant 0 : i32
    return %arg0, %arg1, %c0_i32 : i32, i32, i32
  }
  func.func @transform_1(%arg0: i32, %arg1: i32) -> (i32, i32, i32) {
    %c0_i32 = arith.constant 0 : i32
    %c0_i32_0 = arith.constant 0 : i32
    %c0_i32_1 = arith.constant 0 : i32
    return %arg0, %c0_i32, %c0_i32_0 : i32, i32, i32
  }
  func.func @transform_2(%arg0: i32, %arg1: i32) -> (i32, i32, i32) {
    %c0_i32 = arith.constant 0 : i32
    %c0_i32_0 = arith.constant 0 : i32
    %c0_i32_1 = arith.constant 0 : i32
    return %arg0, %c0_i32, %c0_i32_0 : i32, i32, i32
  }
  func.func @transform_3(%arg0: i32, %arg1: i32) -> (i32, i32, i32, i32) {
    %c0_i32 = arith.constant 0 : i32
    %c0_i32_0 = arith.constant 0 : i32
    %c0_i32_1 = arith.constant 0 : i32
    return %arg0, %arg1, %c0_i32, %c0_i32_0 : i32, i32, i32, i32
  }
  func.func @transform_4(%arg0: i32, %arg1: i32) -> (i32, i32, i32) {
    %c0_i32 = arith.constant 0 : i32
    %c0_i32_0 = arith.constant 0 : i32
    return %arg0, %arg1, %c0_i32 : i32, i32, i32
  }
  func.func @transform_5(%arg0: i32, %arg1: i32) -> (i32, i32, i32) {
    %c0_i32 = arith.constant 0 : i32
    %c0_i32_0 = arith.constant 0 : i32
    %c0_i32_1 = arith.constant 0 : i32
    return %arg0, %c0_i32, %c0_i32_0 : i32, i32, i32
  }
  func.func @transform_6(%arg0: i32, %arg1: i32) -> (i32, i32, i32) {
    %c0_i32 = arith.constant 0 : i32
    %c0_i32_0 = arith.constant 0 : i32
    %c0_i32_1 = arith.constant 0 : i32
    return %arg0, %c0_i32, %c0_i32_0 : i32, i32, i32
  }
  func.func @transform_7(%arg0: i32, %arg1: i32) -> (i32, i32, i32) {
    %c0_i32 = arith.constant 0 : i32
    %c0_i32_0 = arith.constant 0 : i32
    %c0_i32_1 = arith.constant 0 : i32
    return %arg0, %c0_i32, %c0_i32_0 : i32, i32, i32
  }
  func.func @transform_8(%arg0: i32, %arg1: i32) -> (i32, i32, i32) {
    %c0_i32 = arith.constant 0 : i32
    %c0_i32_0 = arith.constant 0 : i32
    %c0_i32_1 = arith.constant 0 : i32
    return %arg0, %c0_i32, %c0_i32_0 : i32, i32, i32
  }
  func.func @transform_9(%arg0: i32, %arg1: i32) -> (i32, i32, i32) {
    %c0_i32 = arith.constant 0 : i32
    %c0_i32_0 = arith.constant 0 : i32
    %c0_i32_1 = arith.constant 0 : i32
    return %arg0, %c0_i32, %c0_i32_0 : i32, i32, i32
  }
  func.func @transform_10(%arg0: i32, %arg1: i32) -> (i32, i32) {
    %c0_i32 = arith.constant 0 : i32
    %c0_i32_0 = arith.constant 0 : i32
    %c0_i32_1 = arith.constant 0 : i32
    return %c0_i32, %c0_i32_0 : i32, i32
  }
  func.func @transform_11(%arg0: i32, %arg1: i32) -> (i32, i32) {
    %c0_i32 = arith.constant 0 : i32
    %c0_i32_0 = arith.constant 0 : i32
    %c0_i32_1 = arith.constant 0 : i32
    return %c0_i32, %c0_i32_0 : i32, i32
  }
  func.func @transform_12(%arg0: i32, %arg1: i32) -> (i32, i32) {
    %c0_i32 = arith.constant 0 : i32
    %c0_i32_0 = arith.constant 0 : i32
    %c0_i32_1 = arith.constant 0 : i32
    return %c0_i32, %c0_i32_0 : i32, i32
  }
  func.func @transform_13(%arg0: i32, %arg1: i32) -> (i32, i32) {
    %c0_i32 = arith.constant 0 : i32
    %c0_i32_0 = arith.constant 0 : i32
    %c0_i32_1 = arith.constant 0 : i32
    return %c0_i32, %c0_i32_0 : i32, i32
  }
  func.func @transform_14(%arg0: i32, %arg1: i32) -> (i32, i32) {
    %c0_i32 = arith.constant 0 : i32
    %c0_i32_0 = arith.constant 0 : i32
    %c0_i32_1 = arith.constant 0 : i32
    return %c0_i32, %c0_i32_0 : i32, i32
  }
  func.func @transform_15(%arg0: i32, %arg1: i32) -> (i32, i32) {
    %c0_i32 = arith.constant 0 : i32
    %c0_i32_0 = arith.constant 0 : i32
    %c0_i32_1 = arith.constant 0 : i32
    return %c0_i32, %c0_i32_0 : i32, i32
  }
  func.func @transform_16(%arg0: i32, %arg1: i32) -> (i32, i32) {
    %c0_i32 = arith.constant 0 : i32
    %c0_i32_0 = arith.constant 0 : i32
    %c0_i32_1 = arith.constant 0 : i32
    return %c0_i32, %c0_i32_0 : i32, i32
  }
  func.func @transform_17(%arg0: i32, %arg1: i32) -> (i32, i32) {
    %c0_i32 = arith.constant 0 : i32
    %c0_i32_0 = arith.constant 0 : i32
    %c0_i32_1 = arith.constant 0 : i32
    return %c0_i32, %c0_i32_0 : i32, i32
  }
  func.func @transform_18(%arg0: i32, %arg1: i32) -> (i32, i32, i32, i32) {
    %c0_i32 = arith.constant 0 : i32
    %c0_i32_0 = arith.constant 0 : i32
    %c0_i32_1 = arith.constant 0 : i32
    return %arg0, %arg1, %c0_i32, %c0_i32_0 : i32, i32, i32, i32
  }
  func.func @transform_19(%arg0: i32, %arg1: i32) -> (i32, i32, i32) {
    %c0_i32 = arith.constant 0 : i32
    %c0_i32_0 = arith.constant 0 : i32
    return %arg0, %arg1, %c0_i32 : i32, i32, i32
  }
}

module attributes {stable_mosaic.version = 11 : i64} {
  func.func @_res_ln_ffn_ln_kernel(%arg0: i32, %arg1: memref<128x16xf32, #tpu.memory_space<vmem>>, %arg2: memref<128x16xf32, #tpu.memory_space<vmem>>, %arg3: memref<1x16xf32, #tpu.memory_space<vmem>>, %arg4: memref<1x16xf32, #tpu.memory_space<vmem>>, %arg5: memref<16x32xf32, #tpu.memory_space<vmem>>, %arg6: memref<1x32xf32, #tpu.memory_space<vmem>>, %arg7: memref<32x16xf32, #tpu.memory_space<vmem>>, %arg8: memref<1x16xf32, #tpu.memory_space<vmem>>, %arg9: memref<1x16xf32, #tpu.memory_space<vmem>>, %arg10: memref<1x16xf32, #tpu.memory_space<vmem>>, %arg11: memref<128x16xf32, #tpu.memory_space<vmem>>) attributes {dimension_semantics = [#tpu.dimension_semantics<parallel>], iteration_bounds = array<i64: 1>, scalar_prefetch = 0 : i64, scratch_operands = 0 : i64, tpu.core_type = #tpu.core_type<tc>, window_params = [{transform_indices = @transform_0, window_bounds = array<i64: 128, 16>}, {transform_indices = @transform_1, window_bounds = array<i64: 128, 16>}, {pipeline_mode = #tpu.pipeline_mode<synchronous>, transform_indices = @transform_2, window_bounds = array<i64: 1, 16>}, {pipeline_mode = #tpu.pipeline_mode<synchronous>, transform_indices = @transform_3, window_bounds = array<i64: 1, 16>}, {pipeline_mode = #tpu.pipeline_mode<synchronous>, transform_indices = @transform_4, window_bounds = array<i64: 16, 32>}, {pipeline_mode = #tpu.pipeline_mode<synchronous>, transform_indices = @transform_5, window_bounds = array<i64: 1, 32>}, {pipeline_mode = #tpu.pipeline_mode<synchronous>, transform_indices = @transform_6, window_bounds = array<i64: 32, 16>}, {pipeline_mode = #tpu.pipeline_mode<synchronous>, transform_indices = @transform_7, window_bounds = array<i64: 1, 16>}, {pipeline_mode = #tpu.pipeline_mode<synchronous>, transform_indices = @transform_8, window_bounds = array<i64: 1, 16>}, {pipeline_mode = #tpu.pipeline_mode<synchronous>, transform_indices = @transform_9, window_bounds = array<i64: 1, 16>}, {transform_indices = @transform_10, window_bounds = array<i64: 128, 16>}]} {
    %c0 = arith.constant 0 : index
    %c0_0 = arith.constant 0 : index
    %0 = vector.load %arg1[%c0, %c0_0] : memref<128x16xf32, #tpu.memory_space<vmem>>, vector<128x16xf32>
    %c0_1 = arith.constant 0 : index
    %c0_2 = arith.constant 0 : index
    %1 = vector.load %arg2[%c0_1, %c0_2] : memref<128x16xf32, #tpu.memory_space<vmem>>, vector<128x16xf32>
    %2 = arith.addf %0, %1 : vector<128x16xf32>
    %c0_3 = arith.constant 0 : index
    %c0_4 = arith.constant 0 : index
    %3 = vector.load %arg3[%c0_3, %c0_4] : memref<1x16xf32, #tpu.memory_space<vmem>>, vector<1x16xf32>
    %c0_5 = arith.constant 0 : index
    %c0_6 = arith.constant 0 : index
    %4 = vector.load %arg4[%c0_5, %c0_6] : memref<1x16xf32, #tpu.memory_space<vmem>>, vector<1x16xf32>
    %cst = arith.constant dense<0.000000e+00> : vector<128xf32>
    %5 = vector.multi_reduction <add>, %2, %cst [1] : vector<128x16xf32> to vector<128xf32>
    %6 = vector.shape_cast %5 : vector<128xf32> to vector<128x1xf32>
    %cst_7 = arith.constant 1.600000e+01 : f32
    %7 = vector.broadcast %cst_7 : f32 to vector<128x1xf32>
    %8 = arith.divf %6, %7 : vector<128x1xf32>
    %9 = vector.broadcast %8 : vector<128x1xf32> to vector<128x16xf32>
    %10 = arith.subf %2, %9 : vector<128x16xf32>
    %11 = arith.mulf %10, %10 : vector<128x16xf32>
    %cst_8 = arith.constant dense<0.000000e+00> : vector<128xf32>
    %12 = vector.multi_reduction <add>, %11, %cst_8 [1] : vector<128x16xf32> to vector<128xf32>
    %13 = vector.shape_cast %12 : vector<128xf32> to vector<128x1xf32>
    %cst_9 = arith.constant 1.600000e+01 : f32
    %14 = vector.broadcast %cst_9 : f32 to vector<128x1xf32>
    %15 = arith.divf %13, %14 : vector<128x1xf32>
    %16 = vector.broadcast %8 : vector<128x1xf32> to vector<128x16xf32>
    %17 = arith.subf %2, %16 : vector<128x16xf32>
    %cst_10 = arith.constant 9.99999974E-6 : f32
    %18 = vector.broadcast %cst_10 : f32 to vector<128x1xf32>
    %19 = arith.addf %15, %18 : vector<128x1xf32>
    %20 = math.rsqrt %19 : vector<128x1xf32>
    %21 = vector.broadcast %20 : vector<128x1xf32> to vector<128x16xf32>
    %22 = arith.mulf %17, %21 : vector<128x16xf32>
    %23 = vector.broadcast %3 : vector<1x16xf32> to vector<128x16xf32>
    %24 = arith.mulf %22, %23 : vector<128x16xf32>
    %25 = vector.broadcast %4 : vector<1x16xf32> to vector<128x16xf32>
    %26 = arith.addf %24, %25 : vector<128x16xf32>
    %c0_11 = arith.constant 0 : index
    %c0_12 = arith.constant 0 : index
    %27 = vector.load %arg5[%c0_11, %c0_12] : memref<16x32xf32, #tpu.memory_space<vmem>>, vector<16x32xf32>
    %cst_13 = arith.constant dense<0.000000e+00> : vector<128x32xf32>
    %28 = tpu.matmul %26, %27, %cst_13 {dimension_numbers = #tpu.dot_dimension_numbers<[1], [0], [0], [1], [0, 0, 1, 1], [], []>} : vector<128x16xf32>, vector<16x32xf32>, vector<128x32xf32> -> vector<128x32xf32>
    %c0_14 = arith.constant 0 : index
    %c0_15 = arith.constant 0 : index
    %29 = vector.load %arg6[%c0_14, %c0_15] : memref<1x32xf32, #tpu.memory_space<vmem>>, vector<1x32xf32>
    %30 = vector.broadcast %29 : vector<1x32xf32> to vector<128x32xf32>
    %31 = arith.addf %28, %30 : vector<128x32xf32>
    %cst_16 = arith.constant 0.000000e+00 : f32
    %32 = vector.broadcast %cst_16 : f32 to vector<128x32xf32>
    %33 = arith.maximumf %31, %32 : vector<128x32xf32>
    %c0_17 = arith.constant 0 : index
    %c0_18 = arith.constant 0 : index
    %34 = vector.load %arg7[%c0_17, %c0_18] : memref<32x16xf32, #tpu.memory_space<vmem>>, vector<32x16xf32>
    %cst_19 = arith.constant dense<0.000000e+00> : vector<128x16xf32>
    %35 = tpu.matmul %33, %34, %cst_19 {dimension_numbers = #tpu.dot_dimension_numbers<[1], [0], [0], [1], [0, 0, 1, 1], [], []>} : vector<128x32xf32>, vector<32x16xf32>, vector<128x16xf32> -> vector<128x16xf32>
    %c0_20 = arith.constant 0 : index
    %c0_21 = arith.constant 0 : index
    %36 = vector.load %arg8[%c0_20, %c0_21] : memref<1x16xf32, #tpu.memory_space<vmem>>, vector<1x16xf32>
    %37 = vector.broadcast %36 : vector<1x16xf32> to vector<128x16xf32>
    %38 = arith.addf %35, %37 : vector<128x16xf32>
    %39 = arith.addf %26, %38 : vector<128x16xf32>
    %c0_22 = arith.constant 0 : index
    %c0_23 = arith.constant 0 : index
    %40 = vector.load %arg9[%c0_22, %c0_23] : memref<1x16xf32, #tpu.memory_space<vmem>>, vector<1x16xf32>
    %c0_24 = arith.constant 0 : index
    %c0_25 = arith.constant 0 : index
    %41 = vector.load %arg10[%c0_24, %c0_25] : memref<1x16xf32, #tpu.memory_space<vmem>>, vector<1x16xf32>
    %cst_26 = arith.constant dense<0.000000e+00> : vector<128xf32>
    %42 = vector.multi_reduction <add>, %39, %cst_26 [1] : vector<128x16xf32> to vector<128xf32>
    %43 = vector.shape_cast %42 : vector<128xf32> to vector<128x1xf32>
    %cst_27 = arith.constant 1.600000e+01 : f32
    %44 = vector.broadcast %cst_27 : f32 to vector<128x1xf32>
    %45 = arith.divf %43, %44 : vector<128x1xf32>
    %46 = vector.broadcast %45 : vector<128x1xf32> to vector<128x16xf32>
    %47 = arith.subf %39, %46 : vector<128x16xf32>
    %48 = arith.mulf %47, %47 : vector<128x16xf32>
    %cst_28 = arith.constant dense<0.000000e+00> : vector<128xf32>
    %49 = vector.multi_reduction <add>, %48, %cst_28 [1] : vector<128x16xf32> to vector<128xf32>
    %50 = vector.shape_cast %49 : vector<128xf32> to vector<128x1xf32>
    %cst_29 = arith.constant 1.600000e+01 : f32
    %51 = vector.broadcast %cst_29 : f32 to vector<128x1xf32>
    %52 = arith.divf %50, %51 : vector<128x1xf32>
    %53 = vector.broadcast %45 : vector<128x1xf32> to vector<128x16xf32>
    %54 = arith.subf %39, %53 : vector<128x16xf32>
    %cst_30 = arith.constant 9.99999974E-6 : f32
    %55 = vector.broadcast %cst_30 : f32 to vector<128x1xf32>
    %56 = arith.addf %52, %55 : vector<128x1xf32>
    %57 = math.rsqrt %56 : vector<128x1xf32>
    %58 = vector.broadcast %57 : vector<128x1xf32> to vector<128x16xf32>
    %59 = arith.mulf %54, %58 : vector<128x16xf32>
    %60 = vector.broadcast %40 : vector<1x16xf32> to vector<128x16xf32>
    %61 = arith.mulf %59, %60 : vector<128x16xf32>
    %62 = vector.broadcast %41 : vector<1x16xf32> to vector<128x16xf32>
    %63 = arith.addf %61, %62 : vector<128x16xf32>
    %c0_31 = arith.constant 0 : index
    %c0_32 = arith.constant 0 : index
    %64 = vector.load %arg11[%c0_31, %c0_32] : memref<128x16xf32, #tpu.memory_space<vmem>>, vector<128x16xf32>
    tpu.vector_store %arg11[%c0_31, %c0_32], %63 {strides = array<i32>} : memref<128x16xf32, #tpu.memory_space<vmem>>, vector<128x16xf32>,
    return
  }
  func.func @transform_0(%arg0: i32) -> (i32, i32) {
    %c0_i32 = arith.constant 0 : i32
    %c0_i32_0 = arith.constant 0 : i32
    return %arg0, %c0_i32 : i32, i32
  }
  func.func @transform_1(%arg0: i32) -> (i32, i32) {
    %c0_i32 = arith.constant 0 : i32
    %c0_i32_0 = arith.constant 0 : i32
    return %arg0, %c0_i32 : i32, i32
  }
  func.func @transform_2(%arg0: i32) -> (i32, i32) {
    %c0_i32 = arith.constant 0 : i32
    %c0_i32_0 = arith.constant 0 : i32
    %c0_i32_1 = arith.constant 0 : i32
    return %c0_i32, %c0_i32_0 : i32, i32
  }
  func.func @transform_3(%arg0: i32) -> (i32, i32) {
    %c0_i32 = arith.constant 0 : i32
    %c0_i32_0 = arith.constant 0 : i32
    %c0_i32_1 = arith.constant 0 : i32
    return %c0_i32, %c0_i32_0 : i32, i32
  }
  func.func @transform_4(%arg0: i32) -> (i32, i32) {
    %c0_i32 = arith.constant 0 : i32
    %c0_i32_0 = arith.constant 0 : i32
    %c0_i32_1 = arith.constant 0 : i32
    return %c0_i32, %c0_i32_0 : i32, i32
  }
  func.func @transform_5(%arg0: i32) -> (i32, i32) {
    %c0_i32 = arith.constant 0 : i32
    %c0_i32_0 = arith.constant 0 : i32
    %c0_i32_1 = arith.constant 0 : i32
    return %c0_i32, %c0_i32_0 : i32, i32
  }
  func.func @transform_6(%arg0: i32) -> (i32, i32) {
    %c0_i32 = arith.constant 0 : i32
    %c0_i32_0 = arith.constant 0 : i32
    %c0_i32_1 = arith.constant 0 : i32
    return %c0_i32, %c0_i32_0 : i32, i32
  }
  func.func @transform_7(%arg0: i32) -> (i32, i32) {
    %c0_i32 = arith.constant 0 : i32
    %c0_i32_0 = arith.constant 0 : i32
    %c0_i32_1 = arith.constant 0 : i32
    return %c0_i32, %c0_i32_0 : i32, i32
  }
  func.func @transform_8(%arg0: i32) -> (i32, i32) {
    %c0_i32 = arith.constant 0 : i32
    %c0_i32_0 = arith.constant 0 : i32
    %c0_i32_1 = arith.constant 0 : i32
    return %c0_i32, %c0_i32_0 : i32, i32
  }
  func.func @transform_9(%arg0: i32) -> (i32, i32) {
    %c0_i32 = arith.constant 0 : i32
    %c0_i32_0 = arith.constant 0 : i32
    %c0_i32_1 = arith.constant 0 : i32
    return %c0_i32, %c0_i32_0 : i32, i32
  }
  func.func @transform_10(%arg0: i32) -> (i32, i32) {
    %c0_i32 = arith.constant 0 : i32
    %c0_i32_0 = arith.constant 0 : i32
    return %arg0, %c0_i32 : i32, i32
  }
}

</mosaic_0001>

<llo_original>
// kernel: xey_transformer_layer.6
$region0: #{xey_transformer_layer.6}
  #allocation0 [shape = 'u32[]', space=smem, size = 0x4, offset = 0x4, fixed_abs, tag = 'smem constant byte address 0x4 - core index']
  #allocation1 [shape = 'u32[144,128]{1,0:T(1,128)}', space=vmem, size = 0x12000, scoped, tag = 'internal scratch']
  %s0 = inlined_call_operand.vmem [shape: f32[16,32], index: 0, kind: input, shape index: {}]
  %s1 = inlined_call_operand.vmem [shape: f32[16,32], index: 1, kind: input, shape index: {}]
  %s2 = inlined_call_operand.vmem [shape: f32[1,32], index: 2, kind: input, shape index: {}, may-alias: {2,8}]
  %s3 = inlined_call_operand.vmem [shape: f32[1,32], index: 3, kind: input, shape index: {}, may-alias: {3,9}]
  %s4 = inlined_call_operand.vmem [shape: f32[32,64], index: 4, kind: input, shape index: {}]
  %s5 = inlined_call_operand.vmem [shape: f32[1,64], index: 5, kind: input, shape index: {}]
  %s6 = inlined_call_operand.vmem [shape: f32[64,32], index: 6, kind: input, shape index: {}]
  %s7 = inlined_call_operand.vmem [shape: f32[1,32], index: 7, kind: input, shape index: {}]
  %s8 = inlined_call_operand.vmem [shape: f32[1,32], index: 8, kind: input, shape index: {}, may-alias: {2,8}]
  %s9 = inlined_call_operand.vmem [shape: f32[1,32], index: 9, kind: input, shape index: {}, may-alias: {3,9}]
  %s10 = inlined_call_operand.hbm [shape: f32[16,32], index: 10, kind: output, shape index: {}]
  %s11 = sld [smem:[#allocation0]]
  $region50: #{xey_transformer_layer.6} parent=0
    _
  %s13 = ssub.s32 1, %s11
  %s14 = scalar_select 0, %s13, %s11
  $region1: #{xey_transformer_layer.6} parent=0
    #allocation2 [shape = 'u8[8192]{0}', space=vmem, size = 0x2000, scoped, tag = 'output window, operand 0, single buffered']
    #allocation3 [shape = 's32[1]{0}', space=sflag, size = 0x4, scoped, tag = 'scoped memory for xey_transformer_layer.6']
    %15 = vsyncpa [#allocation3], 0
    // Predicated region
    $region2: #{xey_transformer_layer.6} parent=1 // pred_check
      _
    $region3: #{xey_transformer_layer.6} parent=1 // pred_check_branch
      %17 = sbr.rel (0) target = $region5
    $region4: #{xey_transformer_layer.6} parent=1 // pred_region
      _
    $region5: #{xey_transformer_layer.6} parent=1 // pred_fallthru
      _
    // Predicated region
    $region6: #{xey_transformer_layer.6} parent=1 // pred_check
      _
    $region7: #{xey_transformer_layer.6} parent=1 // pred_check_branch
      %19 = sbr.rel (0) target = $region9
    $region8: #{xey_transformer_layer.6} parent=1 // pred_region
      _
    $region9: #{xey_transformer_layer.6} parent=1 // pred_fallthru
      _
    // Predicated region
    $region10: #{xey_transformer_layer.6} parent=1 // pred_check
      _
    $region11: #{xey_transformer_layer.6} parent=1 // pred_check_branch
      %21 = sbr.rel (0) target = $region13
    $region12: #{xey_transformer_layer.6} parent=1 // pred_region
      _
    $region13: #{xey_transformer_layer.6} parent=1 // pred_fallthru
      _
    // Predicated region
    $region14: #{xey_transformer_layer.6} parent=1 // pred_check
      _
    $region15: #{xey_transformer_layer.6} parent=1 // pred_check_branch
      %23 = sbr.rel (0) target = $region17
    $region16: #{xey_transformer_layer.6} parent=1 // pred_region
      _
    $region17: #{xey_transformer_layer.6} parent=1 // pred_fallthru
      _
    // Predicated region
    $region18: #{xey_transformer_layer.6} parent=1 // pred_check
      _
    $region19: #{xey_transformer_layer.6} parent=1 // pred_check_branch
      %25 = sbr.rel (0) target = $region21
    $region20: #{xey_transformer_layer.6} parent=1 // pred_region
      _
    $region21: #{xey_transformer_layer.6} parent=1 // pred_fallthru
      _
    // Predicated region
    $region22: #{xey_transformer_layer.6} parent=1 // pred_check
      _
    $region23: #{xey_transformer_layer.6} parent=1 // pred_check_branch
      %27 = sbr.rel (0) target = $region25
    $region24: #{xey_transformer_layer.6} parent=1 // pred_region
      _
    $region25: #{xey_transformer_layer.6} parent=1 // pred_fallthru
      _
    // Predicated region
    $region26: #{xey_transformer_layer.6} parent=1 // pred_check
      _
    $region27: #{xey_transformer_layer.6} parent=1 // pred_check_branch
      %29 = sbr.rel (0) target = $region29
    $region28: #{xey_transformer_layer.6} parent=1 // pred_region
      _
    $region29: #{xey_transformer_layer.6} parent=1 // pred_fallthru
      _
    // Predicated region
    $region30: #{xey_transformer_layer.6} parent=1 // pred_check
      _
    $region31: #{xey_transformer_layer.6} parent=1 // pred_check_branch
      %31 = sbr.rel (0) target = $region33
    $region32: #{xey_transformer_layer.6} parent=1 // pred_region
      _
    $region33: #{xey_transformer_layer.6} parent=1 // pred_fallthru
      _
    // Predicated region
    $region34: #{xey_transformer_layer.6} parent=1 // pred_check
      _
    $region35: #{xey_transformer_layer.6} parent=1 // pred_check_branch
      %33 = sbr.rel (0) target = $region37
    $region36: #{xey_transformer_layer.6} parent=1 // pred_region
      _
    $region37: #{xey_transformer_layer.6} parent=1 // pred_fallthru
      _
    // Predicated region
    $region38: #{xey_transformer_layer.6} parent=1 // pred_check
      _
    $region39: #{xey_transformer_layer.6} parent=1 // pred_check_branch
      %35 = sbr.rel (0) target = $region41
    $region40: #{xey_transformer_layer.6} parent=1 // pred_region
      _
    $region41: #{xey_transformer_layer.6} parent=1 // pred_fallthru
      _
    %v36 = vld [vmem:[%s0] sm:$0xff]
    %v37 = vld [vmem:[%s0 + $0x8] sm:$0xff]
    %v38 = vld [vmem:[%s1] sm:$0xff]
    %v39 = vld [vmem:[%s1 + $0x8] sm:$0xff]
    %v40 = vadd.f32 %v36, %v38
    %v41 = vadd.f32 %v37, %v39
    %v42 = vld [vmem:[%s2] sm:$0x1]
    %v43 = vld [vmem:[%s3] sm:$0x1]
    %vm44 = vcmask 261120
    %v45 = vsel %vm44, %v40, 0.0
    %46 = vadd.xlane.f32.xlu0 %v45
    %v47 = vpop.xlane.xlu0 %46
    %v48 = vsel %vm44, %v41, 0.0
    %49 = vadd.xlane.f32.xlu0 %v48
    %v50 = vpop.xlane.xlu0 %49
    %v51 = vrcp.pop 32.0
    %v52 = vmul.f32 %v47, %v51
    %v53 = vmul.f32 %v50, %v51
    %v54 = vsub.f32 %v40, %v52
    %v55 = vsub.f32 %v41, %v53
    %v56 = vmul.f32 %v54, %v54
    %v57 = vmul.f32 %v55, %v55
    %v58 = vsel %vm44, %v56, 0.0
    %59 = vadd.xlane.f32.xlu0 %v58
    %v60 = vpop.xlane.xlu0 %59
    %v61 = vsel %vm44, %v57, 0.0
    %62 = vadd.xlane.f32.xlu0 %v61
    %v63 = vpop.xlane.xlu0 %62
    %v64 = vmul.f32 %v60, %v51
    %v65 = vmul.f32 %v63, %v51
    %v66 = vadd.f32 %v64, 1e-05
    %v67 = vadd.f32 %v65, 1e-05
    %v68 = vrsqrt.pop %v66
    %v69 = vrsqrt.pop %v67
    %v70 = vmul.f32 %v54, %v68
    %v71 = vmul.f32 %v55, %v69
    %v73 = vlaneseq
    %v74 = vshrl.u32 %v73, 7
    %v75 = vsub.s32 0, %v74
    %v76 = vrot.slane %v42, %v75
    %v78 = vmul.f32 %v70, %v76
    %v79 = vmul.f32 %v71, %v76
    %v81 = vlaneseq
    %v82 = vshrl.u32 %v81, 7
    %v83 = vsub.s32 0, %v82
    %v84 = vrot.slane %v43, %v83
    %v86 = vadd.f32 %v78, %v84
    %v87 = vadd.f32 %v79, %v84
    %v88 = vld [vmem:[%s4] sm:$0xff]
    %v89 = vld [vmem:[%s4 + $0x8] sm:$0xff]
    %v90 = vld [vmem:[%s4 + $0x10] sm:$0xff]
    %v91 = vld [vmem:[%s4 + $0x18] sm:$0xff]
    %v92 = vld [vmem:[%s5] sm:$0x1]
    %v94 = vlaneseq
    %v95 = vshrl.u32 %v94, 7
    %v96 = vsub.s32 0, %v95
    %v97 = vrot.slane %v92, %v96
    %v100 = vsel %vm44, %v86, 0
    %v103 = vsel %vm44, %v87, 0
    %105 = vmatprep.subr.mxu0 0.0
    %106 = vmatpush1.msra.mxu0 %v88
    %107 = vmatprep.subr.mxu0 0.0
    %108 = vmatpush1.msra.mxu0 %v89
    %109 = vmatprep.subr.mxu0 0.0
    %110 = vmatpush1.msra.mxu0 %v90
    %111 = vmatprep.subr.mxu0 0.0
    %112 = vmatpush1.msra.mxu0 %v91
    %113 = vmatprep.subr.mxu0 0.0
    %114 = vmatpush1.msra.mxu0 0.0
    %115 = vmatprep.subr.mxu0 0.0
    %116 = vmatpush1.msra.mxu0 0.0
    %117 = vmatprep.subr.mxu0 0.0
    %118 = vmatpush1.msra.mxu0 0.0
    %119 = vmatprep.subr.mxu0 0.0
    %120 = vmatpush1.msra.mxu0 0.0
    %121 = vmatprep.subr.mxu0 0.0
    %122 = vmatpush1.msra.mxu0 0.0
    %123 = vmatprep.subr.mxu0 0.0
    %124 = vmatpush1.msra.mxu0 0.0
    %125 = vmatprep.subr.mxu0 0.0
    %126 = vmatpush1.msra.mxu0 0.0
    %127 = vmatprep.subr.mxu0 0.0
    %128 = vmatpush1.msra.mxu0 0.0
    %129 = vmatprep.subr.mxu0 0.0
    %130 = vmatpush1.msra.mxu0 0.0
    %131 = vmatprep.subr.mxu0 0.0
    %132 = vmatpush1.msra.mxu0 0.0
    %133 = vmatprep.subr.mxu0 0.0
    %134 = vmatpush1.msra.mxu0 0.0
    %135 = vmatprep.subr.mxu0 0.0
    %136 = vmatpush1.msra.mxu0 0.0
    %137 = vmatprep.subr.mxu0 0.0
    %138 = vmatpush1.msra.mxu0 0.0
    %139 = vmatprep.subr.mxu0 0.0
    %140 = vmatpush1.msra.mxu0 0.0
    %141 = vmatprep.subr.mxu0 0.0
    %142 = vmatpush1.msra.mxu0 0.0
    %143 = vmatprep.subr.mxu0 0.0
    %144 = vmatpush1.msra.mxu0 0.0
    %145 = vmatprep.subr.mxu0 0.0
    %146 = vmatpush1.msra.mxu0 0.0
    %147 = vmatprep.subr.mxu0 0.0
    %148 = vmatpush1.msra.mxu0 0.0
    %149 = vmatprep.subr.mxu0 0.0
    %150 = vmatpush1.msra.mxu0 0.0
    %151 = vmatprep.subr.mxu0 0.0
    %152 = vmatpush1.msra.mxu0 0.0
    %153 = vmatprep.subr.mxu0 0.0
    %154 = vmatpush1.msra.mxu0 0.0
    %155 = vmatprep.subr.mxu0 0.0
    %156 = vmatpush1.msra.mxu0 0.0
    %157 = vmatprep.subr.mxu0 0.0
    %158 = vmatpush1.msra.mxu0 0.0
    %159 = vmatprep.subr.mxu0 0.0
    %160 = vmatpush1.msra.mxu0 0.0
    %161 = vmatprep.subr.mxu0 0.0
    %162 = vmatpush1.msra.mxu0 0.0
    %163 = vmatprep.subr.mxu0 0.0
    %164 = vmatpush1.msra.mxu0 0.0
    %165 = vmatprep.subr.mxu0 0.0
    %166 = vmatpush1.msra.mxu0 0.0
    %167 = vmatprep.subr.mxu0 0.0
    %168 = vmatpush1.msra.mxu0 0.0
    %169 = vmatprep.mubr.f32.mxu0 0.0
    %170 = vmatmul.mubr.f32.gmra.mrb[0].mxu0 %v100
    %v171 = vpop.f32.mrb[0].mxu0
    %v172 = vadd.f32 %v97, %v171
    %v173 = vpop.f32.mrb[0].mxu0
    %174 = vmatprep.mubr.f32.mxu0 0.0
    %175 = vmatmul.mubr.f32.gmra.mrb[0].mxu0 %v103
    %v176 = vpop.f32.mrb[0].mxu0
    %v177 = vadd.f32 %v97, %v176
    %v178 = vpop.f32.mrb[0].mxu0
    %179 = vdwg.mxu0
    %v180 = vmax.f32 %v172, 0.0
    %v181 = vmax.f32 %v177, 0.0
    %v182 = vld [vmem:[%s6] sm:$0xff]
    %v183 = vld [vmem:[%s6 + $0x8] sm:$0xff]
    %v184 = vld [vmem:[%s6 + $0x10] sm:$0xff]
    %v185 = vld [vmem:[%s6 + $0x18] sm:$0xff]
    %v186 = vld [vmem:[%s6 + $0x20] sm:$0xff]
    %v187 = vld [vmem:[%s6 + $0x28] sm:$0xff]
    %v188 = vld [vmem:[%s6 + $0x30] sm:$0xff]
    %v189 = vld [vmem:[%s6 + $0x38] sm:$0xff]
    %v190 = vld [vmem:[%s7] sm:$0x1]
    %v192 = vlaneseq
    %v193 = vshrl.u32 %v192, 7
    %v194 = vsub.s32 0, %v193
    %v195 = vrot.slane %v190, %v194
    %vm197 = vcmask 523264
    %v199 = vsel %vm197, %v180, 0
    %v202 = vsel %vm197, %v181, 0
    %204 = vmatprep.subr.mxu0 0.0
    %205 = vmatpush1.msra.mxu0 %v182
    %206 = vmatprep.subr.mxu0 0.0
    %207 = vmatpush1.msra.mxu0 %v183
    %208 = vmatprep.subr.mxu0 0.0
    %209 = vmatpush1.msra.mxu0 %v184
    %210 = vmatprep.subr.mxu0 0.0
    %211 = vmatpush1.msra.mxu0 %v185
    %212 = vmatprep.subr.mxu0 0.0
    %213 = vmatpush1.msra.mxu0 %v186
    %214 = vmatprep.subr.mxu0 0.0
    %215 = vmatpush1.msra.mxu0 %v187
    %216 = vmatprep.subr.mxu0 0.0
    %217 = vmatpush1.msra.mxu0 %v188
    %218 = vmatprep.subr.mxu0 0.0
    %219 = vmatpush1.msra.mxu0 %v189
    %220 = vmatprep.subr.mxu0 0.0
    %221 = vmatpush1.msra.mxu0 0.0
    %222 = vmatprep.subr.mxu0 0.0
    %223 = vmatpush1.msra.mxu0 0.0
    %224 = vmatprep.subr.mxu0 0.0
    %225 = vmatpush1.msra.mxu0 0.0
    %226 = vmatprep.subr.mxu0 0.0
    %227 = vmatpush1.msra.mxu0 0.0
    %228 = vmatprep.subr.mxu0 0.0
    %229 = vmatpush1.msra.mxu0 0.0
    %230 = vmatprep.subr.mxu0 0.0
    %231 = vmatpush1.msra.mxu0 0.0
    %232 = vmatprep.subr.mxu0 0.0
    %233 = vmatpush1.msra.mxu0 0.0
    %234 = vmatprep.subr.mxu0 0.0
    %235 = vmatpush1.msra.mxu0 0.0
    %236 = vmatprep.subr.mxu0 0.0
    %237 = vmatpush1.msra.mxu0 0.0
    %238 = vmatprep.subr.mxu0 0.0
    %239 = vmatpush1.msra.mxu0 0.0
    %240 = vmatprep.subr.mxu0 0.0
    %241 = vmatpush1.msra.mxu0 0.0
    %242 = vmatprep.subr.mxu0 0.0
    %243 = vmatpush1.msra.mxu0 0.0
    %244 = vmatprep.subr.mxu0 0.0
    %245 = vmatpush1.msra.mxu0 0.0
    %246 = vmatprep.subr.mxu0 0.0
    %247 = vmatpush1.msra.mxu0 0.0
    %248 = vmatprep.subr.mxu0 0.0
    %249 = vmatpush1.msra.mxu0 0.0
    %250 = vmatprep.subr.mxu0 0.0
    %251 = vmatpush1.msra.mxu0 0.0
    %252 = vmatprep.subr.mxu0 0.0
    %253 = vmatpush1.msra.mxu0 0.0
    %254 = vmatprep.subr.mxu0 0.0
    %255 = vmatpush1.msra.mxu0 0.0
    %256 = vmatprep.subr.mxu0 0.0
    %257 = vmatpush1.msra.mxu0 0.0
    %258 = vmatprep.subr.mxu0 0.0
    %259 = vmatpush1.msra.mxu0 0.0
    %260 = vmatprep.subr.mxu0 0.0
    %261 = vmatpush1.msra.mxu0 0.0
    %262 = vmatprep.subr.mxu0 0.0
    %263 = vmatpush1.msra.mxu0 0.0
    %264 = vmatprep.subr.mxu0 0.0
    %265 = vmatpush1.msra.mxu0 0.0
    %266 = vmatprep.subr.mxu0 0.0
    %267 = vmatpush1.msra.mxu0 0.0
    %268 = vmatprep.mubr.f32.mxu0 0.0
    %269 = vmatmul.mubr.f32.gmra.mrb[0].mxu0 %v199
    %v270 = vpop.f32.mrb[0].mxu0
    %v271 = vadd.f32 %v195, %v270
    %v272 = vpop.f32.mrb[0].mxu0
    %273 = vmatprep.mubr.f32.mxu0 0.0
    %274 = vmatmul.mubr.f32.gmra.mrb[0].mxu0 %v202
    %v275 = vpop.f32.mrb[0].mxu0
    %v276 = vadd.f32 %v195, %v275
    %v277 = vpop.f32.mrb[0].mxu0
    %278 = vdwg.mxu0
    %v279 = vadd.f32 %v86, %v271
    %v280 = vadd.f32 %v87, %v276
    %v281 = vld [vmem:[%s8] sm:$0x1]
    %v282 = vld [vmem:[%s9] sm:$0x1]
    %v283 = vsel %vm44, %v279, 0.0
    %284 = vadd.xlane.f32.xlu0 %v283
    %v285 = vpop.xlane.xlu0 %284
    %v286 = vsel %vm44, %v280, 0.0
    %287 = vadd.xlane.f32.xlu0 %v286
    %v288 = vpop.xlane.xlu0 %287
    %v289 = vmul.f32 %v285, %v51
    %v290 = vmul.f32 %v288, %v51
    %v291 = vsub.f32 %v279, %v289
    %v292 = vsub.f32 %v280, %v290
    %v293 = vmul.f32 %v291, %v291
    %v294 = vmul.f32 %v292, %v292
    %v295 = vsel %vm44, %v293, 0.0
    %296 = vadd.xlane.f32.xlu0 %v295
    %v297 = vpop.xlane.xlu0 %296
    %v298 = vsel %vm44, %v294, 0.0
    %299 = vadd.xlane.f32.xlu0 %v298
    %v300 = vpop.xlane.xlu0 %299
    %v301 = vmul.f32 %v297, %v51
    %v302 = vmul.f32 %v300, %v51
    %v303 = vadd.f32 %v301, 1e-05
    %v304 = vadd.f32 %v302, 1e-05
    %v305 = vrsqrt.pop %v303
    %v306 = vrsqrt.pop %v304
    %v307 = vmul.f32 %v291, %v305
    %v308 = vmul.f32 %v292, %v306
    %v310 = vlaneseq
    %v311 = vshrl.u32 %v310, 7
    %v312 = vsub.s32 0, %v311
    %v313 = vrot.slane %v281, %v312
    %v315 = vmul.f32 %v307, %v313
    %v316 = vmul.f32 %v308, %v313
    %v318 = vlaneseq
    %v319 = vshrl.u32 %v318, 7
    %v320 = vsub.s32 0, %v319
    %v321 = vrot.slane %v282, %v320
    %v323 = vadd.f32 %v315, %v321
    %v324 = vadd.f32 %v316, %v321
    %325 = vst.msk [vmem:[#allocation2] sm:$0xff] %vm44, %v323
    %326 = vst.msk [vmem:[#allocation2 + $0x8] sm:$0xff] %vm44, %v324
    // Predicated region
    $region42: #{xey_transformer_layer.6} parent=1 // pred_check
      _
    $region43: #{xey_transformer_layer.6} parent=1 // pred_check_branch
      %328 = sbr.rel (0) target = $region45
    $region44: #{xey_transformer_layer.6} parent=1 // pred_region
      %s330 = ssub.s32 256, 256
      %331 = vsyncadd [#allocation3], %s330
      %s332 = sshll.u32 [#allocation2], 4
      %s333 = int_to_ptr.vmem [resolvable:$true] %s332
      %338 = dma.vmem_to_hbm [thread:$0]  %s333, 256, %s10, [#allocation3], 128, 128, 8
    $region45: #{xey_transformer_layer.6} parent=1 // pred_fallthru
      _
    // Predicated region
    $region46: #{xey_transformer_layer.6} parent=1 // pred_check
      _
    $region47: #{xey_transformer_layer.6} parent=1 // pred_check_branch
      %340 = sbr.rel (0) target = $region49
    $region48: #{xey_transformer_layer.6} parent=1 // pred_region
      %341 = dma.done [#allocation3], 256
    $region49: #{xey_transformer_layer.6} parent=1 // pred_fallthru
      _
    %342 = vsyncpa [#allocation3], 1

// kernel: xey_transformer_layer.4
$region0: #{xey_transformer_layer.4}
  #allocation0 [shape = 'u32[]', space=smem, size = 0x4, offset = 0x4, fixed_abs, tag = 'smem constant byte address 0x4 - core index']
  #allocation1 [shape = 'u32[144,128]{1,0:T(1,128)}', space=vmem, size = 0x12000, scoped, tag = 'internal scratch']
  %s0 = inlined_call_operand.hbm [shape: f32[16,32], index: 0, kind: input, shape index: {}]
  %s1 = inlined_call_operand.vmem [shape: f32[32,96], index: 1, kind: input, shape index: {}]
  %s2 = inlined_call_operand.vmem [shape: f32[1,96], index: 2, kind: input, shape index: {}]
  %s3 = inlined_call_operand.vmem [shape: f32[16,96], index: 3, kind: output, shape index: {}]
  %s4 = sld [smem:[#allocation0]]
  $region26: #{xey_transformer_layer.4} parent=0
    _
  %s6 = ssub.s32 1, %s4
  %s7 = scalar_select 0, %s6, %s4
  $region1: #{xey_transformer_layer.4} parent=0
    #allocation2 [shape = 'u8[8192]{0}', space=vmem, size = 0x2000, scoped, tag = 'input window, operand 0, single buffered']
    #allocation3 [shape = 's32[1]{0}', space=sflag, size = 0x4, scoped, tag = 'scoped memory for xey_transformer_layer.4']
    %8 = vsyncpa [#allocation3], 0
    // Predicated region
    $region2: #{xey_transformer_layer.4} parent=1 // pred_check
      _
    $region3: #{xey_transformer_layer.4} parent=1 // pred_check_branch
      %10 = sbr.rel (0) target = $region5
    $region4: #{xey_transformer_layer.4} parent=1 // pred_region
      %s12 = ssub.s32 256, 256
      %13 = vsyncadd [#allocation3], %s12
      %s14 = sshll.u32 [#allocation2], 4
      %s15 = int_to_ptr.vmem [resolvable:$true] %s14
      %20 = dma.hbm_to_vmem [thread:$0]  %s0, 256, %s15, [#allocation3], 128, 128, 8
    $region5: #{xey_transformer_layer.4} parent=1 // pred_fallthru
      _
    // Predicated region
    $region6: #{xey_transformer_layer.4} parent=1 // pred_check
      _
    $region7: #{xey_transformer_layer.4} parent=1 // pred_check_branch
      %22 = sbr.rel (0) target = $region9
    $region8: #{xey_transformer_layer.4} parent=1 // pred_region
      _
    $region9: #{xey_transformer_layer.4} parent=1 // pred_fallthru
      _
    // Predicated region
    $region10: #{xey_transformer_layer.4} parent=1 // pred_check
      _
    $region11: #{xey_transformer_layer.4} parent=1 // pred_check_branch
      %24 = sbr.rel (0) target = $region13
    $region12: #{xey_transformer_layer.4} parent=1 // pred_region
      _
    $region13: #{xey_transformer_layer.4} parent=1 // pred_fallthru
      _
    // Predicated region
    $region14: #{xey_transformer_layer.4} parent=1 // pred_check
      _
    $region15: #{xey_transformer_layer.4} parent=1 // pred_check_branch
      %26 = sbr.rel (0) target = $region17
    $region16: #{xey_transformer_layer.4} parent=1 // pred_region
      %27 = dma.done [#allocation3], 256
    $region17: #{xey_transformer_layer.4} parent=1 // pred_fallthru
      _
    %v28 = vld [vmem:[#allocation2] sm:$0xff]
    %v29 = vld [vmem:[#allocation2 + $0x8] sm:$0xff]
    %v30 = vld [vmem:[%s1] sm:$0xff]
    %v31 = vld [vmem:[%s1 + $0x8] sm:$0xff]
    %v32 = vld [vmem:[%s1 + $0x10] sm:$0xff]
    %v33 = vld [vmem:[%s1 + $0x18] sm:$0xff]
    %v34 = vld [vmem:[%s2] sm:$0x1]
    %v36 = vlaneseq
    %v37 = vshrl.u32 %v36, 7
    %v38 = vsub.s32 0, %v37
    %v39 = vrot.slane %v34, %v38
    %vm41 = vcmask 261120
    %v43 = vsel %vm41, %v28, 0
    %v46 = vsel %vm41, %v29, 0
    %48 = vmatprep.subr.mxu0 0.0
    %49 = vmatpush1.msra.mxu0 %v30
    %50 = vmatprep.subr.mxu0 0.0
    %51 = vmatpush1.msra.mxu0 %v31
    %52 = vmatprep.subr.mxu0 0.0
    %53 = vmatpush1.msra.mxu0 %v32
    %54 = vmatprep.subr.mxu0 0.0
    %55 = vmatpush1.msra.mxu0 %v33
    %56 = vmatprep.subr.mxu0 0.0
    %57 = vmatpush1.msra.mxu0 0.0
    %58 = vmatprep.subr.mxu0 0.0
    %59 = vmatpush1.msra.mxu0 0.0
    %60 = vmatprep.subr.mxu0 0.0
    %61 = vmatpush1.msra.mxu0 0.0
    %62 = vmatprep.subr.mxu0 0.0
    %63 = vmatpush1.msra.mxu0 0.0
    %64 = vmatprep.subr.mxu0 0.0
    %65 = vmatpush1.msra.mxu0 0.0
    %66 = vmatprep.subr.mxu0 0.0
    %67 = vmatpush1.msra.mxu0 0.0
    %68 = vmatprep.subr.mxu0 0.0
    %69 = vmatpush1.msra.mxu0 0.0
    %70 = vmatprep.subr.mxu0 0.0
    %71 = vmatpush1.msra.mxu0 0.0
    %72 = vmatprep.subr.mxu0 0.0
    %73 = vmatpush1.msra.mxu0 0.0
    %74 = vmatprep.subr.mxu0 0.0
    %75 = vmatpush1.msra.mxu0 0.0
    %76 = vmatprep.subr.mxu0 0.0
    %77 = vmatpush1.msra.mxu0 0.0
    %78 = vmatprep.subr.mxu0 0.0
    %79 = vmatpush1.msra.mxu0 0.0
    %80 = vmatprep.subr.mxu0 0.0
    %81 = vmatpush1.msra.mxu0 0.0
    %82 = vmatprep.subr.mxu0 0.0
    %83 = vmatpush1.msra.mxu0 0.0
    %84 = vmatprep.subr.mxu0 0.0
    %85 = vmatpush1.msra.mxu0 0.0
    %86 = vmatprep.subr.mxu0 0.0
    %87 = vmatpush1.msra.mxu0 0.0
    %88 = vmatprep.subr.mxu0 0.0
    %89 = vmatpush1.msra.mxu0 0.0
    %90 = vmatprep.subr.mxu0 0.0
    %91 = vmatpush1.msra.mxu0 0.0
    %92 = vmatprep.subr.mxu0 0.0
    %93 = vmatpush1.msra.mxu0 0.0
    %94 = vmatprep.subr.mxu0 0.0
    %95 = vmatpush1.msra.mxu0 0.0
    %96 = vmatprep.subr.mxu0 0.0
    %97 = vmatpush1.msra.mxu0 0.0
    %98 = vmatprep.subr.mxu0 0.0
    %99 = vmatpush1.msra.mxu0 0.0
    %100 = vmatprep.subr.mxu0 0.0
    %101 = vmatpush1.msra.mxu0 0.0
    %102 = vmatprep.subr.mxu0 0.0
    %103 = vmatpush1.msra.mxu0 0.0
    %104 = vmatprep.subr.mxu0 0.0
    %105 = vmatpush1.msra.mxu0 0.0
    %106 = vmatprep.subr.mxu0 0.0
    %107 = vmatpush1.msra.mxu0 0.0
    %108 = vmatprep.subr.mxu0 0.0
    %109 = vmatpush1.msra.mxu0 0.0
    %110 = vmatprep.subr.mxu0 0.0
    %111 = vmatpush1.msra.mxu0 0.0
    %112 = vmatprep.mubr.f32.mxu0 0.0
    %113 = vmatmul.mubr.f32.gmra.mrb[0].mxu0 %v43
    %v114 = vpop.f32.mrb[0].mxu0
    %v115 = vadd.f32 %v39, %v114
    %v116 = vpop.f32.mrb[0].mxu0
    %117 = vmatprep.mubr.f32.mxu0 0.0
    %118 = vmatmul.mubr.f32.gmra.mrb[0].mxu0 %v46
    %v119 = vpop.f32.mrb[0].mxu0
    %v120 = vadd.f32 %v39, %v119
    %v121 = vpop.f32.mrb[0].mxu0
    %122 = vdwg.mxu0
    %vm123 = vcmask 785408
    %124 = vst.msk [vmem:[%s3] sm:$0xff] %vm123, %v115
    %125 = vst.msk [vmem:[%s3 + $0x8] sm:$0xff] %vm123, %v120
    // Predicated region
    $region18: #{xey_transformer_layer.4} parent=1 // pred_check
      _
    $region19: #{xey_transformer_layer.4} parent=1 // pred_check_branch
      %127 = sbr.rel (0) target = $region21
    $region20: #{xey_transformer_layer.4} parent=1 // pred_region
      _
    $region21: #{xey_transformer_layer.4} parent=1 // pred_fallthru
      _
    // Predicated region
    $region22: #{xey_transformer_layer.4} parent=1 // pred_check
      _
    $region23: #{xey_transformer_layer.4} parent=1 // pred_check_branch
      %129 = sbr.rel (0) target = $region25
    $region24: #{xey_transformer_layer.4} parent=1 // pred_region
      _
    $region25: #{xey_transformer_layer.4} parent=1 // pred_fallthru
      _
    %130 = vsyncpa [#allocation3], 1

// kernel: xey_transformer_layer.7
$region0: #{xey_transformer_layer.7}
  #allocation0 [shape = 'u32[]', space=smem, size = 0x4, offset = 0x4, fixed_abs, tag = 'smem constant byte address 0x4 - core index']
  #allocation1 [shape = 'u32[144,128]{1,0:T(1,128)}', space=vmem, size = 0x12000, scoped, tag = 'internal scratch']
  %s0 = inlined_call_operand.vmem [shape: f32[128,16], index: 0, kind: input, shape index: {}]
  %s1 = inlined_call_operand.vmem [shape: f32[128,16], index: 1, kind: input, shape index: {}]
  %s2 = inlined_call_operand.vmem [shape: f32[1,16], index: 2, kind: input, shape index: {}, may-alias: {2,8}]
  %s3 = inlined_call_operand.vmem [shape: f32[1,16], index: 3, kind: input, shape index: {}, may-alias: {3,9}]
  %s4 = inlined_call_operand.vmem [shape: f32[16,32], index: 4, kind: input, shape index: {}]
  %s5 = inlined_call_operand.vmem [shape: f32[1,32], index: 5, kind: input, shape index: {}]
  %s6 = inlined_call_operand.vmem [shape: f32[32,16], index: 6, kind: input, shape index: {}]
  %s7 = inlined_call_operand.vmem [shape: f32[1,16], index: 7, kind: input, shape index: {}]
  %s8 = inlined_call_operand.vmem [shape: f32[1,16], index: 8, kind: input, shape index: {}, may-alias: {2,8}]
  %s9 = inlined_call_operand.vmem [shape: f32[1,16], index: 9, kind: input, shape index: {}, may-alias: {3,9}]
  %s10 = inlined_call_operand.hbm [shape: f32[128,16], index: 10, kind: output, shape index: {}]
  %s11 = sld [smem:[#allocation0]]
  $region50: #{xey_transformer_layer.7} parent=0
    _
  %s13 = ssub.s32 1, %s11
  %s14 = scalar_select 0, %s13, %s11
  $region1: #{xey_transformer_layer.7} parent=0
    #allocation2 [shape = 'u8[65536]{0}', space=vmem, size = 0x10000, scoped, tag = 'output window, operand 0, single buffered']
    #allocation3 [shape = 's32[1]{0}', space=sflag, size = 0x4, scoped, tag = 'scoped memory for xey_transformer_layer.7']
    %15 = vsyncpa [#allocation3], 0
    // Predicated region
    $region2: #{xey_transformer_layer.7} parent=1 // pred_check
      _
    $region3: #{xey_transformer_layer.7} parent=1 // pred_check_branch
      %17 = sbr.rel (0) target = $region5
    $region4: #{xey_transformer_layer.7} parent=1 // pred_region
      _
    $region5: #{xey_transformer_layer.7} parent=1 // pred_fallthru
      _
    // Predicated region
    $region6: #{xey_transformer_layer.7} parent=1 // pred_check
      _
    $region7: #{xey_transformer_layer.7} parent=1 // pred_check_branch
      %19 = sbr.rel (0) target = $region9
    $region8: #{xey_transformer_layer.7} parent=1 // pred_region
      _
    $region9: #{xey_transformer_layer.7} parent=1 // pred_fallthru
      _
    // Predicated region
    $region10: #{xey_transformer_layer.7} parent=1 // pred_check
      _
    $region11: #{xey_transformer_layer.7} parent=1 // pred_check_branch
      %21 = sbr.rel (0) target = $region13
    $region12: #{xey_transformer_layer.7} parent=1 // pred_region
      _
    $region13: #{xey_transformer_layer.7} parent=1 // pred_fallthru
      _
    // Predicated region
    $region14: #{xey_transformer_layer.7} parent=1 // pred_check
      _
    $region15: #{xey_transformer_layer.7} parent=1 // pred_check_branch
      %23 = sbr.rel (0) target = $region17
    $region16: #{xey_transformer_layer.7} parent=1 // pred_region
      _
    $region17: #{xey_transformer_layer.7} parent=1 // pred_fallthru
      _
    // Predicated region
    $region18: #{xey_transformer_layer.7} parent=1 // pred_check
      _
    $region19: #{xey_transformer_layer.7} parent=1 // pred_check_branch
      %25 = sbr.rel (0) target = $region21
    $region20: #{xey_transformer_layer.7} parent=1 // pred_region
      _
    $region21: #{xey_transformer_layer.7} parent=1 // pred_fallthru
      _
    // Predicated region
    $region22: #{xey_transformer_layer.7} parent=1 // pred_check
      _
    $region23: #{xey_transformer_layer.7} parent=1 // pred_check_branch
      %27 = sbr.rel (0) target = $region25
    $region24: #{xey_transformer_layer.7} parent=1 // pred_region
      _
    $region25: #{xey_transformer_layer.7} parent=1 // pred_fallthru
      _
    // Predicated region
    $region26: #{xey_transformer_layer.7} parent=1 // pred_check
      _
    $region27: #{xey_transformer_layer.7} parent=1 // pred_check_branch
      %29 = sbr.rel (0) target = $region29
    $region28: #{xey_transformer_layer.7} parent=1 // pred_region
      _
    $region29: #{xey_transformer_layer.7} parent=1 // pred_fallthru
      _
    // Predicated region
    $region30: #{xey_transformer_layer.7} parent=1 // pred_check
      _
    $region31: #{xey_transformer_layer.7} parent=1 // pred_check_branch
      %31 = sbr.rel (0) target = $region33
    $region32: #{xey_transformer_layer.7} parent=1 // pred_region
      _
    $region33: #{xey_transformer_layer.7} parent=1 // pred_fallthru
      _
    // Predicated region
    $region34: #{xey_transformer_layer.7} parent=1 // pred_check
      _
    $region35: #{xey_transformer_layer.7} parent=1 // pred_check_branch
      %33 = sbr.rel (0) target = $region37
    $region36: #{xey_transformer_layer.7} parent=1 // pred_region
      _
    $region37: #{xey_transformer_layer.7} parent=1 // pred_fallthru
      _
    // Predicated region
    $region38: #{xey_transformer_layer.7} parent=1 // pred_check
      _
    $region39: #{xey_transformer_layer.7} parent=1 // pred_check_branch
      %35 = sbr.rel (0) target = $region41
    $region40: #{xey_transformer_layer.7} parent=1 // pred_region
      _
    $region41: #{xey_transformer_layer.7} parent=1 // pred_fallthru
      _
    %v36 = vld [vmem:[%s0] sm:$0xff]
    %v37 = vld [vmem:[%s0 + $0x8] sm:$0xff]
    %v38 = vld [vmem:[%s0 + $0x10] sm:$0xff]
    %v39 = vld [vmem:[%s0 + $0x18] sm:$0xff]
    %v40 = vld [vmem:[%s0 + $0x20] sm:$0xff]
    %v41 = vld [vmem:[%s0 + $0x28] sm:$0xff]
    %v42 = vld [vmem:[%s0 + $0x30] sm:$0xff]
    %v43 = vld [vmem:[%s0 + $0x38] sm:$0xff]
    %v44 = vld [vmem:[%s0 + $0x40] sm:$0xff]
    %v45 = vld [vmem:[%s0 + $0x48] sm:$0xff]
    %v46 = vld [vmem:[%s0 + $0x50] sm:$0xff]
    %v47 = vld [vmem:[%s0 + $0x58] sm:$0xff]
    %v48 = vld [vmem:[%s0 + $0x60] sm:$0xff]
    %v49 = vld [vmem:[%s0 + $0x68] sm:$0xff]
    %v50 = vld [vmem:[%s0 + $0x70] sm:$0xff]
    %v51 = vld [vmem:[%s0 + $0x78] sm:$0xff]
    %v52 = vld [vmem:[%s1] sm:$0xff]
    %v53 = vld [vmem:[%s1 + $0x8] sm:$0xff]
    %v54 = vld [vmem:[%s1 + $0x10] sm:$0xff]
    %v55 = vld [vmem:[%s1 + $0x18] sm:$0xff]
    %v56 = vld [vmem:[%s1 + $0x20] sm:$0xff]
    %v57 = vld [vmem:[%s1 + $0x28] sm:$0xff]
    %v58 = vld [vmem:[%s1 + $0x30] sm:$0xff]
    %v59 = vld [vmem:[%s1 + $0x38] sm:$0xff]
    %v60 = vld [vmem:[%s1 + $0x40] sm:$0xff]
    %v61 = vld [vmem:[%s1 + $0x48] sm:$0xff]
    %v62 = vld [vmem:[%s1 + $0x50] sm:$0xff]
    %v63 = vld [vmem:[%s1 + $0x58] sm:$0xff]
    %v64 = vld [vmem:[%s1 + $0x60] sm:$0xff]
    %v65 = vld [vmem:[%s1 + $0x68] sm:$0xff]
    %v66 = vld [vmem:[%s1 + $0x70] sm:$0xff]
    %v67 = vld [vmem:[%s1 + $0x78] sm:$0xff]
    %v68 = vadd.f32 %v36, %v52
    %v69 = vadd.f32 %v37, %v53
    %v70 = vadd.f32 %v38, %v54
    %v71 = vadd.f32 %v39, %v55
    %v72 = vadd.f32 %v40, %v56
    %v73 = vadd.f32 %v41, %v57
    %v74 = vadd.f32 %v42, %v58
    %v75 = vadd.f32 %v43, %v59
    %v76 = vadd.f32 %v44, %v60
    %v77 = vadd.f32 %v45, %v61
    %v78 = vadd.f32 %v46, %v62
    %v79 = vadd.f32 %v47, %v63
    %v80 = vadd.f32 %v48, %v64
    %v81 = vadd.f32 %v49, %v65
    %v82 = vadd.f32 %v50, %v66
    %v83 = vadd.f32 %v51, %v67
    %v84 = vld [vmem:[%s2] sm:$0x1]
    %v85 = vld [vmem:[%s3] sm:$0x1]
    %vm86 = vcmask 130048
    %v87 = vsel %vm86, %v68, 0.0
    %88 = vadd.xlane.f32.xlu0 %v87
    %v89 = vpop.xlane.xlu0 %88
    %v90 = vsel %vm86, %v69, 0.0
    %91 = vadd.xlane.f32.xlu0 %v90
    %v92 = vpop.xlane.xlu0 %91
    %v93 = vsel %vm86, %v70, 0.0
    %94 = vadd.xlane.f32.xlu0 %v93
    %v95 = vpop.xlane.xlu0 %94
    %v96 = vsel %vm86, %v71, 0.0
    %97 = vadd.xlane.f32.xlu0 %v96
    %v98 = vpop.xlane.xlu0 %97
    %v99 = vsel %vm86, %v72, 0.0
    %100 = vadd.xlane.f32.xlu0 %v99
    %v101 = vpop.xlane.xlu0 %100
    %v102 = vsel %vm86, %v73, 0.0
    %103 = vadd.xlane.f32.xlu0 %v102
    %v104 = vpop.xlane.xlu0 %103
    %v105 = vsel %vm86, %v74, 0.0
    %106 = vadd.xlane.f32.xlu0 %v105
    %v107 = vpop.xlane.xlu0 %106
    %v108 = vsel %vm86, %v75, 0.0
    %109 = vadd.xlane.f32.xlu0 %v108
    %v110 = vpop.xlane.xlu0 %109
    %v111 = vsel %vm86, %v76, 0.0
    %112 = vadd.xlane.f32.xlu0 %v111
    %v113 = vpop.xlane.xlu0 %112
    %v114 = vsel %vm86, %v77, 0.0
    %115 = vadd.xlane.f32.xlu0 %v114
    %v116 = vpop.xlane.xlu0 %115
    %v117 = vsel %vm86, %v78, 0.0
    %118 = vadd.xlane.f32.xlu0 %v117
    %v119 = vpop.xlane.xlu0 %118
    %v120 = vsel %vm86, %v79, 0.0
    %121 = vadd.xlane.f32.xlu0 %v120
    %v122 = vpop.xlane.xlu0 %121
    %v123 = vsel %vm86, %v80, 0.0
    %124 = vadd.xlane.f32.xlu0 %v123
    %v125 = vpop.xlane.xlu0 %124
    %v126 = vsel %vm86, %v81, 0.0
    %127 = vadd.xlane.f32.xlu0 %v126
    %v128 = vpop.xlane.xlu0 %127
    %v129 = vsel %vm86, %v82, 0.0
    %130 = vadd.xlane.f32.xlu0 %v129
    %v131 = vpop.xlane.xlu0 %130
    %v132 = vsel %vm86, %v83, 0.0
    %133 = vadd.xlane.f32.xlu0 %v132
    %v134 = vpop.xlane.xlu0 %133
    %v135 = vrcp.pop 16.0
    %v136 = vmul.f32 %v89, %v135
    %v137 = vmul.f32 %v92, %v135
    %v138 = vmul.f32 %v95, %v135
    %v139 = vmul.f32 %v98, %v135
    %v140 = vmul.f32 %v101, %v135
    %v141 = vmul.f32 %v104, %v135
    %v142 = vmul.f32 %v107, %v135
    %v143 = vmul.f32 %v110, %v135
    %v144 = vmul.f32 %v113, %v135
    %v145 = vmul.f32 %v116, %v135
    %v146 = vmul.f32 %v119, %v135
    %v147 = vmul.f32 %v122, %v135
    %v148 = vmul.f32 %v125, %v135
    %v149 = vmul.f32 %v128, %v135
    %v150 = vmul.f32 %v131, %v135
    %v151 = vmul.f32 %v134, %v135
    %v152 = vsub.f32 %v68, %v136
    %v153 = vsub.f32 %v69, %v137
    %v154 = vsub.f32 %v70, %v138
    %v155 = vsub.f32 %v71, %v139
    %v156 = vsub.f32 %v72, %v140
    %v157 = vsub.f32 %v73, %v141
    %v158 = vsub.f32 %v74, %v142
    %v159 = vsub.f32 %v75, %v143
    %v160 = vsub.f32 %v76, %v144
    %v161 = vsub.f32 %v77, %v145
    %v162 = vsub.f32 %v78, %v146
    %v163 = vsub.f32 %v79, %v147
    %v164 = vsub.f32 %v80, %v148
    %v165 = vsub.f32 %v81, %v149
    %v166 = vsub.f32 %v82, %v150
    %v167 = vsub.f32 %v83, %v151
    %v168 = vmul.f32 %v152, %v152
    %v169 = vmul.f32 %v153, %v153
    %v170 = vmul.f32 %v154, %v154
    %v171 = vmul.f32 %v155, %v155
    %v172 = vmul.f32 %v156, %v156
    %v173 = vmul.f32 %v157, %v157
    %v174 = vmul.f32 %v158, %v158
    %v175 = vmul.f32 %v159, %v159
    %v176 = vmul.f32 %v160, %v160
    %v177 = vmul.f32 %v161, %v161
    %v178 = vmul.f32 %v162, %v162
    %v179 = vmul.f32 %v163, %v163
    %v180 = vmul.f32 %v164, %v164
    %v181 = vmul.f32 %v165, %v165
    %v182 = vmul.f32 %v166, %v166
    %v183 = vmul.f32 %v167, %v167
    %v184 = vsel %vm86, %v168, 0.0
    %185 = vadd.xlane.f32.xlu0 %v184
    %v186 = vpop.xlane.xlu0 %185
    %v187 = vsel %vm86, %v169, 0.0
    %188 = vadd.xlane.f32.xlu0 %v187
    %v189 = vpop.xlane.xlu0 %188
    %v190 = vsel %vm86, %v170, 0.0
    %191 = vadd.xlane.f32.xlu0 %v190
    %v192 = vpop.xlane.xlu0 %191
    %v193 = vsel %vm86, %v171, 0.0
    %194 = vadd.xlane.f32.xlu0 %v193
    %v195 = vpop.xlane.xlu0 %194
    %v196 = vsel %vm86, %v172, 0.0
    %197 = vadd.xlane.f32.xlu0 %v196
    %v198 = vpop.xlane.xlu0 %197
    %v199 = vsel %vm86, %v173, 0.0
    %200 = vadd.xlane.f32.xlu0 %v199
    %v201 = vpop.xlane.xlu0 %200
    %v202 = vsel %vm86, %v174, 0.0
    %203 = vadd.xlane.f32.xlu0 %v202
    %v204 = vpop.xlane.xlu0 %203
    %v205 = vsel %vm86, %v175, 0.0
    %206 = vadd.xlane.f32.xlu0 %v205
    %v207 = vpop.xlane.xlu0 %206
    %v208 = vsel %vm86, %v176, 0.0
    %209 = vadd.xlane.f32.xlu0 %v208
    %v210 = vpop.xlane.xlu0 %209
    %v211 = vsel %vm86, %v177, 0.0
    %212 = vadd.xlane.f32.xlu0 %v211
    %v213 = vpop.xlane.xlu0 %212
    %v214 = vsel %vm86, %v178, 0.0
    %215 = vadd.xlane.f32.xlu0 %v214
    %v216 = vpop.xlane.xlu0 %215
    %v217 = vsel %vm86, %v179, 0.0
    %218 = vadd.xlane.f32.xlu0 %v217
    %v219 = vpop.xlane.xlu0 %218
    %v220 = vsel %vm86, %v180, 0.0
    %221 = vadd.xlane.f32.xlu0 %v220
    %v222 = vpop.xlane.xlu0 %221
    %v223 = vsel %vm86, %v181, 0.0
    %224 = vadd.xlane.f32.xlu0 %v223
    %v225 = vpop.xlane.xlu0 %224
    %v226 = vsel %vm86, %v182, 0.0
    %227 = vadd.xlane.f32.xlu0 %v226
    %v228 = vpop.xlane.xlu0 %227
    %v229 = vsel %vm86, %v183, 0.0
    %230 = vadd.xlane.f32.xlu0 %v229
    %v231 = vpop.xlane.xlu0 %230
    %v232 = vmul.f32 %v186, %v135
    %v233 = vmul.f32 %v189, %v135
    %v234 = vmul.f32 %v192, %v135
    %v235 = vmul.f32 %v195, %v135
    %v236 = vmul.f32 %v198, %v135
    %v237 = vmul.f32 %v201, %v135
    %v238 = vmul.f32 %v204, %v135
    %v239 = vmul.f32 %v207, %v135
    %v240 = vmul.f32 %v210, %v135
    %v241 = vmul.f32 %v213, %v135
    %v242 = vmul.f32 %v216, %v135
    %v243 = vmul.f32 %v219, %v135
    %v244 = vmul.f32 %v222, %v135
    %v245 = vmul.f32 %v225, %v135
    %v246 = vmul.f32 %v228, %v135
    %v247 = vmul.f32 %v231, %v135
    %v248 = vadd.f32 %v232, 1e-05
    %v249 = vadd.f32 %v233, 1e-05
    %v250 = vadd.f32 %v234, 1e-05
    %v251 = vadd.f32 %v235, 1e-05
    %v252 = vadd.f32 %v236, 1e-05
    %v253 = vadd.f32 %v237, 1e-05
    %v254 = vadd.f32 %v238, 1e-05
    %v255 = vadd.f32 %v239, 1e-05
    %v256 = vadd.f32 %v240, 1e-05
    %v257 = vadd.f32 %v241, 1e-05
    %v258 = vadd.f32 %v242, 1e-05
    %v259 = vadd.f32 %v243, 1e-05
    %v260 = vadd.f32 %v244, 1e-05
    %v261 = vadd.f32 %v245, 1e-05
    %v262 = vadd.f32 %v246, 1e-05
    %v263 = vadd.f32 %v247, 1e-05
    %v264 = vrsqrt.pop %v248
    %v265 = vrsqrt.pop %v249
    %v266 = vrsqrt.pop %v250
    %v267 = vrsqrt.pop %v251
    %v268 = vrsqrt.pop %v252
    %v269 = vrsqrt.pop %v253
    %v270 = vrsqrt.pop %v254
    %v271 = vrsqrt.pop %v255
    %v272 = vrsqrt.pop %v256
    %v273 = vrsqrt.pop %v257
    %v274 = vrsqrt.pop %v258
    %v275 = vrsqrt.pop %v259
    %v276 = vrsqrt.pop %v260
    %v277 = vrsqrt.pop %v261
    %v278 = vrsqrt.pop %v262
    %v279 = vrsqrt.pop %v263
    %v280 = vmul.f32 %v152, %v264
    %v281 = vmul.f32 %v153, %v265
    %v282 = vmul.f32 %v154, %v266
    %v283 = vmul.f32 %v155, %v267
    %v284 = vmul.f32 %v156, %v268
    %v285 = vmul.f32 %v157, %v269
    %v286 = vmul.f32 %v158, %v270
    %v287 = vmul.f32 %v159, %v271
    %v288 = vmul.f32 %v160, %v272
    %v289 = vmul.f32 %v161, %v273
    %v290 = vmul.f32 %v162, %v274
    %v291 = vmul.f32 %v163, %v275
    %v292 = vmul.f32 %v164, %v276
    %v293 = vmul.f32 %v165, %v277
    %v294 = vmul.f32 %v166, %v278
    %v295 = vmul.f32 %v167, %v279
    %v297 = vlaneseq
    %v298 = vshrl.u32 %v297, 7
    %v299 = vsub.s32 0, %v298
    %v300 = vrot.slane %v84, %v299
    %v302 = vmul.f32 %v280, %v300
    %v303 = vmul.f32 %v281, %v300
    %v304 = vmul.f32 %v282, %v300
    %v305 = vmul.f32 %v283, %v300
    %v306 = vmul.f32 %v284, %v300
    %v307 = vmul.f32 %v285, %v300
    %v308 = vmul.f32 %v286, %v300
    %v309 = vmul.f32 %v287, %v300
    %v310 = vmul.f32 %v288, %v300
    %v311 = vmul.f32 %v289, %v300
    %v312 = vmul.f32 %v290, %v300
    %v313 = vmul.f32 %v291, %v300
    %v314 = vmul.f32 %v292, %v300
    %v315 = vmul.f32 %v293, %v300
    %v316 = vmul.f32 %v294, %v300
    %v317 = vmul.f32 %v295, %v300
    %v319 = vlaneseq
    %v320 = vshrl.u32 %v319, 7
    %v321 = vsub.s32 0, %v320
    %v322 = vrot.slane %v85, %v321
    %v324 = vadd.f32 %v302, %v322
    %v325 = vadd.f32 %v303, %v322
    %v326 = vadd.f32 %v304, %v322
    %v327 = vadd.f32 %v305, %v322
    %v328 = vadd.f32 %v306, %v322
    %v329 = vadd.f32 %v307, %v322
    %v330 = vadd.f32 %v308, %v322
    %v331 = vadd.f32 %v309, %v322
    %v332 = vadd.f32 %v310, %v322
    %v333 = vadd.f32 %v311, %v322
    %v334 = vadd.f32 %v312, %v322
    %v335 = vadd.f32 %v313, %v322
    %v336 = vadd.f32 %v314, %v322
    %v337 = vadd.f32 %v315, %v322
    %v338 = vadd.f32 %v316, %v322
    %v339 = vadd.f32 %v317, %v322
    %v340 = vld [vmem:[%s4] sm:$0xff]
    %v341 = vld [vmem:[%s4 + $0x8] sm:$0xff]
    %v342 = vld [vmem:[%s5] sm:$0x1]
    %v344 = vlaneseq
    %v345 = vshrl.u32 %v344, 7
    %v346 = vsub.s32 0, %v345
    %v347 = vrot.slane %v342, %v346
    %v350 = vsel %vm86, %v324, 0
    %v353 = vsel %vm86, %v325, 0
    %v356 = vsel %vm86, %v326, 0
    %v359 = vsel %vm86, %v327, 0
    %v362 = vsel %vm86, %v328, 0
    %v365 = vsel %vm86, %v329, 0
    %v368 = vsel %vm86, %v330, 0
    %v371 = vsel %vm86, %v331, 0
    %v374 = vsel %vm86, %v332, 0
    %v377 = vsel %vm86, %v333, 0
    %v380 = vsel %vm86, %v334, 0
    %v383 = vsel %vm86, %v335, 0
    %v386 = vsel %vm86, %v336, 0
    %v389 = vsel %vm86, %v337, 0
    %v392 = vsel %vm86, %v338, 0
    %v395 = vsel %vm86, %v339, 0
    %397 = vmatprep.subr.mxu0 0.0
    %398 = vmatpush1.msra.mxu0 %v340
    %399 = vmatprep.subr.mxu0 0.0
    %400 = vmatpush1.msra.mxu0 %v341
    %401 = vmatprep.subr.mxu0 0.0
    %402 = vmatpush1.msra.mxu0 0.0
    %403 = vmatprep.subr.mxu0 0.0
    %404 = vmatpush1.msra.mxu0 0.0
    %405 = vmatprep.subr.mxu0 0.0
    %406 = vmatpush1.msra.mxu0 0.0
    %407 = vmatprep.subr.mxu0 0.0
    %408 = vmatpush1.msra.mxu0 0.0
    %409 = vmatprep.subr.mxu0 0.0
    %410 = vmatpush1.msra.mxu0 0.0
    %411 = vmatprep.subr.mxu0 0.0
    %412 = vmatpush1.msra.mxu0 0.0
    %413 = vmatprep.subr.mxu0 0.0
    %414 = vmatpush1.msra.mxu0 0.0
    %415 = vmatprep.subr.mxu0 0.0
    %416 = vmatpush1.msra.mxu0 0.0
    %417 = vmatprep.subr.mxu0 0.0
    %418 = vmatpush1.msra.mxu0 0.0
    %419 = vmatprep.subr.mxu0 0.0
    %420 = vmatpush1.msra.mxu0 0.0
    %421 = vmatprep.subr.mxu0 0.0
    %422 = vmatpush1.msra.mxu0 0.0
    %423 = vmatprep.subr.mxu0 0.0
    %424 = vmatpush1.msra.mxu0 0.0
    %425 = vmatprep.subr.mxu0 0.0
    %426 = vmatpush1.msra.mxu0 0.0
    %427 = vmatprep.subr.mxu0 0.0
    %428 = vmatpush1.msra.mxu0 0.0
    %429 = vmatprep.subr.mxu0 0.0
    %430 = vmatpush1.msra.mxu0 0.0
    %431 = vmatprep.subr.mxu0 0.0
    %432 = vmatpush1.msra.mxu0 0.0
    %433 = vmatprep.subr.mxu0 0.0
    %434 = vmatpush1.msra.mxu0 0.0
    %435 = vmatprep.subr.mxu0 0.0
    %436 = vmatpush1.msra.mxu0 0.0
    %437 = vmatprep.subr.mxu0 0.0
    %438 = vmatpush1.msra.mxu0 0.0
    %439 = vmatprep.subr.mxu0 0.0
    %440 = vmatpush1.msra.mxu0 0.0
    %441 = vmatprep.subr.mxu0 0.0
    %442 = vmatpush1.msra.mxu0 0.0
    %443 = vmatprep.subr.mxu0 0.0
    %444 = vmatpush1.msra.mxu0 0.0
    %445 = vmatprep.subr.mxu0 0.0
    %446 = vmatpush1.msra.mxu0 0.0
    %447 = vmatprep.subr.mxu0 0.0
    %448 = vmatpush1.msra.mxu0 0.0
    %449 = vmatprep.subr.mxu0 0.0
    %450 = vmatpush1.msra.mxu0 0.0
    %451 = vmatprep.subr.mxu0 0.0
    %452 = vmatpush1.msra.mxu0 0.0
    %453 = vmatprep.subr.mxu0 0.0
    %454 = vmatpush1.msra.mxu0 0.0
    %455 = vmatprep.subr.mxu0 0.0
    %456 = vmatpush1.msra.mxu0 0.0
    %457 = vmatprep.subr.mxu0 0.0
    %458 = vmatpush1.msra.mxu0 0.0
    %459 = vmatprep.subr.mxu0 0.0
    %460 = vmatpush1.msra.mxu0 0.0
    %461 = vmatprep.mubr.f32.mxu0 0.0
    %462 = vmatmul.mubr.f32.gmra.mrb[0].mxu0 %v350
    %v463 = vpop.f32.mrb[0].mxu0
    %v464 = vadd.f32 %v347, %v463
    %v465 = vpop.f32.mrb[0].mxu0
    %466 = vmatprep.mubr.f32.mxu0 0.0
    %467 = vmatmul.mubr.f32.gmra.mrb[0].mxu0 %v353
    %v468 = vpop.f32.mrb[0].mxu0
    %v469 = vadd.f32 %v347, %v468
    %v470 = vpop.f32.mrb[0].mxu0
    %471 = vmatprep.mubr.f32.mxu0 0.0
    %472 = vmatmul.mubr.f32.gmra.mrb[0].mxu0 %v356
    %v473 = vpop.f32.mrb[0].mxu0
    %v474 = vadd.f32 %v347, %v473
    %v475 = vpop.f32.mrb[0].mxu0
    %476 = vmatprep.mubr.f32.mxu0 0.0
    %477 = vmatmul.mubr.f32.gmra.mrb[0].mxu0 %v359
    %v478 = vpop.f32.mrb[0].mxu0
    %v479 = vadd.f32 %v347, %v478
    %v480 = vpop.f32.mrb[0].mxu0
    %481 = vmatprep.mubr.f32.mxu0 0.0
    %482 = vmatmul.mubr.f32.gmra.mrb[0].mxu0 %v362
    %v483 = vpop.f32.mrb[0].mxu0
    %v484 = vadd.f32 %v347, %v483
    %v485 = vpop.f32.mrb[0].mxu0
    %486 = vmatprep.mubr.f32.mxu0 0.0
    %487 = vmatmul.mubr.f32.gmra.mrb[0].mxu0 %v365
    %v488 = vpop.f32.mrb[0].mxu0
    %v489 = vadd.f32 %v347, %v488
    %v490 = vpop.f32.mrb[0].mxu0
    %491 = vmatprep.mubr.f32.mxu0 0.0
    %492 = vmatmul.mubr.f32.gmra.mrb[0].mxu0 %v368
    %v493 = vpop.f32.mrb[0].mxu0
    %v494 = vadd.f32 %v347, %v493
    %v495 = vpop.f32.mrb[0].mxu0
    %496 = vmatprep.mubr.f32.mxu0 0.0
    %497 = vmatmul.mubr.f32.gmra.mrb[0].mxu0 %v371
    %v498 = vpop.f32.mrb[0].mxu0
    %v499 = vadd.f32 %v347, %v498
    %v500 = vpop.f32.mrb[0].mxu0
    %501 = vmatprep.mubr.f32.mxu0 0.0
    %502 = vmatmul.mubr.f32.gmra.mrb[0].mxu0 %v374
    %v503 = vpop.f32.mrb[0].mxu0
    %v504 = vadd.f32 %v347, %v503
    %v505 = vpop.f32.mrb[0].mxu0
    %506 = vmatprep.mubr.f32.mxu0 0.0
    %507 = vmatmul.mubr.f32.gmra.mrb[0].mxu0 %v377
    %v508 = vpop.f32.mrb[0].mxu0
    %v509 = vadd.f32 %v347, %v508
    %v510 = vpop.f32.mrb[0].mxu0
    %511 = vmatprep.mubr.f32.mxu0 0.0
    %512 = vmatmul.mubr.f32.gmra.mrb[0].mxu0 %v380
    %v513 = vpop.f32.mrb[0].mxu0
    %v514 = vadd.f32 %v347, %v513
    %v515 = vpop.f32.mrb[0].mxu0
    %516 = vmatprep.mubr.f32.mxu0 0.0
    %517 = vmatmul.mubr.f32.gmra.mrb[0].mxu0 %v383
    %v518 = vpop.f32.mrb[0].mxu0
    %v519 = vadd.f32 %v347, %v518
    %v520 = vpop.f32.mrb[0].mxu0
    %521 = vmatprep.mubr.f32.mxu0 0.0
    %522 = vmatmul.mubr.f32.gmra.mrb[0].mxu0 %v386
    %v523 = vpop.f32.mrb[0].mxu0
    %v524 = vadd.f32 %v347, %v523
    %v525 = vpop.f32.mrb[0].mxu0
    %526 = vmatprep.mubr.f32.mxu0 0.0
    %527 = vmatmul.mubr.f32.gmra.mrb[0].mxu0 %v389
    %v528 = vpop.f32.mrb[0].mxu0
    %v529 = vadd.f32 %v347, %v528
    %v530 = vpop.f32.mrb[0].mxu0
    %531 = vmatprep.mubr.f32.mxu0 0.0
    %532 = vmatmul.mubr.f32.gmra.mrb[0].mxu0 %v392
    %v533 = vpop.f32.mrb[0].mxu0
    %v534 = vadd.f32 %v347, %v533
    %v535 = vpop.f32.mrb[0].mxu0
    %536 = vmatprep.mubr.f32.mxu0 0.0
    %537 = vmatmul.mubr.f32.gmra.mrb[0].mxu0 %v395
    %v538 = vpop.f32.mrb[0].mxu0
    %v539 = vadd.f32 %v347, %v538
    %v540 = vpop.f32.mrb[0].mxu0
    %541 = vdwg.mxu0
    %v542 = vmax.f32 %v464, 0.0
    %v543 = vmax.f32 %v469, 0.0
    %v544 = vmax.f32 %v474, 0.0
    %v545 = vmax.f32 %v479, 0.0
    %v546 = vmax.f32 %v484, 0.0
    %v547 = vmax.f32 %v489, 0.0
    %v548 = vmax.f32 %v494, 0.0
    %v549 = vmax.f32 %v499, 0.0
    %v550 = vmax.f32 %v504, 0.0
    %v551 = vmax.f32 %v509, 0.0
    %v552 = vmax.f32 %v514, 0.0
    %v553 = vmax.f32 %v519, 0.0
    %v554 = vmax.f32 %v524, 0.0
    %v555 = vmax.f32 %v529, 0.0
    %v556 = vmax.f32 %v534, 0.0
    %v557 = vmax.f32 %v539, 0.0
    %v558 = vld [vmem:[%s6] sm:$0xff]
    %v559 = vld [vmem:[%s6 + $0x8] sm:$0xff]
    %v560 = vld [vmem:[%s6 + $0x10] sm:$0xff]
    %v561 = vld [vmem:[%s6 + $0x18] sm:$0xff]
    %v562 = vld [vmem:[%s7] sm:$0x1]
    %v564 = vlaneseq
    %v565 = vshrl.u32 %v564, 7
    %v566 = vsub.s32 0, %v565
    %v567 = vrot.slane %v562, %v566
    %vm569 = vcmask 261120
    %v571 = vsel %vm569, %v542, 0
    %v574 = vsel %vm569, %v543, 0
    %v577 = vsel %vm569, %v544, 0
    %v580 = vsel %vm569, %v545, 0
    %v583 = vsel %vm569, %v546, 0
    %v586 = vsel %vm569, %v547, 0
    %v589 = vsel %vm569, %v548, 0
    %v592 = vsel %vm569, %v549, 0
    %v595 = vsel %vm569, %v550, 0
    %v598 = vsel %vm569, %v551, 0
    %v601 = vsel %vm569, %v552, 0
    %v604 = vsel %vm569, %v553, 0
    %v607 = vsel %vm569, %v554, 0
    %v610 = vsel %vm569, %v555, 0
    %v613 = vsel %vm569, %v556, 0
    %v616 = vsel %vm569, %v557, 0
    %618 = vmatprep.subr.mxu0 0.0
    %619 = vmatpush1.msra.mxu0 %v558
    %620 = vmatprep.subr.mxu0 0.0
    %621 = vmatpush1.msra.mxu0 %v559
    %622 = vmatprep.subr.mxu0 0.0
    %623 = vmatpush1.msra.mxu0 %v560
    %624 = vmatprep.subr.mxu0 0.0
    %625 = vmatpush1.msra.mxu0 %v561
    %626 = vmatprep.subr.mxu0 0.0
    %627 = vmatpush1.msra.mxu0 0.0
    %628 = vmatprep.subr.mxu0 0.0
    %629 = vmatpush1.msra.mxu0 0.0
    %630 = vmatprep.subr.mxu0 0.0
    %631 = vmatpush1.msra.mxu0 0.0
    %632 = vmatprep.subr.mxu0 0.0
    %633 = vmatpush1.msra.mxu0 0.0
    %634 = vmatprep.subr.mxu0 0.0
    %635 = vmatpush1.msra.mxu0 0.0
    %636 = vmatprep.subr.mxu0 0.0
    %637 = vmatpush1.msra.mxu0 0.0
    %638 = vmatprep.subr.mxu0 0.0
    %639 = vmatpush1.msra.mxu0 0.0
    %640 = vmatprep.subr.mxu0 0.0
    %641 = vmatpush1.msra.mxu0 0.0
    %642 = vmatprep.subr.mxu0 0.0
    %643 = vmatpush1.msra.mxu0 0.0
    %644 = vmatprep.subr.mxu0 0.0
    %645 = vmatpush1.msra.mxu0 0.0
    %646 = vmatprep.subr.mxu0 0.0
    %647 = vmatpush1.msra.mxu0 0.0
    %648 = vmatprep.subr.mxu0 0.0
    %649 = vmatpush1.msra.mxu0 0.0
    %650 = vmatprep.subr.mxu0 0.0
    %651 = vmatpush1.msra.mxu0 0.0
    %652 = vmatprep.subr.mxu0 0.0
    %653 = vmatpush1.msra.mxu0 0.0
    %654 = vmatprep.subr.mxu0 0.0
    %655 = vmatpush1.msra.mxu0 0.0
    %656 = vmatprep.subr.mxu0 0.0
    %657 = vmatpush1.msra.mxu0 0.0
    %658 = vmatprep.subr.mxu0 0.0
    %659 = vmatpush1.msra.mxu0 0.0
    %660 = vmatprep.subr.mxu0 0.0
    %661 = vmatpush1.msra.mxu0 0.0
    %662 = vmatprep.subr.mxu0 0.0
    %663 = vmatpush1.msra.mxu0 0.0
    %664 = vmatprep.subr.mxu0 0.0
    %665 = vmatpush1.msra.mxu0 0.0
    %666 = vmatprep.subr.mxu0 0.0
    %667 = vmatpush1.msra.mxu0 0.0
    %668 = vmatprep.subr.mxu0 0.0
    %669 = vmatpush1.msra.mxu0 0.0
    %670 = vmatprep.subr.mxu0 0.0
    %671 = vmatpush1.msra.mxu0 0.0
    %672 = vmatprep.subr.mxu0 0.0
    %673 = vmatpush1.msra.mxu0 0.0
    %674 = vmatprep.subr.mxu0 0.0
    %675 = vmatpush1.msra.mxu0 0.0
    %676 = vmatprep.subr.mxu0 0.0
    %677 = vmatpush1.msra.mxu0 0.0
    %678 = vmatprep.subr.mxu0 0.0
    %679 = vmatpush1.msra.mxu0 0.0
    %680 = vmatprep.subr.mxu0 0.0
    %681 = vmatpush1.msra.mxu0 0.0
    %682 = vmatprep.mubr.f32.mxu0 0.0
    %683 = vmatmul.mubr.f32.gmra.mrb[0].mxu0 %v571
    %v684 = vpop.f32.mrb[0].mxu0
    %v685 = vadd.f32 %v567, %v684
    %v686 = vpop.f32.mrb[0].mxu0
    %687 = vmatprep.mubr.f32.mxu0 0.0
    %688 = vmatmul.mubr.f32.gmra.mrb[0].mxu0 %v574
    %v689 = vpop.f32.mrb[0].mxu0
    %v690 = vadd.f32 %v567, %v689
    %v691 = vpop.f32.mrb[0].mxu0
    %692 = vmatprep.mubr.f32.mxu0 0.0
    %693 = vmatmul.mubr.f32.gmra.mrb[0].mxu0 %v577
    %v694 = vpop.f32.mrb[0].mxu0
    %v695 = vadd.f32 %v567, %v694
    %v696 = vpop.f32.mrb[0].mxu0
    %697 = vmatprep.mubr.f32.mxu0 0.0
    %698 = vmatmul.mubr.f32.gmra.mrb[0].mxu0 %v580
    %v699 = vpop.f32.mrb[0].mxu0
    %v700 = vadd.f32 %v567, %v699
    %v701 = vpop.f32.mrb[0].mxu0
    %702 = vmatprep.mubr.f32.mxu0 0.0
    %703 = vmatmul.mubr.f32.gmra.mrb[0].mxu0 %v583
    %v704 = vpop.f32.mrb[0].mxu0
    %v705 = vadd.f32 %v567, %v704
    %v706 = vpop.f32.mrb[0].mxu0
    %707 = vmatprep.mubr.f32.mxu0 0.0
    %708 = vmatmul.mubr.f32.gmra.mrb[0].mxu0 %v586
    %v709 = vpop.f32.mrb[0].mxu0
    %v710 = vadd.f32 %v567, %v709
    %v711 = vpop.f32.mrb[0].mxu0
    %712 = vmatprep.mubr.f32.mxu0 0.0
    %713 = vmatmul.mubr.f32.gmra.mrb[0].mxu0 %v589
    %v714 = vpop.f32.mrb[0].mxu0
    %v715 = vadd.f32 %v567, %v714
    %v716 = vpop.f32.mrb[0].mxu0
    %717 = vmatprep.mubr.f32.mxu0 0.0
    %718 = vmatmul.mubr.f32.gmra.mrb[0].mxu0 %v592
    %v719 = vpop.f32.mrb[0].mxu0
    %v720 = vadd.f32 %v567, %v719
    %v721 = vpop.f32.mrb[0].mxu0
    %722 = vmatprep.mubr.f32.mxu0 0.0
    %723 = vmatmul.mubr.f32.gmra.mrb[0].mxu0 %v595
    %v724 = vpop.f32.mrb[0].mxu0
    %v725 = vadd.f32 %v567, %v724
    %v726 = vpop.f32.mrb[0].mxu0
    %727 = vmatprep.mubr.f32.mxu0 0.0
    %728 = vmatmul.mubr.f32.gmra.mrb[0].mxu0 %v598
    %v729 = vpop.f32.mrb[0].mxu0
    %v730 = vadd.f32 %v567, %v729
    %v731 = vpop.f32.mrb[0].mxu0
    %732 = vmatprep.mubr.f32.mxu0 0.0
    %733 = vmatmul.mubr.f32.gmra.mrb[0].mxu0 %v601
    %v734 = vpop.f32.mrb[0].mxu0
    %v735 = vadd.f32 %v567, %v734
    %v736 = vpop.f32.mrb[0].mxu0
    %737 = vmatprep.mubr.f32.mxu0 0.0
    %738 = vmatmul.mubr.f32.gmra.mrb[0].mxu0 %v604
    %v739 = vpop.f32.mrb[0].mxu0
    %v740 = vadd.f32 %v567, %v739
    %v741 = vpop.f32.mrb[0].mxu0
    %742 = vmatprep.mubr.f32.mxu0 0.0
    %743 = vmatmul.mubr.f32.gmra.mrb[0].mxu0 %v607
    %v744 = vpop.f32.mrb[0].mxu0
    %v745 = vadd.f32 %v567, %v744
    %v746 = vpop.f32.mrb[0].mxu0
    %747 = vmatprep.mubr.f32.mxu0 0.0
    %748 = vmatmul.mubr.f32.gmra.mrb[0].mxu0 %v610
    %v749 = vpop.f32.mrb[0].mxu0
    %v750 = vadd.f32 %v567, %v749
    %v751 = vpop.f32.mrb[0].mxu0
    %752 = vmatprep.mubr.f32.mxu0 0.0
    %753 = vmatmul.mubr.f32.gmra.mrb[0].mxu0 %v613
    %v754 = vpop.f32.mrb[0].mxu0
    %v755 = vadd.f32 %v567, %v754
    %v756 = vpop.f32.mrb[0].mxu0
    %757 = vmatprep.mubr.f32.mxu0 0.0
    %758 = vmatmul.mubr.f32.gmra.mrb[0].mxu0 %v616
    %v759 = vpop.f32.mrb[0].mxu0
    %v760 = vadd.f32 %v567, %v759
    %v761 = vpop.f32.mrb[0].mxu0
    %762 = vdwg.mxu0
    %v763 = vadd.f32 %v324, %v685
    %v764 = vadd.f32 %v325, %v690
    %v765 = vadd.f32 %v326, %v695
    %v766 = vadd.f32 %v327, %v700
    %v767 = vadd.f32 %v328, %v705
    %v768 = vadd.f32 %v329, %v710
    %v769 = vadd.f32 %v330, %v715
    %v770 = vadd.f32 %v331, %v720
    %v771 = vadd.f32 %v332, %v725
    %v772 = vadd.f32 %v333, %v730
    %v773 = vadd.f32 %v334, %v735
    %v774 = vadd.f32 %v335, %v740
    %v775 = vadd.f32 %v336, %v745
    %v776 = vadd.f32 %v337, %v750
    %v777 = vadd.f32 %v338, %v755
    %v778 = vadd.f32 %v339, %v760
    %v779 = vld [vmem:[%s8] sm:$0x1]
    %v780 = vld [vmem:[%s9] sm:$0x1]
    %v781 = vsel %vm86, %v763, 0.0
    %782 = vadd.xlane.f32.xlu0 %v781
    %v783 = vpop.xlane.xlu0 %782
    %v784 = vsel %vm86, %v764, 0.0
    %785 = vadd.xlane.f32.xlu0 %v784
    %v786 = vpop.xlane.xlu0 %785
    %v787 = vsel %vm86, %v765, 0.0
    %788 = vadd.xlane.f32.xlu0 %v787
    %v789 = vpop.xlane.xlu0 %788
    %v790 = vsel %vm86, %v766, 0.0
    %791 = vadd.xlane.f32.xlu0 %v790
    %v792 = vpop.xlane.xlu0 %791
    %v793 = vsel %vm86, %v767, 0.0
    %794 = vadd.xlane.f32.xlu0 %v793
    %v795 = vpop.xlane.xlu0 %794
    %v796 = vsel %vm86, %v768, 0.0
    %797 = vadd.xlane.f32.xlu0 %v796
    %v798 = vpop.xlane.xlu0 %797
    %v799 = vsel %vm86, %v769, 0.0
    %800 = vadd.xlane.f32.xlu0 %v799
    %v801 = vpop.xlane.xlu0 %800
    %v802 = vsel %vm86, %v770, 0.0
    %803 = vadd.xlane.f32.xlu0 %v802
    %v804 = vpop.xlane.xlu0 %803
    %v805 = vsel %vm86, %v771, 0.0
    %806 = vadd.xlane.f32.xlu0 %v805
    %v807 = vpop.xlane.xlu0 %806
    %v808 = vsel %vm86, %v772, 0.0
    %809 = vadd.xlane.f32.xlu0 %v808
    %v810 = vpop.xlane.xlu0 %809
    %v811 = vsel %vm86, %v773, 0.0
    %812 = vadd.xlane.f32.xlu0 %v811
    %v813 = vpop.xlane.xlu0 %812
    %v814 = vsel %vm86, %v774, 0.0
    %815 = vadd.xlane.f32.xlu0 %v814
    %v816 = vpop.xlane.xlu0 %815
    %v817 = vsel %vm86, %v775, 0.0
    %818 = vadd.xlane.f32.xlu0 %v817
    %v819 = vpop.xlane.xlu0 %818
    %v820 = vsel %vm86, %v776, 0.0
    %821 = vadd.xlane.f32.xlu0 %v820
    %v822 = vpop.xlane.xlu0 %821
    %v823 = vsel %vm86, %v777, 0.0
    %824 = vadd.xlane.f32.xlu0 %v823
    %v825 = vpop.xlane.xlu0 %824
    %v826 = vsel %vm86, %v778, 0.0
    %827 = vadd.xlane.f32.xlu0 %v826
    %v828 = vpop.xlane.xlu0 %827
    %v829 = vmul.f32 %v783, %v135
    %v830 = vmul.f32 %v786, %v135
    %v831 = vmul.f32 %v789, %v135
    %v832 = vmul.f32 %v792, %v135
    %v833 = vmul.f32 %v795, %v135
    %v834 = vmul.f32 %v798, %v135
    %v835 = vmul.f32 %v801, %v135
    %v836 = vmul.f32 %v804, %v135
    %v837 = vmul.f32 %v807, %v135
    %v838 = vmul.f32 %v810, %v135
    %v839 = vmul.f32 %v813, %v135
    %v840 = vmul.f32 %v816, %v135
    %v841 = vmul.f32 %v819, %v135
    %v842 = vmul.f32 %v822, %v135
    %v843 = vmul.f32 %v825, %v135
    %v844 = vmul.f32 %v828, %v135
    %v845 = vsub.f32 %v763, %v829
    %v846 = vsub.f32 %v764, %v830
    %v847 = vsub.f32 %v765, %v831
    %v848 = vsub.f32 %v766, %v832
    %v849 = vsub.f32 %v767, %v833
    %v850 = vsub.f32 %v768, %v834
    %v851 = vsub.f32 %v769, %v835
    %v852 = vsub.f32 %v770, %v836
    %v853 = vsub.f32 %v771, %v837
    %v854 = vsub.f32 %v772, %v838
    %v855 = vsub.f32 %v773, %v839
    %v856 = vsub.f32 %v774, %v840
    %v857 = vsub.f32 %v775, %v841
    %v858 = vsub.f32 %v776, %v842
    %v859 = vsub.f32 %v777, %v843
    %v860 = vsub.f32 %v778, %v844
    %v861 = vmul.f32 %v845, %v845
    %v862 = vmul.f32 %v846, %v846
    %v863 = vmul.f32 %v847, %v847
    %v864 = vmul.f32 %v848, %v848
    %v865 = vmul.f32 %v849, %v849
    %v866 = vmul.f32 %v850, %v850
    %v867 = vmul.f32 %v851, %v851
    %v868 = vmul.f32 %v852, %v852
    %v869 = vmul.f32 %v853, %v853
    %v870 = vmul.f32 %v854, %v854
    %v871 = vmul.f32 %v855, %v855
    %v872 = vmul.f32 %v856, %v856
    %v873 = vmul.f32 %v857, %v857
    %v874 = vmul.f32 %v858, %v858
    %v875 = vmul.f32 %v859, %v859
    %v876 = vmul.f32 %v860, %v860
    %v877 = vsel %vm86, %v861, 0.0
    %878 = vadd.xlane.f32.xlu0 %v877
    %v879 = vpop.xlane.xlu0 %878
    %v880 = vsel %vm86, %v862, 0.0
    %881 = vadd.xlane.f32.xlu0 %v880
    %v882 = vpop.xlane.xlu0 %881
    %v883 = vsel %vm86, %v863, 0.0
    %884 = vadd.xlane.f32.xlu0 %v883
    %v885 = vpop.xlane.xlu0 %884
    %v886 = vsel %vm86, %v864, 0.0
    %887 = vadd.xlane.f32.xlu0 %v886
    %v888 = vpop.xlane.xlu0 %887
    %v889 = vsel %vm86, %v865, 0.0
    %890 = vadd.xlane.f32.xlu0 %v889
    %v891 = vpop.xlane.xlu0 %890
    %v892 = vsel %vm86, %v866, 0.0
    %893 = vadd.xlane.f32.xlu0 %v892
    %v894 = vpop.xlane.xlu0 %893
    %v895 = vsel %vm86, %v867, 0.0
    %896 = vadd.xlane.f32.xlu0 %v895
    %v897 = vpop.xlane.xlu0 %896
    %v898 = vsel %vm86, %v868, 0.0
    %899 = vadd.xlane.f32.xlu0 %v898
    %v900 = vpop.xlane.xlu0 %899
    %v901 = vsel %vm86, %v869, 0.0
    %902 = vadd.xlane.f32.xlu0 %v901
    %v903 = vpop.xlane.xlu0 %902
    %v904 = vsel %vm86, %v870, 0.0
    %905 = vadd.xlane.f32.xlu0 %v904
    %v906 = vpop.xlane.xlu0 %905
    %v907 = vsel %vm86, %v871, 0.0
    %908 = vadd.xlane.f32.xlu0 %v907
    %v909 = vpop.xlane.xlu0 %908
    %v910 = vsel %vm86, %v872, 0.0
    %911 = vadd.xlane.f32.xlu0 %v910
    %v912 = vpop.xlane.xlu0 %911
    %v913 = vsel %vm86, %v873, 0.0
    %914 = vadd.xlane.f32.xlu0 %v913
    %v915 = vpop.xlane.xlu0 %914
    %v916 = vsel %vm86, %v874, 0.0
    %917 = vadd.xlane.f32.xlu0 %v916
    %v918 = vpop.xlane.xlu0 %917
    %v919 = vsel %vm86, %v875, 0.0
    %920 = vadd.xlane.f32.xlu0 %v919
    %v921 = vpop.xlane.xlu0 %920
    %v922 = vsel %vm86, %v876, 0.0
    %923 = vadd.xlane.f32.xlu0 %v922
    %v924 = vpop.xlane.xlu0 %923
    %v925 = vmul.f32 %v879, %v135
    %v926 = vmul.f32 %v882, %v135
    %v927 = vmul.f32 %v885, %v135
    %v928 = vmul.f32 %v888, %v135
    %v929 = vmul.f32 %v891, %v135
    %v930 = vmul.f32 %v894, %v135
    %v931 = vmul.f32 %v897, %v135
    %v932 = vmul.f32 %v900, %v135
    %v933 = vmul.f32 %v903, %v135
    %v934 = vmul.f32 %v906, %v135
    %v935 = vmul.f32 %v909, %v135
    %v936 = vmul.f32 %v912, %v135
    %v937 = vmul.f32 %v915, %v135
    %v938 = vmul.f32 %v918, %v135
    %v939 = vmul.f32 %v921, %v135
    %v940 = vmul.f32 %v924, %v135
    %v941 = vadd.f32 %v925, 1e-05
    %v942 = vadd.f32 %v926, 1e-05
    %v943 = vadd.f32 %v927, 1e-05
    %v944 = vadd.f32 %v928, 1e-05
    %v945 = vadd.f32 %v929, 1e-05
    %v946 = vadd.f32 %v930, 1e-05
    %v947 = vadd.f32 %v931, 1e-05
    %v948 = vadd.f32 %v932, 1e-05
    %v949 = vadd.f32 %v933, 1e-05
    %v950 = vadd.f32 %v934, 1e-05
    %v951 = vadd.f32 %v935, 1e-05
    %v952 = vadd.f32 %v936, 1e-05
    %v953 = vadd.f32 %v937, 1e-05
    %v954 = vadd.f32 %v938, 1e-05
    %v955 = vadd.f32 %v939, 1e-05
    %v956 = vadd.f32 %v940, 1e-05
    %v957 = vrsqrt.pop %v941
    %v958 = vrsqrt.pop %v942
    %v959 = vrsqrt.pop %v943
    %v960 = vrsqrt.pop %v944
    %v961 = vrsqrt.pop %v945
    %v962 = vrsqrt.pop %v946
    %v963 = vrsqrt.pop %v947
    %v964 = vrsqrt.pop %v948
    %v965 = vrsqrt.pop %v949
    %v966 = vrsqrt.pop %v950
    %v967 = vrsqrt.pop %v951
    %v968 = vrsqrt.pop %v952
    %v969 = vrsqrt.pop %v953
    %v970 = vrsqrt.pop %v954
    %v971 = vrsqrt.pop %v955
    %v972 = vrsqrt.pop %v956
    %v973 = vmul.f32 %v845, %v957
    %v974 = vmul.f32 %v846, %v958
    %v975 = vmul.f32 %v847, %v959
    %v976 = vmul.f32 %v848, %v960
    %v977 = vmul.f32 %v849, %v961
    %v978 = vmul.f32 %v850, %v962
    %v979 = vmul.f32 %v851, %v963
    %v980 = vmul.f32 %v852, %v964
    %v981 = vmul.f32 %v853, %v965
    %v982 = vmul.f32 %v854, %v966
    %v983 = vmul.f32 %v855, %v967
    %v984 = vmul.f32 %v856, %v968
    %v985 = vmul.f32 %v857, %v969
    %v986 = vmul.f32 %v858, %v970
    %v987 = vmul.f32 %v859, %v971
    %v988 = vmul.f32 %v860, %v972
    %v990 = vlaneseq
    %v991 = vshrl.u32 %v990, 7
    %v992 = vsub.s32 0, %v991
    %v993 = vrot.slane %v779, %v992
    %v995 = vmul.f32 %v973, %v993
    %v996 = vmul.f32 %v974, %v993
    %v997 = vmul.f32 %v975, %v993
    %v998 = vmul.f32 %v976, %v993
    %v999 = vmul.f32 %v977, %v993
    %v1000 = vmul.f32 %v978, %v993
    %v1001 = vmul.f32 %v979, %v993
    %v1002 = vmul.f32 %v980, %v993
    %v1003 = vmul.f32 %v981, %v993
    %v1004 = vmul.f32 %v982, %v993
    %v1005 = vmul.f32 %v983, %v993
    %v1006 = vmul.f32 %v984, %v993
    %v1007 = vmul.f32 %v985, %v993
    %v1008 = vmul.f32 %v986, %v993
    %v1009 = vmul.f32 %v987, %v993
    %v1010 = vmul.f32 %v988, %v993
    %v1012 = vlaneseq
    %v1013 = vshrl.u32 %v1012, 7
    %v1014 = vsub.s32 0, %v1013
    %v1015 = vrot.slane %v780, %v1014
    %v1017 = vadd.f32 %v995, %v1015
    %v1018 = vadd.f32 %v996, %v1015
    %v1019 = vadd.f32 %v997, %v1015
    %v1020 = vadd.f32 %v998, %v1015
    %v1021 = vadd.f32 %v999, %v1015
    %v1022 = vadd.f32 %v1000, %v1015
    %v1023 = vadd.f32 %v1001, %v1015
    %v1024 = vadd.f32 %v1002, %v1015
    %v1025 = vadd.f32 %v1003, %v1015
    %v1026 = vadd.f32 %v1004, %v1015
    %v1027 = vadd.f32 %v1005, %v1015
    %v1028 = vadd.f32 %v1006, %v1015
    %v1029 = vadd.f32 %v1007, %v1015
    %v1030 = vadd.f32 %v1008, %v1015
    %v1031 = vadd.f32 %v1009, %v1015
    %v1032 = vadd.f32 %v1010, %v1015
    %1033 = vst.msk [vmem:[#allocation2] sm:$0xff] %vm86, %v1017
    %1034 = vst.msk [vmem:[#allocation2 + $0x8] sm:$0xff] %vm86, %v1018
    %1035 = vst.msk [vmem:[#allocation2 + $0x10] sm:$0xff] %vm86, %v1019
    %1036 = vst.msk [vmem:[#allocation2 + $0x18] sm:$0xff] %vm86, %v1020
    %1037 = vst.msk [vmem:[#allocation2 + $0x20] sm:$0xff] %vm86, %v1021
    %1038 = vst.msk [vmem:[#allocation2 + $0x28] sm:$0xff] %vm86, %v1022
    %1039 = vst.msk [vmem:[#allocation2 + $0x30] sm:$0xff] %vm86, %v1023
    %1040 = vst.msk [vmem:[#allocation2 + $0x38] sm:$0xff] %vm86, %v1024
    %1041 = vst.msk [vmem:[#allocation2 + $0x40] sm:$0xff] %vm86, %v1025
    %1042 = vst.msk [vmem:[#allocation2 + $0x48] sm:$0xff] %vm86, %v1026
    %1043 = vst.msk [vmem:[#allocation2 + $0x50] sm:$0xff] %vm86, %v1027
    %1044 = vst.msk [vmem:[#allocation2 + $0x58] sm:$0xff] %vm86, %v1028
    %1045 = vst.msk [vmem:[#allocation2 + $0x60] sm:$0xff] %vm86, %v1029
    %1046 = vst.msk [vmem:[#allocation2 + $0x68] sm:$0xff] %vm86, %v1030
    %1047 = vst.msk [vmem:[#allocation2 + $0x70] sm:$0xff] %vm86, %v1031
    %1048 = vst.msk [vmem:[#allocation2 + $0x78] sm:$0xff] %vm86, %v1032
    // Predicated region
    $region42: #{xey_transformer_layer.7} parent=1 // pred_check
      _
    $region43: #{xey_transformer_layer.7} parent=1 // pred_check_branch
      %1050 = sbr.rel (0) target = $region45
    $region44: #{xey_transformer_layer.7} parent=1 // pred_region
      %s1052 = ssub.s32 2048, 2048
      %1053 = vsyncadd [#allocation3], %s1052
      %s1054 = sshll.u32 [#allocation2], 4
      %s1055 = int_to_ptr.vmem [resolvable:$true] %s1054
      %1060 = dma.vmem_to_hbm [thread:$0]  %s1055, 2048, %s10, [#allocation3], 128, 128, 8
    $region45: #{xey_transformer_layer.7} parent=1 // pred_fallthru
      _
    // Predicated region
    $region46: #{xey_transformer_layer.7} parent=1 // pred_check
      _
    $region47: #{xey_transformer_layer.7} parent=1 // pred_check_branch
      %1062 = sbr.rel (0) target = $region49
    $region48: #{xey_transformer_layer.7} parent=1 // pred_region
      %1063 = dma.done [#allocation3], 2048
    $region49: #{xey_transformer_layer.7} parent=1 // pred_fallthru
      _
    %1064 = vsyncpa [#allocation3], 1

// kernel: xey_transformer_layer.5
$region0: #{xey_transformer_layer.5}
  #allocation0 [shape = 'u32[]', space=smem, size = 0x4, offset = 0x4, fixed_abs, tag = 'smem constant byte address 0x4 - core index']
  #allocation1 [shape = 'u32[144,128]{1,0:T(1,128)}', space=vmem, size = 0x12000, scoped, tag = 'internal scratch']
  %s0 = inlined_call_operand.vmem [shape: f32[2,8,32], index: 0, kind: input, shape index: {}]
  %s1 = inlined_call_operand.vmem [shape: f32[2,8,32], index: 1, kind: input, shape index: {}]
  %s2 = inlined_call_operand.vmem [shape: f32[2,8,32], index: 2, kind: input, shape index: {}]
  %s3 = inlined_call_operand.vmem [shape: f32[2,8,8,16], index: 3, kind: input, shape index: {}]
  %s4 = inlined_call_operand.vmem [shape: f32[2,8,1], index: 4, kind: input, shape index: {}, may-alias: {4,5}]
  %s5 = inlined_call_operand.vmem [shape: f32[2,8,1], index: 5, kind: input, shape index: {}, may-alias: {4,5}]
  %s6 = inlined_call_operand.vmem [shape: f32[2,1,32], index: 6, kind: input, shape index: {}]
  %s7 = inlined_call_operand.vmem [shape: f32[2,1,32], index: 7, kind: input, shape index: {}]
  %s8 = inlined_call_operand.vmem [shape: f32[2,1,32], index: 8, kind: input, shape index: {}]
  %s9 = inlined_call_operand.vmem [shape: f32[2,1,32], index: 9, kind: input, shape index: {}]
  %s10 = inlined_call_operand.vmem [shape: f32[16,32], index: 10, kind: input, shape index: {}]
  %s11 = inlined_call_operand.vmem [shape: f32[1,32], index: 11, kind: input, shape index: {}]
  %s12 = inlined_call_operand.vmem [shape: f32[16,32], index: 12, kind: input, shape index: {}]
  %s13 = inlined_call_operand.vmem [shape: f32[1,32], index: 13, kind: input, shape index: {}]
  %s14 = inlined_call_operand.vmem [shape: f32[32,16], index: 14, kind: input, shape index: {}]
  %s15 = inlined_call_operand.vmem [shape: f32[1,16], index: 15, kind: input, shape index: {}]
  %s16 = inlined_call_operand.vmem [shape: f32[32,32], index: 16, kind: input, shape index: {}]
  %s17 = inlined_call_operand.vmem [shape: f32[1,32], index: 17, kind: input, shape index: {}]
  %s18 = inlined_call_operand.vmem [shape: f32[2,8,8,16], index: 18, kind: output, shape index: {0}]
  %s19 = inlined_call_operand.vmem [shape: f32[2,8,32], index: 19, kind: output, shape index: {1}]
  %20 = xla_tuple %s18, %s19
  %s21 = sld [smem:[#allocation0]]
  $region113: #{xey_transformer_layer.5} parent=0
    _
  %s23 = ssub.s32 1, %s21
  %s24 = scalar_select 0, %s23, %s21
  loop: start=0, step=1, limit=4
  $region2: #{xey_transformer_layer.5} parent=0 // loop_pre_header
    _
  $region3: #{xey_transformer_layer.5} parent=0 // loop_header
    %s26 = sphi 0, %s30
    %p27 = scmp.ge.s32.totalorder %s26, 4
    %s33 = sphi 0, %s45
    %s34 = sphi 0, %s41
    %s35 = sphi 0, %s33
    %s36 = sphi 0, %s34
    %s37 = sphi 0, %s35
    %s38 = sphi 0, %s36
    %s50 = sphi 0, %s52
    %s53 = sphi 0, %s50
    %s54 = sphi 0, %s53
    %s70 = sphi 0, %s54
    %s76 = sphi 0, %s78
    %s79 = sphi 0, %s76
    %s80 = sphi 0, %s79
    %s96 = sphi 0, %s80
    %s102 = sphi 0, %s104
    %s105 = sphi 0, %s102
    %s106 = sphi 0, %s105
    %s122 = sphi 0, %s106
    %s130 = sphi 0, %s132
    %s133 = sphi 0, %s130
    %s134 = sphi 0, %s133
    %s150 = sphi 0, %s134
    %s158 = sphi 0, %s160
    %s161 = sphi 0, %s158
    %s162 = sphi 0, %s161
    %s178 = sphi 0, %s162
    %s184 = sphi 0, %s186
    %s187 = sphi 0, %s184
    %s188 = sphi 0, %s187
    %s204 = sphi 0, %s188
    %s210 = sphi 0, %s212
    %s213 = sphi 0, %s210
    %s214 = sphi 0, %s213
    %s230 = sphi 0, %s214
    %s236 = sphi 0, %s238
    %s239 = sphi 0, %s236
    %s240 = sphi 0, %s239
    %s256 = sphi 0, %s240
    %s262 = sphi 0, %s264
    %s265 = sphi 0, %s262
    %s266 = sphi 0, %s265
    %s282 = sphi 0, %s266
    %s288 = sphi 0, %s290
    %s291 = sphi 0, %s288
    %s292 = sphi 0, %s291
    %s308 = sphi 0, %s292
    %s312 = sphi 0, %s312
    %s314 = sphi 0, %s312
    %s315 = sphi 0, %s314
    %s329 = sphi 0, %s315
    %s333 = sphi 0, %s333
    %s335 = sphi 0, %s333
    %s336 = sphi 0, %s335
    %s350 = sphi 0, %s336
    %s354 = sphi 0, %s354
    %s356 = sphi 0, %s354
    %s357 = sphi 0, %s356
    %s371 = sphi 0, %s357
    %s375 = sphi 0, %s375
    %s377 = sphi 0, %s375
    %s378 = sphi 0, %s377
    %s392 = sphi 0, %s378
    %s396 = sphi 0, %s396
    %s398 = sphi 0, %s396
    %s399 = sphi 0, %s398
    %s413 = sphi 0, %s399
    %s417 = sphi 0, %s417
    %s419 = sphi 0, %s417
    %s420 = sphi 0, %s419
    %s434 = sphi 0, %s420
    %s438 = sphi 0, %s438
    %s440 = sphi 0, %s438
    %s441 = sphi 0, %s440
    %s455 = sphi 0, %s441
    %s459 = sphi 0, %s459
    %s461 = sphi 0, %s459
    %s462 = sphi 0, %s461
    %s476 = sphi 0, %s462
    %s484 = sphi 0, %s486
    %s487 = sphi 0, %s484
    %s488 = sphi 0, %s487
    %s504 = sphi 0, %s488
    %s512 = sphi 0, %s514
    %s515 = sphi 0, %s512
    %s516 = sphi 0, %s515
    %s532 = sphi 0, %s516
  $region4: #{xey_transformer_layer.5} parent=0 // loop_header_branch
    %29 = sbr.rel (%p27) target = $region8
  $region5: #{xey_transformer_layer.5} parent=0 // loop_body
    %s31 = ssub.s32 %s26, 1
    %s32 = ssub.s32 %s26, 2
    %s39 = sadd.s32 1, %s34
    %p40 = scmp.ge.s32.totalorder %s39, 1
    %s41 = scalar_select %p40, 0, %s39
    %s42 = sadd.s32 1, %s33
    %s43 = scalar_select %p40, %s42, %s33
    %p44 = scmp.ge.s32.totalorder %s43, 2
    %s45 = scalar_select %p44, 0, %s43
    %s46 = ssub.s32 %s33, %s45
    %s47 = ssub.s32 %s34, %s41
    %s48 = sor.u32 %s46, %s47
    %p49 = scmp.eq.s32.totalorder %s48, 0
    %s51 = sadd.s32 %s50, 1
    %s52 = scalar_select %p49, %s50, %s51
    %p55 = pneg %p49
    %p56 = scmp.eq.s32.totalorder %s26, 1
    %p57 = por %p55, %p56
    %p58 = scmp.ne.s32.totalorder %s50, %s53
    %p59 = scmp.eq.s32.totalorder %s26, 0
    %p60 = por %p58, %p59
    %p61 = scmp.ne.s32.totalorder %s50, %s53
    %p62 = scmp.eq.s32.totalorder %s31, 1
    %p63 = por %p61, %p62
    %p64 = scmp.ne.s32.totalorder %s53, %s54
    %p65 = scmp.eq.s32.totalorder %s31, 0
    %p66 = por %p64, %p65
    %p67 = scmp.ne.s32.totalorder %s53, %s54
    %p68 = scmp.eq.s32.totalorder %s32, 1
    %p69 = por %p67, %p68
    %p71 = scmp.ne.s32.totalorder %s54, %s70
    %p72 = scmp.eq.s32.totalorder %s32, 0
    %p73 = por %p71, %p72
    %s74 = ssub.s32 %s33, %s45
    %p75 = scmp.eq.s32.totalorder %s74, 0
    %s77 = sadd.s32 %s76, 1
    %s78 = scalar_select %p75, %s76, %s77
    %p81 = pneg %p75
    %p82 = scmp.eq.s32.totalorder %s26, 1
    %p83 = por %p81, %p82
    %p84 = scmp.ne.s32.totalorder %s76, %s79
    %p85 = scmp.eq.s32.totalorder %s26, 0
    %p86 = por %p84, %p85
    %p87 = scmp.ne.s32.totalorder %s76, %s79
    %p88 = scmp.eq.s32.totalorder %s31, 1
    %p89 = por %p87, %p88
    %p90 = scmp.ne.s32.totalorder %s79, %s80
    %p91 = scmp.eq.s32.totalorder %s31, 0
    %p92 = por %p90, %p91
    %p93 = scmp.ne.s32.totalorder %s79, %s80
    %p94 = scmp.eq.s32.totalorder %s32, 1
    %p95 = por %p93, %p94
    %p97 = scmp.ne.s32.totalorder %s80, %s96
    %p98 = scmp.eq.s32.totalorder %s32, 0
    %p99 = por %p97, %p98
    %s100 = ssub.s32 %s33, %s45
    %p101 = scmp.eq.s32.totalorder %s100, 0
    %s103 = sadd.s32 %s102, 1
    %s104 = scalar_select %p101, %s102, %s103
    %p107 = pneg %p101
    %p108 = scmp.eq.s32.totalorder %s26, 1
    %p109 = por %p107, %p108
    %p110 = scmp.ne.s32.totalorder %s102, %s105
    %p111 = scmp.eq.s32.totalorder %s26, 0
    %p112 = por %p110, %p111
    %p113 = scmp.ne.s32.totalorder %s102, %s105
    %p114 = scmp.eq.s32.totalorder %s31, 1
    %p115 = por %p113, %p114
    %p116 = scmp.ne.s32.totalorder %s105, %s106
    %p117 = scmp.eq.s32.totalorder %s31, 0
    %p118 = por %p116, %p117
    %p119 = scmp.ne.s32.totalorder %s105, %s106
    %p120 = scmp.eq.s32.totalorder %s32, 1
    %p121 = por %p119, %p120
    %p123 = scmp.ne.s32.totalorder %s106, %s122
    %p124 = scmp.eq.s32.totalorder %s32, 0
    %p125 = por %p123, %p124
    %s126 = ssub.s32 %s33, %s45
    %s127 = ssub.s32 %s34, %s41
    %s128 = sor.u32 %s126, %s127
    %p129 = scmp.eq.s32.totalorder %s128, 0
    %s131 = sadd.s32 %s130, 1
    %s132 = scalar_select %p129, %s130, %s131
    %p135 = pneg %p129
    %p136 = scmp.eq.s32.totalorder %s26, 1
    %p137 = por %p135, %p136
    %p138 = scmp.ne.s32.totalorder %s130, %s133
    %p139 = scmp.eq.s32.totalorder %s26, 0
    %p140 = por %p138, %p139
    %p141 = scmp.ne.s32.totalorder %s130, %s133
    %p142 = scmp.eq.s32.totalorder %s31, 1
    %p143 = por %p141, %p142
    %p144 = scmp.ne.s32.totalorder %s133, %s134
    %p145 = scmp.eq.s32.totalorder %s31, 0
    %p146 = por %p144, %p145
    %p147 = scmp.ne.s32.totalorder %s133, %s134
    %p148 = scmp.eq.s32.totalorder %s32, 1
    %p149 = por %p147, %p148
    %p151 = scmp.ne.s32.totalorder %s134, %s150
    %p152 = scmp.eq.s32.totalorder %s32, 0
    %p153 = por %p151, %p152
    %s154 = ssub.s32 %s33, %s45
    %s155 = ssub.s32 %s34, %s41
    %s156 = sor.u32 %s154, %s155
    %p157 = scmp.eq.s32.totalorder %s156, 0
    %s159 = sadd.s32 %s158, 1
    %s160 = scalar_select %p157, %s158, %s159
    %p163 = pneg %p157
    %p164 = scmp.eq.s32.totalorder %s26, 1
    %p165 = por %p163, %p164
    %p166 = scmp.ne.s32.totalorder %s158, %s161
    %p167 = scmp.eq.s32.totalorder %s26, 0
    %p168 = por %p166, %p167
    %p169 = scmp.ne.s32.totalorder %s158, %s161
    %p170 = scmp.eq.s32.totalorder %s31, 1
    %p171 = por %p169, %p170
    %p172 = scmp.ne.s32.totalorder %s161, %s162
    %p173 = scmp.eq.s32.totalorder %s31, 0
    %p174 = por %p172, %p173
    %p175 = scmp.ne.s32.totalorder %s161, %s162
    %p176 = scmp.eq.s32.totalorder %s32, 1
    %p177 = por %p175, %p176
    %p179 = scmp.ne.s32.totalorder %s162, %s178
    %p180 = scmp.eq.s32.totalorder %s32, 0
    %p181 = por %p179, %p180
    %s182 = ssub.s32 %s33, %s45
    %p183 = scmp.eq.s32.totalorder %s182, 0
    %s185 = sadd.s32 %s184, 1
    %s186 = scalar_select %p183, %s184, %s185
    %p189 = pneg %p183
    %p190 = scmp.eq.s32.totalorder %s26, 1
    %p191 = por %p189, %p190
    %p192 = scmp.ne.s32.totalorder %s184, %s187
    %p193 = scmp.eq.s32.totalorder %s26, 0
    %p194 = por %p192, %p193
    %p195 = scmp.ne.s32.totalorder %s184, %s187
    %p196 = scmp.eq.s32.totalorder %s31, 1
    %p197 = por %p195, %p196
    %p198 = scmp.ne.s32.totalorder %s187, %s188
    %p199 = scmp.eq.s32.totalorder %s31, 0
    %p200 = por %p198, %p199
    %p201 = scmp.ne.s32.totalorder %s187, %s188
    %p202 = scmp.eq.s32.totalorder %s32, 1
    %p203 = por %p201, %p202
    %p205 = scmp.ne.s32.totalorder %s188, %s204
    %p206 = scmp.eq.s32.totalorder %s32, 0
    %p207 = por %p205, %p206
    %s208 = ssub.s32 %s33, %s45
    %p209 = scmp.eq.s32.totalorder %s208, 0
    %s211 = sadd.s32 %s210, 1
    %s212 = scalar_select %p209, %s210, %s211
    %p215 = pneg %p209
    %p216 = scmp.eq.s32.totalorder %s26, 1
    %p217 = por %p215, %p216
    %p218 = scmp.ne.s32.totalorder %s210, %s213
    %p219 = scmp.eq.s32.totalorder %s26, 0
    %p220 = por %p218, %p219
    %p221 = scmp.ne.s32.totalorder %s210, %s213
    %p222 = scmp.eq.s32.totalorder %s31, 1
    %p223 = por %p221, %p222
    %p224 = scmp.ne.s32.totalorder %s213, %s214
    %p225 = scmp.eq.s32.totalorder %s31, 0
    %p226 = por %p224, %p225
    %p227 = scmp.ne.s32.totalorder %s213, %s214
    %p228 = scmp.eq.s32.totalorder %s32, 1
    %p229 = por %p227, %p228
    %p231 = scmp.ne.s32.totalorder %s214, %s230
    %p232 = scmp.eq.s32.totalorder %s32, 0
    %p233 = por %p231, %p232
    %s234 = ssub.s32 %s33, %s45
    %p235 = scmp.eq.s32.totalorder %s234, 0
    %s237 = sadd.s32 %s236, 1
    %s238 = scalar_select %p235, %s236, %s237
    %p241 = pneg %p235
    %p242 = scmp.eq.s32.totalorder %s26, 1
    %p243 = por %p241, %p242
    %p244 = scmp.ne.s32.totalorder %s236, %s239
    %p245 = scmp.eq.s32.totalorder %s26, 0
    %p246 = por %p244, %p245
    %p247 = scmp.ne.s32.totalorder %s236, %s239
    %p248 = scmp.eq.s32.totalorder %s31, 1
    %p249 = por %p247, %p248
    %p250 = scmp.ne.s32.totalorder %s239, %s240
    %p251 = scmp.eq.s32.totalorder %s31, 0
    %p252 = por %p250, %p251
    %p253 = scmp.ne.s32.totalorder %s239, %s240
    %p254 = scmp.eq.s32.totalorder %s32, 1
    %p255 = por %p253, %p254
    %p257 = scmp.ne.s32.totalorder %s240, %s256
    %p258 = scmp.eq.s32.totalorder %s32, 0
    %p259 = por %p257, %p258
    %s260 = ssub.s32 %s33, %s45
    %p261 = scmp.eq.s32.totalorder %s260, 0
    %s263 = sadd.s32 %s262, 1
    %s264 = scalar_select %p261, %s262, %s263
    %p267 = pneg %p261
    %p268 = scmp.eq.s32.totalorder %s26, 1
    %p269 = por %p267, %p268
    %p270 = scmp.ne.s32.totalorder %s262, %s265
    %p271 = scmp.eq.s32.totalorder %s26, 0
    %p272 = por %p270, %p271
    %p273 = scmp.ne.s32.totalorder %s262, %s265
    %p274 = scmp.eq.s32.totalorder %s31, 1
    %p275 = por %p273, %p274
    %p276 = scmp.ne.s32.totalorder %s265, %s266
    %p277 = scmp.eq.s32.totalorder %s31, 0
    %p278 = por %p276, %p277
    %p279 = scmp.ne.s32.totalorder %s265, %s266
    %p280 = scmp.eq.s32.totalorder %s32, 1
    %p281 = por %p279, %p280
    %p283 = scmp.ne.s32.totalorder %s266, %s282
    %p284 = scmp.eq.s32.totalorder %s32, 0
    %p285 = por %p283, %p284
    %s286 = ssub.s32 %s33, %s45
    %p287 = scmp.eq.s32.totalorder %s286, 0
    %s289 = sadd.s32 %s288, 1
    %s290 = scalar_select %p287, %s288, %s289
    %p293 = pneg %p287
    %p294 = scmp.eq.s32.totalorder %s26, 1
    %p295 = por %p293, %p294
    %p296 = scmp.ne.s32.totalorder %s288, %s291
    %p297 = scmp.eq.s32.totalorder %s26, 0
    %p298 = por %p296, %p297
    %p299 = scmp.ne.s32.totalorder %s288, %s291
    %p300 = scmp.eq.s32.totalorder %s31, 1
    %p301 = por %p299, %p300
    %p302 = scmp.ne.s32.totalorder %s291, %s292
    %p303 = scmp.eq.s32.totalorder %s31, 0
    %p304 = por %p302, %p303
    %p305 = scmp.ne.s32.totalorder %s291, %s292
    %p306 = scmp.eq.s32.totalorder %s32, 1
    %p307 = por %p305, %p306
    %p309 = scmp.ne.s32.totalorder %s292, %s308
    %p310 = scmp.eq.s32.totalorder %s32, 0
    %p311 = por %p309, %p310
    %s313 = sadd.s32 %s312, 1
    %p316 = scmp.eq.s32.totalorder %s26, 1
    %p317 = scmp.ne.s32.totalorder %s312, %s314
    %p318 = scmp.eq.s32.totalorder %s26, 0
    %p319 = por %p317, %p318
    %p320 = scmp.ne.s32.totalorder %s312, %s314
    %p321 = scmp.eq.s32.totalorder %s31, 1
    %p322 = por %p320, %p321
    %p323 = scmp.ne.s32.totalorder %s314, %s315
    %p324 = scmp.eq.s32.totalorder %s31, 0
    %p325 = por %p323, %p324
    %p326 = scmp.ne.s32.totalorder %s314, %s315
    %p327 = scmp.eq.s32.totalorder %s32, 1
    %p328 = por %p326, %p327
    %p330 = scmp.ne.s32.totalorder %s315, %s329
    %p331 = scmp.eq.s32.totalorder %s32, 0
    %p332 = por %p330, %p331
    %s334 = sadd.s32 %s333, 1
    %p337 = scmp.eq.s32.totalorder %s26, 1
    %p338 = scmp.ne.s32.totalorder %s333, %s335
    %p339 = scmp.eq.s32.totalorder %s26, 0
    %p340 = por %p338, %p339
    %p341 = scmp.ne.s32.totalorder %s333, %s335
    %p342 = scmp.eq.s32.totalorder %s31, 1
    %p343 = por %p341, %p342
    %p344 = scmp.ne.s32.totalorder %s335, %s336
    %p345 = scmp.eq.s32.totalorder %s31, 0
    %p346 = por %p344, %p345
    %p347 = scmp.ne.s32.totalorder %s335, %s336
    %p348 = scmp.eq.s32.totalorder %s32, 1
    %p349 = por %p347, %p348
    %p351 = scmp.ne.s32.totalorder %s336, %s350
    %p352 = scmp.eq.s32.totalorder %s32, 0
    %p353 = por %p351, %p352
    %s355 = sadd.s32 %s354, 1
    %p358 = scmp.eq.s32.totalorder %s26, 1
    %p359 = scmp.ne.s32.totalorder %s354, %s356
    %p360 = scmp.eq.s32.totalorder %s26, 0
    %p361 = por %p359, %p360
    %p362 = scmp.ne.s32.totalorder %s354, %s356
    %p363 = scmp.eq.s32.totalorder %s31, 1
    %p364 = por %p362, %p363
    %p365 = scmp.ne.s32.totalorder %s356, %s357
    %p366 = scmp.eq.s32.totalorder %s31, 0
    %p367 = por %p365, %p366
    %p368 = scmp.ne.s32.totalorder %s356, %s357
    %p369 = scmp.eq.s32.totalorder %s32, 1
    %p370 = por %p368, %p369
    %p372 = scmp.ne.s32.totalorder %s357, %s371
    %p373 = scmp.eq.s32.totalorder %s32, 0
    %p374 = por %p372, %p373
    %s376 = sadd.s32 %s375, 1
    %p379 = scmp.eq.s32.totalorder %s26, 1
    %p380 = scmp.ne.s32.totalorder %s375, %s377
    %p381 = scmp.eq.s32.totalorder %s26, 0
    %p382 = por %p380, %p381
    %p383 = scmp.ne.s32.totalorder %s375, %s377
    %p384 = scmp.eq.s32.totalorder %s31, 1
    %p385 = por %p383, %p384
    %p386 = scmp.ne.s32.totalorder %s377, %s378
    %p387 = scmp.eq.s32.totalorder %s31, 0
    %p388 = por %p386, %p387
    %p389 = scmp.ne.s32.totalorder %s377, %s378
    %p390 = scmp.eq.s32.totalorder %s32, 1
    %p391 = por %p389, %p390
    %p393 = scmp.ne.s32.totalorder %s378, %s392
    %p394 = scmp.eq.s32.totalorder %s32, 0
    %p395 = por %p393, %p394
    %s397 = sadd.s32 %s396, 1
    %p400 = scmp.eq.s32.totalorder %s26, 1
    %p401 = scmp.ne.s32.totalorder %s396, %s398
    %p402 = scmp.eq.s32.totalorder %s26, 0
    %p403 = por %p401, %p402
    %p404 = scmp.ne.s32.totalorder %s396, %s398
    %p405 = scmp.eq.s32.totalorder %s31, 1
    %p406 = por %p404, %p405
    %p407 = scmp.ne.s32.totalorder %s398, %s399
    %p408 = scmp.eq.s32.totalorder %s31, 0
    %p409 = por %p407, %p408
    %p410 = scmp.ne.s32.totalorder %s398, %s399
    %p411 = scmp.eq.s32.totalorder %s32, 1
    %p412 = por %p410, %p411
    %p414 = scmp.ne.s32.totalorder %s399, %s413
    %p415 = scmp.eq.s32.totalorder %s32, 0
    %p416 = por %p414, %p415
    %s418 = sadd.s32 %s417, 1
    %p421 = scmp.eq.s32.totalorder %s26, 1
    %p422 = scmp.ne.s32.totalorder %s417, %s419
    %p423 = scmp.eq.s32.totalorder %s26, 0
    %p424 = por %p422, %p423
    %p425 = scmp.ne.s32.totalorder %s417, %s419
    %p426 = scmp.eq.s32.totalorder %s31, 1
    %p427 = por %p425, %p426
    %p428 = scmp.ne.s32.totalorder %s419, %s420
    %p429 = scmp.eq.s32.totalorder %s31, 0
    %p430 = por %p428, %p429
    %p431 = scmp.ne.s32.totalorder %s419, %s420
    %p432 = scmp.eq.s32.totalorder %s32, 1
    %p433 = por %p431, %p432
    %p435 = scmp.ne.s32.totalorder %s420, %s434
    %p436 = scmp.eq.s32.totalorder %s32, 0
    %p437 = por %p435, %p436
    %s439 = sadd.s32 %s438, 1
    %p442 = scmp.eq.s32.totalorder %s26, 1
    %p443 = scmp.ne.s32.totalorder %s438, %s440
    %p444 = scmp.eq.s32.totalorder %s26, 0
    %p445 = por %p443, %p444
    %p446 = scmp.ne.s32.totalorder %s438, %s440
    %p447 = scmp.eq.s32.totalorder %s31, 1
    %p448 = por %p446, %p447
    %p449 = scmp.ne.s32.totalorder %s440, %s441
    %p450 = scmp.eq.s32.totalorder %s31, 0
    %p451 = por %p449, %p450
    %p452 = scmp.ne.s32.totalorder %s440, %s441
    %p453 = scmp.eq.s32.totalorder %s32, 1
    %p454 = por %p452, %p453
    %p456 = scmp.ne.s32.totalorder %s441, %s455
    %p457 = scmp.eq.s32.totalorder %s32, 0
    %p458 = por %p456, %p457
    %s460 = sadd.s32 %s459, 1
    %p463 = scmp.eq.s32.totalorder %s26, 1
    %p464 = scmp.ne.s32.totalorder %s459, %s461
    %p465 = scmp.eq.s32.totalorder %s26, 0
    %p466 = por %p464, %p465
    %p467 = scmp.ne.s32.totalorder %s459, %s461
    %p468 = scmp.eq.s32.totalorder %s31, 1
    %p469 = por %p467, %p468
    %p470 = scmp.ne.s32.totalorder %s461, %s462
    %p471 = scmp.eq.s32.totalorder %s31, 0
    %p472 = por %p470, %p471
    %p473 = scmp.ne.s32.totalorder %s461, %s462
    %p474 = scmp.eq.s32.totalorder %s32, 1
    %p475 = por %p473, %p474
    %p477 = scmp.ne.s32.totalorder %s462, %s476
    %p478 = scmp.eq.s32.totalorder %s32, 0
    %p479 = por %p477, %p478
    %s480 = ssub.s32 %s33, %s45
    %s481 = ssub.s32 %s34, %s41
    %s482 = sor.u32 %s480, %s481
    %p483 = scmp.eq.s32.totalorder %s482, 0
    %s485 = sadd.s32 %s484, 1
    %s486 = scalar_select %p483, %s484, %s485
    %p489 = pneg %p483
    %p490 = scmp.eq.s32.totalorder %s26, 1
    %p491 = por %p489, %p490
    %p492 = scmp.ne.s32.totalorder %s484, %s487
    %p493 = scmp.eq.s32.totalorder %s26, 0
    %p494 = por %p492, %p493
    %p495 = scmp.ne.s32.totalorder %s484, %s487
    %p496 = scmp.eq.s32.totalorder %s31, 1
    %p497 = por %p495, %p496
    %p498 = scmp.ne.s32.totalorder %s487, %s488
    %p499 = scmp.eq.s32.totalorder %s31, 0
    %p500 = por %p498, %p499
    %p501 = scmp.ne.s32.totalorder %s487, %s488
    %p502 = scmp.eq.s32.totalorder %s32, 1
    %p503 = por %p501, %p502
    %p505 = scmp.ne.s32.totalorder %s488, %s504
    %p506 = scmp.eq.s32.totalorder %s32, 0
    %p507 = por %p505, %p506
    %s508 = ssub.s32 %s33, %s45
    %s509 = ssub.s32 %s34, %s41
    %s510 = sor.u32 %s508, %s509
    %p511 = scmp.eq.s32.totalorder %s510, 0
    %s513 = sadd.s32 %s512, 1
    %s514 = scalar_select %p511, %s512, %s513
    %p517 = pneg %p511
    %p518 = scmp.eq.s32.totalorder %s26, 1
    %p519 = por %p517, %p518
    %p520 = scmp.ne.s32.totalorder %s512, %s515
    %p521 = scmp.eq.s32.totalorder %s26, 0
    %p522 = por %p520, %p521
    %p523 = scmp.ne.s32.totalorder %s512, %s515
    %p524 = scmp.eq.s32.totalorder %s31, 1
    %p525 = por %p523, %p524
    %p526 = scmp.ne.s32.totalorder %s515, %s516
    %p527 = scmp.eq.s32.totalorder %s31, 0
    %p528 = por %p526, %p527
    %p529 = scmp.ne.s32.totalorder %s515, %s516
    %p530 = scmp.eq.s32.totalorder %s32, 1
    %p531 = por %p529, %p530
    %p533 = scmp.ne.s32.totalorder %s516, %s532
    %p534 = scmp.eq.s32.totalorder %s32, 0
    %p535 = por %p533, %p534
    %p536 = scmp.le.s32.totalorder 1, %s26
    %p537 = scmp.lt.s32.totalorder %s26, 3
    %p538 = pnand %p536, %p537
    %p539 = pneg %p538
    // Predicated region
    $region9: #{xey_transformer_layer.5} parent=5 // pred_check
      _
    $region10: #{xey_transformer_layer.5} parent=5 // pred_check_branch
      %541 = sbr.rel (%p538) target = $region12
    $region11: #{xey_transformer_layer.5} parent=5 // pred_region
      %s542 = ssub.s32 %s26, 1
      // Predicated region
      $region13: #{xey_transformer_layer.5} parent=11 // pred_check
        %p543 = pneg %p325
      $region14: #{xey_transformer_layer.5} parent=11 // pred_check_branch
        %545 = sbr.rel (%p543) target = $region16
      $region15: #{xey_transformer_layer.5} parent=11 // pred_region
        _
      $region16: #{xey_transformer_layer.5} parent=11 // pred_fallthru
        _
      // Predicated region
      $region17: #{xey_transformer_layer.5} parent=11 // pred_check
        %p546 = pneg %p346
      $region18: #{xey_transformer_layer.5} parent=11 // pred_check_branch
        %548 = sbr.rel (%p546) target = $region20
      $region19: #{xey_transformer_layer.5} parent=11 // pred_region
        _
      $region20: #{xey_transformer_layer.5} parent=11 // pred_fallthru
        _
      // Predicated region
      $region21: #{xey_transformer_layer.5} parent=11 // pred_check
        %p549 = pneg %p367
      $region22: #{xey_transformer_layer.5} parent=11 // pred_check_branch
        %551 = sbr.rel (%p549) target = $region24
      $region23: #{xey_transformer_layer.5} parent=11 // pred_region
        _
      $region24: #{xey_transformer_layer.5} parent=11 // pred_fallthru
        _
      // Predicated region
      $region25: #{xey_transformer_layer.5} parent=11 // pred_check
        %p552 = pneg %p388
      $region26: #{xey_transformer_layer.5} parent=11 // pred_check_branch
        %554 = sbr.rel (%p552) target = $region28
      $region27: #{xey_transformer_layer.5} parent=11 // pred_region
        _
      $region28: #{xey_transformer_layer.5} parent=11 // pred_fallthru
        _
      // Predicated region
      $region29: #{xey_transformer_layer.5} parent=11 // pred_check
        %p555 = pneg %p409
      $region30: #{xey_transformer_layer.5} parent=11 // pred_check_branch
        %557 = sbr.rel (%p555) target = $region32
      $region31: #{xey_transformer_layer.5} parent=11 // pred_region
        _
      $region32: #{xey_transformer_layer.5} parent=11 // pred_fallthru
        _
      // Predicated region
      $region33: #{xey_transformer_layer.5} parent=11 // pred_check
        %p558 = pneg %p430
      $region34: #{xey_transformer_layer.5} parent=11 // pred_check_branch
        %560 = sbr.rel (%p558) target = $region36
      $region35: #{xey_transformer_layer.5} parent=11 // pred_region
        _
      $region36: #{xey_transformer_layer.5} parent=11 // pred_fallthru
        _
      // Predicated region
      $region37: #{xey_transformer_layer.5} parent=11 // pred_check
        %p561 = pneg %p451
      $region38: #{xey_transformer_layer.5} parent=11 // pred_check_branch
        %563 = sbr.rel (%p561) target = $region40
      $region39: #{xey_transformer_layer.5} parent=11 // pred_region
        _
      $region40: #{xey_transformer_layer.5} parent=11 // pred_fallthru
        _
      // Predicated region
      $region41: #{xey_transformer_layer.5} parent=11 // pred_check
        %p564 = pneg %p472
      $region42: #{xey_transformer_layer.5} parent=11 // pred_check_branch
        %566 = sbr.rel (%p564) target = $region44
      $region43: #{xey_transformer_layer.5} parent=11 // pred_region
        _
      $region44: #{xey_transformer_layer.5} parent=11 // pred_fallthru
        _
    $region12: #{xey_transformer_layer.5} parent=5 // pred_fallthru
      _
    %p567 = scmp.lt.s32.totalorder %s26, 2
    // Predicated region
    $region45: #{xey_transformer_layer.5} parent=5 // pred_check
      %p568 = pneg %p567
    $region46: #{xey_transformer_layer.5} parent=5 // pred_check_branch
      %570 = sbr.rel (%p568) target = $region48
    $region47: #{xey_transformer_layer.5} parent=5 // pred_region
      // Predicated region
      $region49: #{xey_transformer_layer.5} parent=47 // pred_check
        %p571 = pneg %p60
      $region50: #{xey_transformer_layer.5} parent=47 // pred_check_branch
        %573 = sbr.rel (%p571) target = $region52
      $region51: #{xey_transformer_layer.5} parent=47 // pred_region
        %p574 = scmp.lt.s32.totalorder %s33, 1
        %s575 = scalar_select %p574, %s33, 1
        %p576 = scmp.lt.s32.totalorder %s34, 0
        %s577 = scalar_select %p576, %s34, 0
        %s578 = sadd.s32 %s577, %s575
        %s579 = smul.addr %s578, 8
        %s580 = scalar_lea.vmem %s0, %s579
      $region52: #{xey_transformer_layer.5} parent=47 // pred_fallthru
        _
      // Predicated region
      $region53: #{xey_transformer_layer.5} parent=47 // pred_check
        %p581 = pneg %p86
      $region54: #{xey_transformer_layer.5} parent=47 // pred_check_branch
        %583 = sbr.rel (%p581) target = $region56
      $region55: #{xey_transformer_layer.5} parent=47 // pred_region
        %p584 = scmp.lt.s32.totalorder %s33, 1
        %s585 = scalar_select %p584, %s33, 1
        %s586 = smul.addr %s585, 8
        %s587 = scalar_lea.vmem %s1, %s586
      $region56: #{xey_transformer_layer.5} parent=47 // pred_fallthru
        _
      // Predicated region
      $region57: #{xey_transformer_layer.5} parent=47 // pred_check
        %p588 = pneg %p112
      $region58: #{xey_transformer_layer.5} parent=47 // pred_check_branch
        %590 = sbr.rel (%p588) target = $region60
      $region59: #{xey_transformer_layer.5} parent=47 // pred_region
        %p591 = scmp.lt.s32.totalorder %s33, 1
        %s592 = scalar_select %p591, %s33, 1
        %s593 = smul.addr %s592, 8
        %s594 = scalar_lea.vmem %s2, %s593
      $region60: #{xey_transformer_layer.5} parent=47 // pred_fallthru
        _
      // Predicated region
      $region61: #{xey_transformer_layer.5} parent=47 // pred_check
        %p595 = pneg %p140
      $region62: #{xey_transformer_layer.5} parent=47 // pred_check_branch
        %597 = sbr.rel (%p595) target = $region64
      $region63: #{xey_transformer_layer.5} parent=47 // pred_region
        %s598 = smul.u32 8, %s34
        %p599 = scmp.lt.s32.totalorder %s33, 1
        %s600 = scalar_select %p599, %s33, 1
        %p601 = scmp.lt.s32.totalorder %s598, 7
        %s602 = scalar_select %p601, %s598, 7
        %s603 = smul.addr %s600, 8
        %s604 = sadd.s32 %s602, %s603
        %s605 = smul.addr %s604, 8
        %s606 = scalar_lea.vmem %s3, %s605
        %s607 = smul.u32 8, %s34
      $region64: #{xey_transformer_layer.5} parent=47 // pred_fallthru
        _
      // Predicated region
      $region65: #{xey_transformer_layer.5} parent=47 // pred_check
        %p608 = pneg %p168
      $region66: #{xey_transformer_layer.5} parent=47 // pred_check_branch
        %610 = sbr.rel (%p608) target = $region68
      $region67: #{xey_transformer_layer.5} parent=47 // pred_region
        %p611 = scmp.lt.s32.totalorder %s33, 1
        %s612 = scalar_select %p611, %s33, 1
        %p613 = scmp.lt.s32.totalorder %s34, 0
        %s614 = scalar_select %p613, %s34, 0
        %s615 = sadd.s32 %s614, %s612
        %s616 = smul.addr %s615, 8
        %s617 = scalar_lea.vmem %s4, %s616
      $region68: #{xey_transformer_layer.5} parent=47 // pred_fallthru
        _
      // Predicated region
      $region69: #{xey_transformer_layer.5} parent=47 // pred_check
        %p618 = pneg %p194
      $region70: #{xey_transformer_layer.5} parent=47 // pred_check_branch
        %620 = sbr.rel (%p618) target = $region72
      $region71: #{xey_transformer_layer.5} parent=47 // pred_region
        %p621 = scmp.lt.s32.totalorder %s33, 1
        %s622 = scalar_select %p621, %s33, 1
        %s623 = smul.addr %s622, 8
        %s624 = scalar_lea.vmem %s5, %s623
      $region72: #{xey_transformer_layer.5} parent=47 // pred_fallthru
        _
      // Predicated region
      $region73: #{xey_transformer_layer.5} parent=47 // pred_check
        %p625 = pneg %p220
      $region74: #{xey_transformer_layer.5} parent=47 // pred_check_branch
        %627 = sbr.rel (%p625) target = $region76
      $region75: #{xey_transformer_layer.5} parent=47 // pred_region
        %p628 = scmp.lt.s32.totalorder %s33, 1
        %s629 = scalar_select %p628, %s33, 1
        %s630 = scalar_lea.vmem %s6, %s629
      $region76: #{xey_transformer_layer.5} parent=47 // pred_fallthru
        _
      // Predicated region
      $region77: #{xey_transformer_layer.5} parent=47 // pred_check
        %p631 = pneg %p246
      $region78: #{xey_transformer_layer.5} parent=47 // pred_check_branch
        %633 = sbr.rel (%p631) target = $region80
      $region79: #{xey_transformer_layer.5} parent=47 // pred_region
        %p634 = scmp.lt.s32.totalorder %s33, 1
        %s635 = scalar_select %p634, %s33, 1
        %s636 = scalar_lea.vmem %s7, %s635
      $region80: #{xey_transformer_layer.5} parent=47 // pred_fallthru
        _
      // Predicated region
      $region81: #{xey_transformer_layer.5} parent=47 // pred_check
        %p637 = pneg %p272
      $region82: #{xey_transformer_layer.5} parent=47 // pred_check_branch
        %639 = sbr.rel (%p637) target = $region84
      $region83: #{xey_transformer_layer.5} parent=47 // pred_region
        %p640 = scmp.lt.s32.totalorder %s33, 1
        %s641 = scalar_select %p640, %s33, 1
        %s642 = scalar_lea.vmem %s8, %s641
      $region84: #{xey_transformer_layer.5} parent=47 // pred_fallthru
        _
      // Predicated region
      $region85: #{xey_transformer_layer.5} parent=47 // pred_check
        %p643 = pneg %p298
      $region86: #{xey_transformer_layer.5} parent=47 // pred_check_branch
        %645 = sbr.rel (%p643) target = $region88
      $region87: #{xey_transformer_layer.5} parent=47 // pred_region
        %p646 = scmp.lt.s32.totalorder %s33, 1
        %s647 = scalar_select %p646, %s33, 1
        %s648 = scalar_lea.vmem %s9, %s647
      $region88: #{xey_transformer_layer.5} parent=47 // pred_fallthru
        _
    $region48: #{xey_transformer_layer.5} parent=5 // pred_fallthru
      _
    %p649 = scmp.le.s32.totalorder 1, %s26
    %p650 = scmp.lt.s32.totalorder %s26, 3
    %p651 = pnand %p649, %p650
    %p652 = pneg %p651
    // Predicated region
    $region89: #{xey_transformer_layer.5} parent=5 // pred_check
      _
    $region90: #{xey_transformer_layer.5} parent=5 // pred_check_branch
      %654 = sbr.rel (%p651) target = $region92
    $region91: #{xey_transformer_layer.5} parent=5 // pred_region
      %s655 = ssub.s32 %s26, 1
      %p656 = scmp.lt.s32.totalorder %s35, 1
      %s657 = scalar_select %p656, %s35, 1
      %p658 = scmp.lt.s32.totalorder %s36, 0
      %s659 = scalar_select %p658, %s36, 0
      %s660 = sadd.s32 %s659, %s657
      %s661 = smul.addr %s660, 8
      %s662 = scalar_lea.vmem %s0, %s661
      %p663 = pneg %p66
      %p664 = pneg %p63
      %p665 = scmp.lt.s32.totalorder %s35, 1
      %s666 = scalar_select %p665, %s35, 1
      %s667 = smul.addr %s666, 8
      %s668 = scalar_lea.vmem %s1, %s667
      %p669 = pneg %p92
      %p670 = pneg %p89
      %p671 = scmp.lt.s32.totalorder %s35, 1
      %s672 = scalar_select %p671, %s35, 1
      %s673 = smul.addr %s672, 8
      %s674 = scalar_lea.vmem %s2, %s673
      %p675 = pneg %p118
      %p676 = pneg %p115
      %s677 = smul.u32 8, %s36
      %p678 = scmp.lt.s32.totalorder %s35, 1
      %s679 = scalar_select %p678, %s35, 1
      %p680 = scmp.lt.s32.totalorder %s677, 7
      %s681 = scalar_select %p680, %s677, 7
      %s682 = smul.addr %s679, 8
      %s683 = sadd.s32 %s681, %s682
      %s684 = smul.addr %s683, 8
      %s685 = scalar_lea.vmem %s3, %s684
      %p686 = pneg %p146
      %p687 = pneg %p143
      %p688 = scmp.lt.s32.totalorder %s35, 1
      %s689 = scalar_select %p688, %s35, 1
      %p690 = scmp.lt.s32.totalorder %s36, 0
      %s691 = scalar_select %p690, %s36, 0
      %s692 = sadd.s32 %s691, %s689
      %s693 = smul.addr %s692, 8
      %s694 = scalar_lea.vmem %s4, %s693
      %p695 = pneg %p174
      %p696 = pneg %p171
      %p697 = scmp.lt.s32.totalorder %s35, 1
      %s698 = scalar_select %p697, %s35, 1
      %s699 = smul.addr %s698, 8
      %s700 = scalar_lea.vmem %s5, %s699
      %p701 = pneg %p200
      %p702 = pneg %p197
      %p703 = scmp.lt.s32.totalorder %s35, 1
      %s704 = scalar_select %p703, %s35, 1
      %s705 = scalar_lea.vmem %s6, %s704
      %p706 = pneg %p226
      %p707 = pneg %p223
      %p708 = scmp.lt.s32.totalorder %s35, 1
      %s709 = scalar_select %p708, %s35, 1
      %s710 = scalar_lea.vmem %s7, %s709
      %p711 = pneg %p252
      %p712 = pneg %p249
      %p713 = scmp.lt.s32.totalorder %s35, 1
      %s714 = scalar_select %p713, %s35, 1
      %s715 = scalar_lea.vmem %s8, %s714
      %p716 = pneg %p278
      %p717 = pneg %p275
      %p718 = scmp.lt.s32.totalorder %s35, 1
      %s719 = scalar_select %p718, %s35, 1
      %s720 = scalar_lea.vmem %s9, %s719
      %p721 = pneg %p304
      %p722 = pneg %p301
      %p723 = pneg %p325
      %p724 = pneg %p322
      %p725 = pneg %p346
      %p726 = pneg %p343
      %p727 = pneg %p367
      %p728 = pneg %p364
      %p729 = pneg %p388
      %p730 = pneg %p385
      %p731 = pneg %p409
      %p732 = pneg %p406
      %p733 = pneg %p430
      %p734 = pneg %p427
      %p735 = pneg %p451
      %p736 = pneg %p448
      %p737 = pneg %p472
      %p738 = pneg %p469
      %p739 = pneg %p500
      %p740 = pneg %p497
      %s741 = smul.u32 8, %s36
      %p742 = scmp.lt.s32.totalorder %s35, 1
      %s743 = scalar_select %p742, %s35, 1
      %p744 = scmp.lt.s32.totalorder %s741, 7
      %s745 = scalar_select %p744, %s741, 7
      %s746 = smul.addr %s743, 8
      %s747 = sadd.s32 %s745, %s746
      %s748 = smul.addr %s747, 8
      %s749 = scalar_lea.vmem %s18, %s748
      %p750 = pneg %p528
      %p751 = pneg %p525
      %p752 = scmp.lt.s32.totalorder %s35, 1
      %s753 = scalar_select %p752, %s35, 1
      %p754 = scmp.lt.s32.totalorder %s36, 0
      %s755 = scalar_select %p754, %s36, 0
      %s756 = sadd.s32 %s755, %s753
      %s757 = smul.addr %s756, 8
      %s758 = scalar_lea.vmem %s19, %s757
      %p759 = scmp.lt.s32.totalorder %s35, 1
      %s760 = scalar_select %p759, %s35, 1
      %p761 = scmp.lt.s32.totalorder %s36, 0
      %s762 = scalar_select %p761, %s36, 0
      %s763 = sadd.s32 %s762, %s760
      %s764 = smul.addr %s763, 8
      %s765 = scalar_lea.vmem %s0, %s764
      %p766 = scmp.lt.s32.totalorder %s35, 1
      %s767 = scalar_select %p766, %s35, 1
      %s768 = smul.addr %s767, 8
      %s769 = scalar_lea.vmem %s1, %s768
      %p770 = scmp.lt.s32.totalorder %s35, 1
      %s771 = scalar_select %p770, %s35, 1
      %s772 = smul.addr %s771, 8
      %s773 = scalar_lea.vmem %s2, %s772
      %s774 = smul.u32 8, %s36
      %p775 = scmp.lt.s32.totalorder %s35, 1
      %s776 = scalar_select %p775, %s35, 1
      %p777 = scmp.lt.s32.totalorder %s774, 7
      %s778 = scalar_select %p777, %s774, 7
      %s779 = smul.addr %s776, 8
      %s780 = sadd.s32 %s778, %s779
      %s781 = smul.addr %s780, 8
      %s782 = scalar_lea.vmem %s3, %s781
      %s783 = smul.u32 8, %s36
      %p784 = scmp.lt.s32.totalorder %s35, 1
      %s785 = scalar_select %p784, %s35, 1
      %p786 = scmp.lt.s32.totalorder %s36, 0
      %s787 = scalar_select %p786, %s36, 0
      %s788 = sadd.s32 %s787, %s785
      %s789 = smul.addr %s788, 8
      %s790 = scalar_lea.vmem %s4, %s789
      %p791 = scmp.lt.s32.totalorder %s35, 1
      %s792 = scalar_select %p791, %s35, 1
      %s793 = smul.addr %s792, 8
      %s794 = scalar_lea.vmem %s5, %s793
      %p795 = scmp.lt.s32.totalorder %s35, 1
      %s796 = scalar_select %p795, %s35, 1
      %s797 = scalar_lea.vmem %s6, %s796
      %p798 = scmp.lt.s32.totalorder %s35, 1
      %s799 = scalar_select %p798, %s35, 1
      %s800 = scalar_lea.vmem %s7, %s799
      %p801 = scmp.lt.s32.totalorder %s35, 1
      %s802 = scalar_select %p801, %s35, 1
      %s803 = scalar_lea.vmem %s8, %s802
      %p804 = scmp.lt.s32.totalorder %s35, 1
      %s805 = scalar_select %p804, %s35, 1
      %s806 = scalar_lea.vmem %s9, %s805
      %s807 = smul.u32 8, %s36
      %p808 = scmp.lt.s32.totalorder %s35, 1
      %s809 = scalar_select %p808, %s35, 1
      %p810 = scmp.lt.s32.totalorder %s807, 7
      %s811 = scalar_select %p810, %s807, 7
      %s812 = smul.addr %s809, 8
      %s813 = sadd.s32 %s811, %s812
      %s814 = smul.addr %s813, 8
      %s815 = scalar_lea.vmem %s18, %s814
      %s816 = smul.u32 8, %s36
      %p817 = scmp.lt.s32.totalorder %s35, 1
      %s818 = scalar_select %p817, %s35, 1
      %p819 = scmp.lt.s32.totalorder %s36, 0
      %s820 = scalar_select %p819, %s36, 0
      %s821 = sadd.s32 %s820, %s818
      %s822 = smul.addr %s821, 8
      %s823 = scalar_lea.vmem %s19, %s822
      %v824 = vld [vmem:[%s790] sm:$0xff]
      %v825 = vld [vmem:[%s794] sm:$0xff]
      %v826 = vld [vmem:[%s765] sm:$0xff]
      %828 = vset.pattern.permute.xlu0 0
      %829 = vperm.xlu0 %828, %v824
      %v830 = vpop.permute.xlu0 %829
      %v832 = vmul.f32 %v826, %v830
      %v833 = vld [vmem:[%s769] sm:$0xff]
      %835 = vset.pattern.permute.xlu0 0
      %836 = vperm.xlu0 %835, %v825
      %v837 = vpop.permute.xlu0 %836
      %v839 = vmul.f32 %v833, %v837
      %v840 = vld [vmem:[%s773] sm:$0xff]
      %v841 = vmul.f32 %v840, %v837
      %v842 = vcombine.high %v824, %v824
      %v844 = vunpack.c.l.s4 1966171168
      %v845 = vunpack.c.0.s8 %v844
      %v846 = vlaneseq
      %v847 = vshrl.u32 %v846, 7
      %v848 = vsub.s32 %v845, %v847
      %v849 = vrot.slane %v824, %v848
      %v851 = vunpack.c.l.s4 1966171168
      %v852 = vunpack.c.0.s8 %v851
      %v853 = vlaneseq
      %v854 = vshrl.u32 %v853, 7
      %v855 = vsub.s32 %v852, %v854
      %v856 = vrot.slane %v842, %v855
      %v857 = vcombine.high %v849, %v849
      %v858 = vcombine.high %v856, %v856
      %v860 = vunpack.c.l.s4 1966171168
      %v861 = vunpack.c.0.s8 %v860
      %v862 = vlaneseq
      %v863 = vshrl.u32 %v862, 7
      %v864 = vsub.s32 %v861, %v863
      %v865 = vrot.slane %v849, %v864
      %v867 = vunpack.c.l.s4 1966171168
      %v868 = vunpack.c.0.s8 %v867
      %v869 = vlaneseq
      %v870 = vshrl.u32 %v869, 7
      %v871 = vsub.s32 %v868, %v870
      %v872 = vrot.slane %v856, %v871
      %v874 = vunpack.c.l.s4 1966171168
      %v875 = vunpack.c.0.s8 %v874
      %v876 = vlaneseq
      %v877 = vshrl.u32 %v876, 7
      %v878 = vsub.s32 %v875, %v877
      %v879 = vrot.slane %v857, %v878
      %v881 = vunpack.c.l.s4 1966171168
      %v882 = vunpack.c.0.s8 %v881
      %v883 = vlaneseq
      %v884 = vshrl.u32 %v883, 7
      %v885 = vsub.s32 %v882, %v884
      %v886 = vrot.slane %v858, %v885
      %v887 = vcombine.high %v865, %v865
      %v888 = vcombine.high %v872, %v872
      %v889 = vcombine.high %v879, %v879
      %v890 = vcombine.high %v886, %v886
      %v891 = vlaneseq
      %v892 = vshrl.u32 %v891, 7
      %v893 = vsub.s32 0, %v892
      %v894 = vrot.slane %v865, %v893
      %v895 = vlaneseq
      %v896 = vshrl.u32 %v895, 7
      %v897 = vsub.s32 0, %v896
      %v898 = vrot.slane %v879, %v897
      %v899 = vlaneseq
      %v900 = vshrl.u32 %v899, 7
      %v901 = vsub.s32 0, %v900
      %v902 = vrot.slane %v887, %v901
      %v903 = vlaneseq
      %v904 = vshrl.u32 %v903, 7
      %v905 = vsub.s32 0, %v904
      %v906 = vrot.slane %v889, %v905
      %v907 = vlaneseq
      %v908 = vshrl.u32 %v907, 7
      %v909 = vsub.s32 0, %v908
      %v910 = vrot.slane %v872, %v909
      %v911 = vlaneseq
      %v912 = vshrl.u32 %v911, 7
      %v913 = vsub.s32 0, %v912
      %v914 = vrot.slane %v886, %v913
      %v915 = vlaneseq
      %v916 = vshrl.u32 %v915, 7
      %v917 = vsub.s32 0, %v916
      %v918 = vrot.slane %v888, %v917
      %v919 = vlaneseq
      %v920 = vshrl.u32 %v919, 7
      %v921 = vsub.s32 0, %v920
      %v922 = vrot.slane %v890, %v921
      %v931 = vmul.f32 %v894, %v825
      %v932 = vmul.f32 %v898, %v825
      %v933 = vmul.f32 %v902, %v825
      %v934 = vmul.f32 %v906, %v825
      %v935 = vmul.f32 %v910, %v825
      %v936 = vmul.f32 %v914, %v825
      %v937 = vmul.f32 %v918, %v825
      %v938 = vmul.f32 %v922, %v825
      %v939 = vld [vmem:[%s782] sm:$0xff]
      %v940 = vld [vmem:[%s782 + $0x8] sm:$0xff]
      %v941 = vld [vmem:[%s782 + $0x10] sm:$0xff]
      %v942 = vld [vmem:[%s782 + $0x18] sm:$0xff]
      %v943 = vld [vmem:[%s782 + $0x20] sm:$0xff]
      %v944 = vld [vmem:[%s782 + $0x28] sm:$0xff]
      %v945 = vld [vmem:[%s782 + $0x30] sm:$0xff]
      %v946 = vld [vmem:[%s782 + $0x38] sm:$0xff]
      %v947 = vld [vmem:[%s10] sm:$0xff]
      %v948 = vld [vmem:[%s10 + $0x8] sm:$0xff]
      %v949 = vld [vmem:[%s11] sm:$0x1]
      %v951 = vlaneseq
      %v952 = vshrl.u32 %v951, 7
      %v953 = vsub.s32 0, %v952
      %v954 = vrot.slane %v949, %v953
      %vm956 = vcmask 130048
      %v958 = vsel %vm956, %v939, 0
      %v961 = vsel %vm956, %v940, 0
      %v964 = vsel %vm956, %v941, 0
      %v967 = vsel %vm956, %v942, 0
      %v970 = vsel %vm956, %v943, 0
      %v973 = vsel %vm956, %v944, 0
      %v976 = vsel %vm956, %v945, 0
      %v979 = vsel %vm956, %v946, 0
      %981 = vmatprep.subr.mxu0 0.0
      %982 = vmatpush1.msra.mxu0 %v947
      %983 = vmatprep.subr.mxu0 0.0
      %984 = vmatpush1.msra.mxu0 %v948
      %985 = vmatprep.subr.mxu0 0.0
      %986 = vmatpush1.msra.mxu0 0.0
      %987 = vmatprep.subr.mxu0 0.0
      %988 = vmatpush1.msra.mxu0 0.0
      %989 = vmatprep.subr.mxu0 0.0
      %990 = vmatpush1.msra.mxu0 0.0
      %991 = vmatprep.subr.mxu0 0.0
      %992 = vmatpush1.msra.mxu0 0.0
      %993 = vmatprep.subr.mxu0 0.0
      %994 = vmatpush1.msra.mxu0 0.0
      %995 = vmatprep.subr.mxu0 0.0
      %996 = vmatpush1.msra.mxu0 0.0
      %997 = vmatprep.subr.mxu0 0.0
      %998 = vmatpush1.msra.mxu0 0.0
      %999 = vmatprep.subr.mxu0 0.0
      %1000 = vmatpush1.msra.mxu0 0.0
      %1001 = vmatprep.subr.mxu0 0.0
      %1002 = vmatpush1.msra.mxu0 0.0
      %1003 = vmatprep.subr.mxu0 0.0
      %1004 = vmatpush1.msra.mxu0 0.0
      %1005 = vmatprep.subr.mxu0 0.0
      %1006 = vmatpush1.msra.mxu0 0.0
      %1007 = vmatprep.subr.mxu0 0.0
      %1008 = vmatpush1.msra.mxu0 0.0
      %1009 = vmatprep.subr.mxu0 0.0
      %1010 = vmatpush1.msra.mxu0 0.0
      %1011 = vmatprep.subr.mxu0 0.0
      %1012 = vmatpush1.msra.mxu0 0.0
      %1013 = vmatprep.subr.mxu0 0.0
      %1014 = vmatpush1.msra.mxu0 0.0
      %1015 = vmatprep.subr.mxu0 0.0
      %1016 = vmatpush1.msra.mxu0 0.0
      %1017 = vmatprep.subr.mxu0 0.0
      %1018 = vmatpush1.msra.mxu0 0.0
      %1019 = vmatprep.subr.mxu0 0.0
      %1020 = vmatpush1.msra.mxu0 0.0
      %1021 = vmatprep.subr.mxu0 0.0
      %1022 = vmatpush1.msra.mxu0 0.0
      %1023 = vmatprep.subr.mxu0 0.0
      %1024 = vmatpush1.msra.mxu0 0.0
      %1025 = vmatprep.subr.mxu0 0.0
      %1026 = vmatpush1.msra.mxu0 0.0
      %1027 = vmatprep.subr.mxu0 0.0
      %1028 = vmatpush1.msra.mxu0 0.0
      %1029 = vmatprep.subr.mxu0 0.0
      %1030 = vmatpush1.msra.mxu0 0.0
      %1031 = vmatprep.subr.mxu0 0.0
      %1032 = vmatpush1.msra.mxu0 0.0
      %1033 = vmatprep.subr.mxu0 0.0
      %1034 = vmatpush1.msra.mxu0 0.0
      %1035 = vmatprep.subr.mxu0 0.0
      %1036 = vmatpush1.msra.mxu0 0.0
      %1037 = vmatprep.subr.mxu0 0.0
      %1038 = vmatpush1.msra.mxu0 0.0
      %1039 = vmatprep.subr.mxu0 0.0
      %1040 = vmatpush1.msra.mxu0 0.0
      %1041 = vmatprep.subr.mxu0 0.0
      %1042 = vmatpush1.msra.mxu0 0.0
      %1043 = vmatprep.subr.mxu0 0.0
      %1044 = vmatpush1.msra.mxu0 0.0
      %1045 = vmatprep.mubr.f32.mxu0 0.0
      %1046 = vmatmul.mubr.f32.gmra.mrb[0].mxu0 %v958
      %v1047 = vpop.f32.mrb[0].mxu0
      %v1048 = vadd.f32 %v954, %v1047
      %v1049 = vpop.f32.mrb[0].mxu0
      %1050 = vmatprep.mubr.f32.mxu0 0.0
      %1051 = vmatmul.mubr.f32.gmra.mrb[0].mxu0 %v961
      %v1052 = vpop.f32.mrb[0].mxu0
      %v1053 = vadd.f32 %v954, %v1052
      %v1054 = vpop.f32.mrb[0].mxu0
      %1055 = vmatprep.mubr.f32.mxu0 0.0
      %1056 = vmatmul.mubr.f32.gmra.mrb[0].mxu0 %v964
      %v1057 = vpop.f32.mrb[0].mxu0
      %v1058 = vadd.f32 %v954, %v1057
      %v1059 = vpop.f32.mrb[0].mxu0
      %1060 = vmatprep.mubr.f32.mxu0 0.0
      %1061 = vmatmul.mubr.f32.gmra.mrb[0].mxu0 %v967
      %v1062 = vpop.f32.mrb[0].mxu0
      %v1063 = vadd.f32 %v954, %v1062
      %v1064 = vpop.f32.mrb[0].mxu0
      %1065 = vmatprep.mubr.f32.mxu0 0.0
      %1066 = vmatmul.mubr.f32.gmra.mrb[0].mxu0 %v970
      %v1067 = vpop.f32.mrb[0].mxu0
      %v1068 = vadd.f32 %v954, %v1067
      %v1069 = vpop.f32.mrb[0].mxu0
      %1070 = vmatprep.mubr.f32.mxu0 0.0
      %1071 = vmatmul.mubr.f32.gmra.mrb[0].mxu0 %v973
      %v1072 = vpop.f32.mrb[0].mxu0
      %v1073 = vadd.f32 %v954, %v1072
      %v1074 = vpop.f32.mrb[0].mxu0
      %1075 = vmatprep.mubr.f32.mxu0 0.0
      %1076 = vmatmul.mubr.f32.gmra.mrb[0].mxu0 %v976
      %v1077 = vpop.f32.mrb[0].mxu0
      %v1078 = vadd.f32 %v954, %v1077
      %v1079 = vpop.f32.mrb[0].mxu0
      %1080 = vmatprep.mubr.f32.mxu0 0.0
      %1081 = vmatmul.mubr.f32.gmra.mrb[0].mxu0 %v979
      %v1082 = vpop.f32.mrb[0].mxu0
      %v1083 = vadd.f32 %v954, %v1082
      %v1084 = vpop.f32.mrb[0].mxu0
      %1085 = vdwg.mxu0
      %1087 = vset.pattern.permute.xlu0 0
      %1088 = vperm.xlu0 %1087, %v931
      %v1089 = vpop.permute.xlu0 %1088
      %1092 = vset.pattern.permute.xlu0 0
      %1093 = vperm.xlu0 %1092, %v932
      %v1094 = vpop.permute.xlu0 %1093
      %1097 = vset.pattern.permute.xlu0 0
      %1098 = vperm.xlu0 %1097, %v933
      %v1099 = vpop.permute.xlu0 %1098
      %1102 = vset.pattern.permute.xlu0 0
      %1103 = vperm.xlu0 %1102, %v934
      %v1104 = vpop.permute.xlu0 %1103
      %1107 = vset.pattern.permute.xlu0 0
      %1108 = vperm.xlu0 %1107, %v935
      %v1109 = vpop.permute.xlu0 %1108
      %1112 = vset.pattern.permute.xlu0 0
      %1113 = vperm.xlu0 %1112, %v936
      %v1114 = vpop.permute.xlu0 %1113
      %1117 = vset.pattern.permute.xlu0 0
      %1118 = vperm.xlu0 %1117, %v937
      %v1119 = vpop.permute.xlu0 %1118
      %1122 = vset.pattern.permute.xlu0 0
      %1123 = vperm.xlu0 %1122, %v938
      %v1124 = vpop.permute.xlu0 %1123
      %v1126 = vmul.f32 %v1048, %v1089
      %v1127 = vmul.f32 %v1053, %v1094
      %v1128 = vmul.f32 %v1058, %v1099
      %v1129 = vmul.f32 %v1063, %v1104
      %v1130 = vmul.f32 %v1068, %v1109
      %v1131 = vmul.f32 %v1073, %v1114
      %v1132 = vmul.f32 %v1078, %v1119
      %v1133 = vmul.f32 %v1083, %v1124
      %v1134 = vld [vmem:[%s12] sm:$0xff]
      %v1135 = vld [vmem:[%s12 + $0x8] sm:$0xff]
      %v1136 = vld [vmem:[%s13] sm:$0x1]
      %v1138 = vlaneseq
      %v1139 = vshrl.u32 %v1138, 7
      %v1140 = vsub.s32 0, %v1139
      %v1141 = vrot.slane %v1136, %v1140
      %1143 = vmatprep.subr.mxu0 0.0
      %1144 = vmatpush1.msra.mxu0 %v1134
      %1145 = vmatprep.subr.mxu0 0.0
      %1146 = vmatpush1.msra.mxu0 %v1135
      %1147 = vmatprep.subr.mxu0 0.0
      %1148 = vmatpush1.msra.mxu0 0.0
      %1149 = vmatprep.subr.mxu0 0.0
      %1150 = vmatpush1.msra.mxu0 0.0
      %1151 = vmatprep.subr.mxu0 0.0
      %1152 = vmatpush1.msra.mxu0 0.0
      %1153 = vmatprep.subr.mxu0 0.0
      %1154 = vmatpush1.msra.mxu0 0.0
      %1155 = vmatprep.subr.mxu0 0.0
      %1156 = vmatpush1.msra.mxu0 0.0
      %1157 = vmatprep.subr.mxu0 0.0
      %1158 = vmatpush1.msra.mxu0 0.0
      %1159 = vmatprep.subr.mxu0 0.0
      %1160 = vmatpush1.msra.mxu0 0.0
      %1161 = vmatprep.subr.mxu0 0.0
      %1162 = vmatpush1.msra.mxu0 0.0
      %1163 = vmatprep.subr.mxu0 0.0
      %1164 = vmatpush1.msra.mxu0 0.0
      %1165 = vmatprep.subr.mxu0 0.0
      %1166 = vmatpush1.msra.mxu0 0.0
      %1167 = vmatprep.subr.mxu0 0.0
      %1168 = vmatpush1.msra.mxu0 0.0
      %1169 = vmatprep.subr.mxu0 0.0
      %1170 = vmatpush1.msra.mxu0 0.0
      %1171 = vmatprep.subr.mxu0 0.0
      %1172 = vmatpush1.msra.mxu0 0.0
      %1173 = vmatprep.subr.mxu0 0.0
      %1174 = vmatpush1.msra.mxu0 0.0
      %1175 = vmatprep.subr.mxu0 0.0
      %1176 = vmatpush1.msra.mxu0 0.0
      %1177 = vmatprep.subr.mxu0 0.0
      %1178 = vmatpush1.msra.mxu0 0.0
      %1179 = vmatprep.subr.mxu0 0.0
      %1180 = vmatpush1.msra.mxu0 0.0
      %1181 = vmatprep.subr.mxu0 0.0
      %1182 = vmatpush1.msra.mxu0 0.0
      %1183 = vmatprep.subr.mxu0 0.0
      %1184 = vmatpush1.msra.mxu0 0.0
      %1185 = vmatprep.subr.mxu0 0.0
      %1186 = vmatpush1.msra.mxu0 0.0
      %1187 = vmatprep.subr.mxu0 0.0
      %1188 = vmatpush1.msra.mxu0 0.0
      %1189 = vmatprep.subr.mxu0 0.0
      %1190 = vmatpush1.msra.mxu0 0.0
      %1191 = vmatprep.subr.mxu0 0.0
      %1192 = vmatpush1.msra.mxu0 0.0
      %1193 = vmatprep.subr.mxu0 0.0
      %1194 = vmatpush1.msra.mxu0 0.0
      %1195 = vmatprep.subr.mxu0 0.0
      %1196 = vmatpush1.msra.mxu0 0.0
      %1197 = vmatprep.subr.mxu0 0.0
      %1198 = vmatpush1.msra.mxu0 0.0
      %1199 = vmatprep.subr.mxu0 0.0
      %1200 = vmatpush1.msra.mxu0 0.0
      %1201 = vmatprep.subr.mxu0 0.0
      %1202 = vmatpush1.msra.mxu0 0.0
      %1203 = vmatprep.subr.mxu0 0.0
      %1204 = vmatpush1.msra.mxu0 0.0
      %1205 = vmatprep.subr.mxu0 0.0
      %1206 = vmatpush1.msra.mxu0 0.0
      %1207 = vmatprep.mubr.f32.mxu0 0.0
      %1208 = vmatmul.mubr.f32.gmra.mrb[0].mxu0 %v958
      %v1209 = vpop.f32.mrb[0].mxu0
      %v1210 = vadd.f32 %v1141, %v1209
      %v1211 = vpop.f32.mrb[0].mxu0
      %1212 = vmatprep.mubr.f32.mxu0 0.0
      %1213 = vmatmul.mubr.f32.gmra.mrb[0].mxu0 %v961
      %v1214 = vpop.f32.mrb[0].mxu0
      %v1215 = vadd.f32 %v1141, %v1214
      %v1216 = vpop.f32.mrb[0].mxu0
      %1217 = vmatprep.mubr.f32.mxu0 0.0
      %1218 = vmatmul.mubr.f32.gmra.mrb[0].mxu0 %v964
      %v1219 = vpop.f32.mrb[0].mxu0
      %v1220 = vadd.f32 %v1141, %v1219
      %v1221 = vpop.f32.mrb[0].mxu0
      %1222 = vmatprep.mubr.f32.mxu0 0.0
      %1223 = vmatmul.mubr.f32.gmra.mrb[0].mxu0 %v967
      %v1224 = vpop.f32.mrb[0].mxu0
      %v1225 = vadd.f32 %v1141, %v1224
      %v1226 = vpop.f32.mrb[0].mxu0
      %1227 = vmatprep.mubr.f32.mxu0 0.0
      %1228 = vmatmul.mubr.f32.gmra.mrb[0].mxu0 %v970
      %v1229 = vpop.f32.mrb[0].mxu0
      %v1230 = vadd.f32 %v1141, %v1229
      %v1231 = vpop.f32.mrb[0].mxu0
      %1232 = vmatprep.mubr.f32.mxu0 0.0
      %1233 = vmatmul.mubr.f32.gmra.mrb[0].mxu0 %v973
      %v1234 = vpop.f32.mrb[0].mxu0
      %v1235 = vadd.f32 %v1141, %v1234
      %v1236 = vpop.f32.mrb[0].mxu0
      %1237 = vmatprep.mubr.f32.mxu0 0.0
      %1238 = vmatmul.mubr.f32.gmra.mrb[0].mxu0 %v976
      %v1239 = vpop.f32.mrb[0].mxu0
      %v1240 = vadd.f32 %v1141, %v1239
      %v1241 = vpop.f32.mrb[0].mxu0
      %1242 = vmatprep.mubr.f32.mxu0 0.0
      %1243 = vmatmul.mubr.f32.gmra.mrb[0].mxu0 %v979
      %v1244 = vpop.f32.mrb[0].mxu0
      %v1245 = vadd.f32 %v1141, %v1244
      %v1246 = vpop.f32.mrb[0].mxu0
      %1247 = vdwg.mxu0
      %v1248 = vmul.f32 %v1210, %v1089
      %v1249 = vmul.f32 %v1215, %v1094
      %v1250 = vmul.f32 %v1220, %v1099
      %v1251 = vmul.f32 %v1225, %v1104
      %v1252 = vmul.f32 %v1230, %v1109
      %v1253 = vmul.f32 %v1235, %v1114
      %v1254 = vmul.f32 %v1240, %v1119
      %v1255 = vmul.f32 %v1245, %v1124
      %v1257 = vcombine.high %v832, %v832
      %v1259 = vunpack.c.l.s4 1966171168
      %v1260 = vunpack.c.0.s8 %v1259
      %v1261 = vlaneseq
      %v1262 = vshrl.u32 %v1261, 7
      %v1263 = vsub.s32 %v1260, %v1262
      %v1264 = vrot.slane %v832, %v1263
      %v1266 = vunpack.c.l.s4 1966171168
      %v1267 = vunpack.c.0.s8 %v1266
      %v1268 = vlaneseq
      %v1269 = vshrl.u32 %v1268, 7
      %v1270 = vsub.s32 %v1267, %v1269
      %v1271 = vrot.slane %v1257, %v1270
      %v1272 = vcombine.high %v1264, %v1264
      %v1273 = vcombine.high %v1271, %v1271
      %v1275 = vunpack.c.l.s4 1966171168
      %v1276 = vunpack.c.0.s8 %v1275
      %v1277 = vlaneseq
      %v1278 = vshrl.u32 %v1277, 7
      %v1279 = vsub.s32 %v1276, %v1278
      %v1280 = vrot.slane %v1264, %v1279
      %v1282 = vunpack.c.l.s4 1966171168
      %v1283 = vunpack.c.0.s8 %v1282
      %v1284 = vlaneseq
      %v1285 = vshrl.u32 %v1284, 7
      %v1286 = vsub.s32 %v1283, %v1285
      %v1287 = vrot.slane %v1271, %v1286
      %v1289 = vunpack.c.l.s4 1966171168
      %v1290 = vunpack.c.0.s8 %v1289
      %v1291 = vlaneseq
      %v1292 = vshrl.u32 %v1291, 7
      %v1293 = vsub.s32 %v1290, %v1292
      %v1294 = vrot.slane %v1272, %v1293
      %v1296 = vunpack.c.l.s4 1966171168
      %v1297 = vunpack.c.0.s8 %v1296
      %v1298 = vlaneseq
      %v1299 = vshrl.u32 %v1298, 7
      %v1300 = vsub.s32 %v1297, %v1299
      %v1301 = vrot.slane %v1273, %v1300
      %v1302 = vcombine.high %v1280, %v1280
      %v1303 = vcombine.high %v1287, %v1287
      %v1304 = vcombine.high %v1294, %v1294
      %v1305 = vcombine.high %v1301, %v1301
      %v1306 = vlaneseq
      %v1307 = vshrl.u32 %v1306, 7
      %v1308 = vsub.s32 0, %v1307
      %v1309 = vrot.slane %v1280, %v1308
      %v1310 = vlaneseq
      %v1311 = vshrl.u32 %v1310, 7
      %v1312 = vsub.s32 0, %v1311
      %v1313 = vrot.slane %v1294, %v1312
      %v1314 = vlaneseq
      %v1315 = vshrl.u32 %v1314, 7
      %v1316 = vsub.s32 0, %v1315
      %v1317 = vrot.slane %v1302, %v1316
      %v1318 = vlaneseq
      %v1319 = vshrl.u32 %v1318, 7
      %v1320 = vsub.s32 0, %v1319
      %v1321 = vrot.slane %v1304, %v1320
      %v1322 = vlaneseq
      %v1323 = vshrl.u32 %v1322, 7
      %v1324 = vsub.s32 0, %v1323
      %v1325 = vrot.slane %v1287, %v1324
      %v1326 = vlaneseq
      %v1327 = vshrl.u32 %v1326, 7
      %v1328 = vsub.s32 0, %v1327
      %v1329 = vrot.slane %v1301, %v1328
      %v1330 = vlaneseq
      %v1331 = vshrl.u32 %v1330, 7
      %v1332 = vsub.s32 0, %v1331
      %v1333 = vrot.slane %v1303, %v1332
      %v1334 = vlaneseq
      %v1335 = vshrl.u32 %v1334, 7
      %v1336 = vsub.s32 0, %v1335
      %v1337 = vrot.slane %v1305, %v1336
      %v1346 = vmul.f32 %v1309, %v839
      %v1347 = vmul.f32 %v1313, %v839
      %v1348 = vmul.f32 %v1317, %v839
      %v1349 = vmul.f32 %v1321, %v839
      %v1350 = vmul.f32 %v1325, %v839
      %v1351 = vmul.f32 %v1329, %v839
      %v1352 = vmul.f32 %v1333, %v839
      %v1353 = vmul.f32 %v1337, %v839
      %v1354 = vmul.f32 %v1346, 0.35355338
      %v1355 = vmul.f32 %v1347, 0.35355338
      %v1356 = vmul.f32 %v1348, 0.35355338
      %v1357 = vmul.f32 %v1349, 0.35355338
      %v1358 = vmul.f32 %v1350, 0.35355338
      %v1359 = vmul.f32 %v1351, 0.35355338
      %v1360 = vmul.f32 %v1352, 0.35355338
      %v1361 = vmul.f32 %v1353, 0.35355338
      %v1362 = vadd.f32 %v1126, 1.0
      %v1363 = vadd.f32 %v1127, 1.0
      %v1364 = vadd.f32 %v1128, 1.0
      %v1365 = vadd.f32 %v1129, 1.0
      %v1366 = vadd.f32 %v1130, 1.0
      %v1367 = vadd.f32 %v1131, 1.0
      %v1368 = vadd.f32 %v1132, 1.0
      %v1369 = vadd.f32 %v1133, 1.0
      %v1370 = vmul.f32 %v1354, %v1362
      %v1371 = vmul.f32 %v1355, %v1363
      %v1372 = vmul.f32 %v1356, %v1364
      %v1373 = vmul.f32 %v1357, %v1365
      %v1374 = vmul.f32 %v1358, %v1366
      %v1375 = vmul.f32 %v1359, %v1367
      %v1376 = vmul.f32 %v1360, %v1368
      %v1377 = vmul.f32 %v1361, %v1369
      %v1378 = vadd.f32 %v1370, %v1248
      %v1379 = vadd.f32 %v1371, %v1249
      %v1380 = vadd.f32 %v1372, %v1250
      %v1381 = vadd.f32 %v1373, %v1251
      %v1382 = vadd.f32 %v1374, %v1252
      %v1383 = vadd.f32 %v1375, %v1253
      %v1384 = vadd.f32 %v1376, %v1254
      %v1385 = vadd.f32 %v1377, %v1255
      %v1386 = vld [vmem:[%s797] sm:$0x1]
      %v1387 = vld [vmem:[%s800] sm:$0x1]
      %v1389 = vlaneseq
      %v1390 = vshrl.u32 %v1389, 7
      %v1391 = vsub.s32 0, %v1390
      %v1392 = vrot.slane %v1387, %v1391
      %v1394 = vmul.f32 %v1392, %v1378
      %v1395 = vmul.f32 %v1392, %v1379
      %v1396 = vmul.f32 %v1392, %v1380
      %v1397 = vmul.f32 %v1392, %v1381
      %v1398 = vmul.f32 %v1392, %v1382
      %v1399 = vmul.f32 %v1392, %v1383
      %v1400 = vmul.f32 %v1392, %v1384
      %v1401 = vmul.f32 %v1392, %v1385
      %v1403 = vlaneseq
      %v1404 = vshrl.u32 %v1403, 7
      %v1405 = vsub.s32 0, %v1404
      %v1406 = vrot.slane %v1386, %v1405
      %v1408 = vadd.f32 %v1406, %v1394
      %v1409 = vadd.f32 %v1406, %v1395
      %v1410 = vadd.f32 %v1406, %v1396
      %v1411 = vadd.f32 %v1406, %v1397
      %v1412 = vadd.f32 %v1406, %v1398
      %v1413 = vadd.f32 %v1406, %v1399
      %v1414 = vadd.f32 %v1406, %v1400
      %v1415 = vadd.f32 %v1406, %v1401
      %v1416 = vld [vmem:[%s14] sm:$0xff]
      %v1417 = vld [vmem:[%s14 + $0x8] sm:$0xff]
      %v1418 = vld [vmem:[%s14 + $0x10] sm:$0xff]
      %v1419 = vld [vmem:[%s14 + $0x18] sm:$0xff]
      %v1420 = vld [vmem:[%s15] sm:$0x1]
      %v1422 = vlaneseq
      %v1423 = vshrl.u32 %v1422, 7
      %v1424 = vsub.s32 0, %v1423
      %v1425 = vrot.slane %v1420, %v1424
      %vm1427 = vcmask 261120
      %v1429 = vsel %vm1427, %v1408, 0
      %v1432 = vsel %vm1427, %v1409, 0
      %v1435 = vsel %vm1427, %v1410, 0
      %v1438 = vsel %vm1427, %v1411, 0
      %v1441 = vsel %vm1427, %v1412, 0
      %v1444 = vsel %vm1427, %v1413, 0
      %v1447 = vsel %vm1427, %v1414, 0
      %v1450 = vsel %vm1427, %v1415, 0
      %1452 = vmatprep.subr.mxu0 0.0
      %1453 = vmatpush1.msra.mxu0 %v1416
      %1454 = vmatprep.subr.mxu0 0.0
      %1455 = vmatpush1.msra.mxu0 %v1417
      %1456 = vmatprep.subr.mxu0 0.0
      %1457 = vmatpush1.msra.mxu0 %v1418
      %1458 = vmatprep.subr.mxu0 0.0
      %1459 = vmatpush1.msra.mxu0 %v1419
      %1460 = vmatprep.subr.mxu0 0.0
      %1461 = vmatpush1.msra.mxu0 0.0
      %1462 = vmatprep.subr.mxu0 0.0
      %1463 = vmatpush1.msra.mxu0 0.0
      %1464 = vmatprep.subr.mxu0 0.0
      %1465 = vmatpush1.msra.mxu0 0.0
      %1466 = vmatprep.subr.mxu0 0.0
      %1467 = vmatpush1.msra.mxu0 0.0
      %1468 = vmatprep.subr.mxu0 0.0
      %1469 = vmatpush1.msra.mxu0 0.0
      %1470 = vmatprep.subr.mxu0 0.0
      %1471 = vmatpush1.msra.mxu0 0.0
      %1472 = vmatprep.subr.mxu0 0.0
      %1473 = vmatpush1.msra.mxu0 0.0
      %1474 = vmatprep.subr.mxu0 0.0
      %1475 = vmatpush1.msra.mxu0 0.0
      %1476 = vmatprep.subr.mxu0 0.0
      %1477 = vmatpush1.msra.mxu0 0.0
      %1478 = vmatprep.subr.mxu0 0.0
      %1479 = vmatpush1.msra.mxu0 0.0
      %1480 = vmatprep.subr.mxu0 0.0
      %1481 = vmatpush1.msra.mxu0 0.0
      %1482 = vmatprep.subr.mxu0 0.0
      %1483 = vmatpush1.msra.mxu0 0.0
      %1484 = vmatprep.subr.mxu0 0.0
      %1485 = vmatpush1.msra.mxu0 0.0
      %1486 = vmatprep.subr.mxu0 0.0
      %1487 = vmatpush1.msra.mxu0 0.0
      %1488 = vmatprep.subr.mxu0 0.0
      %1489 = vmatpush1.msra.mxu0 0.0
      %1490 = vmatprep.subr.mxu0 0.0
      %1491 = vmatpush1.msra.mxu0 0.0
      %1492 = vmatprep.subr.mxu0 0.0
      %1493 = vmatpush1.msra.mxu0 0.0
      %1494 = vmatprep.subr.mxu0 0.0
      %1495 = vmatpush1.msra.mxu0 0.0
      %1496 = vmatprep.subr.mxu0 0.0
      %1497 = vmatpush1.msra.mxu0 0.0
      %1498 = vmatprep.subr.mxu0 0.0
      %1499 = vmatpush1.msra.mxu0 0.0
      %1500 = vmatprep.subr.mxu0 0.0
      %1501 = vmatpush1.msra.mxu0 0.0
      %1502 = vmatprep.subr.mxu0 0.0
      %1503 = vmatpush1.msra.mxu0 0.0
      %1504 = vmatprep.subr.mxu0 0.0
      %1505 = vmatpush1.msra.mxu0 0.0
      %1506 = vmatprep.subr.mxu0 0.0
      %1507 = vmatpush1.msra.mxu0 0.0
      %1508 = vmatprep.subr.mxu0 0.0
      %1509 = vmatpush1.msra.mxu0 0.0
      %1510 = vmatprep.subr.mxu0 0.0
      %1511 = vmatpush1.msra.mxu0 0.0
      %1512 = vmatprep.subr.mxu0 0.0
      %1513 = vmatpush1.msra.mxu0 0.0
      %1514 = vmatprep.subr.mxu0 0.0
      %1515 = vmatpush1.msra.mxu0 0.0
      %1516 = vmatprep.mubr.f32.mxu0 0.0
      %1517 = vmatmul.mubr.f32.gmra.mrb[0].mxu0 %v1429
      %v1518 = vpop.f32.mrb[0].mxu0
      %v1519 = vadd.f32 %v1425, %v1518
      %v1520 = vpop.f32.mrb[0].mxu0
      %1521 = vmatprep.mubr.f32.mxu0 0.0
      %1522 = vmatmul.mubr.f32.gmra.mrb[0].mxu0 %v1432
      %v1523 = vpop.f32.mrb[0].mxu0
      %v1524 = vadd.f32 %v1425, %v1523
      %v1525 = vpop.f32.mrb[0].mxu0
      %1526 = vmatprep.mubr.f32.mxu0 0.0
      %1527 = vmatmul.mubr.f32.gmra.mrb[0].mxu0 %v1435
      %v1528 = vpop.f32.mrb[0].mxu0
      %v1529 = vadd.f32 %v1425, %v1528
      %v1530 = vpop.f32.mrb[0].mxu0
      %1531 = vmatprep.mubr.f32.mxu0 0.0
      %1532 = vmatmul.mubr.f32.gmra.mrb[0].mxu0 %v1438
      %v1533 = vpop.f32.mrb[0].mxu0
      %v1534 = vadd.f32 %v1425, %v1533
      %v1535 = vpop.f32.mrb[0].mxu0
      %1536 = vmatprep.mubr.f32.mxu0 0.0
      %1537 = vmatmul.mubr.f32.gmra.mrb[0].mxu0 %v1441
      %v1538 = vpop.f32.mrb[0].mxu0
      %v1539 = vadd.f32 %v1425, %v1538
      %v1540 = vpop.f32.mrb[0].mxu0
      %1541 = vmatprep.mubr.f32.mxu0 0.0
      %1542 = vmatmul.mubr.f32.gmra.mrb[0].mxu0 %v1444
      %v1543 = vpop.f32.mrb[0].mxu0
      %v1544 = vadd.f32 %v1425, %v1543
      %v1545 = vpop.f32.mrb[0].mxu0
      %1546 = vmatprep.mubr.f32.mxu0 0.0
      %1547 = vmatmul.mubr.f32.gmra.mrb[0].mxu0 %v1447
      %v1548 = vpop.f32.mrb[0].mxu0
      %v1549 = vadd.f32 %v1425, %v1548
      %v1550 = vpop.f32.mrb[0].mxu0
      %1551 = vmatprep.mubr.f32.mxu0 0.0
      %1552 = vmatmul.mubr.f32.gmra.mrb[0].mxu0 %v1450
      %v1553 = vpop.f32.mrb[0].mxu0
      %v1554 = vadd.f32 %v1425, %v1553
      %v1555 = vpop.f32.mrb[0].mxu0
      %1556 = vdwg.mxu0
      %v1557 = vmul.f32 %v1519, %v1089
      %v1558 = vmul.f32 %v1524, %v1094
      %v1559 = vmul.f32 %v1529, %v1099
      %v1560 = vmul.f32 %v1534, %v1104
      %v1561 = vmul.f32 %v1539, %v1109
      %v1562 = vmul.f32 %v1544, %v1114
      %v1563 = vmul.f32 %v1549, %v1119
      %v1564 = vmul.f32 %v1554, %v1124
      %1565 = vst.msk [vmem:[%s815] sm:$0xff] %vm956, %v1557
      %1566 = vst.msk [vmem:[%s815 + $0x8] sm:$0xff] %vm956, %v1558
      %1567 = vst.msk [vmem:[%s815 + $0x10] sm:$0xff] %vm956, %v1559
      %1568 = vst.msk [vmem:[%s815 + $0x18] sm:$0xff] %vm956, %v1560
      %1569 = vst.msk [vmem:[%s815 + $0x20] sm:$0xff] %vm956, %v1561
      %1570 = vst.msk [vmem:[%s815 + $0x28] sm:$0xff] %vm956, %v1562
      %1571 = vst.msk [vmem:[%s815 + $0x30] sm:$0xff] %vm956, %v1563
      %1572 = vst.msk [vmem:[%s815 + $0x38] sm:$0xff] %vm956, %v1564
      %vm1573 = vcmp.gt.f32.partialorder %v825, 0.0
      %v1574 = vsel %vm1573, 1, 0
      %1575 = vset.pattern.permute.xlu0 0
      %1576 = vperm.xlu0 %1575, %v1574
      %v1577 = vpop.permute.xlu0 %1576
      %vm1578 = vcmp.eq.s32.totalorder %v1577, 1
      %v1579 = vsel %vm1578, %v1378, -1e+30
      %v1580 = vsel %vm1578, %v1379, -1e+30
      %v1581 = vsel %vm1578, %v1380, -1e+30
      %v1582 = vsel %vm1578, %v1381, -1e+30
      %v1583 = vsel %vm1578, %v1382, -1e+30
      %v1584 = vsel %vm1578, %v1383, -1e+30
      %v1585 = vsel %vm1578, %v1384, -1e+30
      %v1586 = vsel %vm1578, %v1385, -1e+30
      %v1587 = vsel %vm1427, %v1579, -inf
      %v1588 = vrot.slane %v1587, 4
      %v1589 = vmax.f32 %v1587, %v1588
      %v1590 = vrot.slane %v1589, 2
      %v1591 = vmax.f32 %v1589, %v1590
      %v1592 = vrot.slane %v1591, 1
      %v1593 = vmax.f32 %v1591, %v1592
      %v1594 = vsel %vm1427, %v1580, -inf
      %v1595 = vrot.slane %v1594, 4
      %v1596 = vmax.f32 %v1594, %v1595
      %v1597 = vrot.slane %v1596, 2
      %v1598 = vmax.f32 %v1596, %v1597
      %v1599 = vrot.slane %v1598, 1
      %v1600 = vmax.f32 %v1598, %v1599
      %v1601 = vsel %vm1427, %v1581, -inf
      %v1602 = vrot.slane %v1601, 4
      %v1603 = vmax.f32 %v1601, %v1602
      %v1604 = vrot.slane %v1603, 2
      %v1605 = vmax.f32 %v1603, %v1604
      %v1606 = vrot.slane %v1605, 1
      %v1607 = vmax.f32 %v1605, %v1606
      %v1608 = vsel %vm1427, %v1582, -inf
      %v1609 = vrot.slane %v1608, 4
      %v1610 = vmax.f32 %v1608, %v1609
      %v1611 = vrot.slane %v1610, 2
      %v1612 = vmax.f32 %v1610, %v1611
      %v1613 = vrot.slane %v1612, 1
      %v1614 = vmax.f32 %v1612, %v1613
      %v1615 = vsel %vm1427, %v1583, -inf
      %v1616 = vrot.slane %v1615, 4
      %v1617 = vmax.f32 %v1615, %v1616
      %v1618 = vrot.slane %v1617, 2
      %v1619 = vmax.f32 %v1617, %v1618
      %v1620 = vrot.slane %v1619, 1
      %v1621 = vmax.f32 %v1619, %v1620
      %v1622 = vsel %vm1427, %v1584, -inf
      %v1623 = vrot.slane %v1622, 4
      %v1624 = vmax.f32 %v1622, %v1623
      %v1625 = vrot.slane %v1624, 2
      %v1626 = vmax.f32 %v1624, %v1625
      %v1627 = vrot.slane %v1626, 1
      %v1628 = vmax.f32 %v1626, %v1627
      %v1629 = vsel %vm1427, %v1585, -inf
      %v1630 = vrot.slane %v1629, 4
      %v1631 = vmax.f32 %v1629, %v1630
      %v1632 = vrot.slane %v1631, 2
      %v1633 = vmax.f32 %v1631, %v1632
      %v1634 = vrot.slane %v1633, 1
      %v1635 = vmax.f32 %v1633, %v1634
      %v1636 = vsel %vm1427, %v1586, -inf
      %v1637 = vrot.slane %v1636, 4
      %v1638 = vmax.f32 %v1636, %v1637
      %v1639 = vrot.slane %v1638, 2
      %v1640 = vmax.f32 %v1638, %v1639
      %v1641 = vrot.slane %v1640, 1
      %v1642 = vmax.f32 %v1640, %v1641
      %v1643 = vsub.f32 %v1579, %v1593
      %v1644 = vsub.f32 %v1580, %v1600
      %v1645 = vsub.f32 %v1581, %v1607
      %v1646 = vsub.f32 %v1582, %v1614
      %v1647 = vsub.f32 %v1583, %v1621
      %v1648 = vsub.f32 %v1584, %v1628
      %v1649 = vsub.f32 %v1585, %v1635
      %v1650 = vsub.f32 %v1586, %v1642
      %v1651 = vmul.f32 %v1643, 1.442695
      %v1652 = vpow.pop %v1651
      %v1653 = vmul.f32 %v1644, 1.442695
      %v1654 = vpow.pop %v1653
      %v1655 = vmul.f32 %v1645, 1.442695
      %v1656 = vpow.pop %v1655
      %v1657 = vmul.f32 %v1646, 1.442695
      %v1658 = vpow.pop %v1657
      %v1659 = vmul.f32 %v1647, 1.442695
      %v1660 = vpow.pop %v1659
      %v1661 = vmul.f32 %v1648, 1.442695
      %v1662 = vpow.pop %v1661
      %v1663 = vmul.f32 %v1649, 1.442695
      %v1664 = vpow.pop %v1663
      %v1665 = vmul.f32 %v1650, 1.442695
      %v1666 = vpow.pop %v1665
      %v1667 = vsel %vm1427, %v1652, 0.0
      %v1668 = vrot.slane %v1667, 4
      %v1669 = vadd.f32 %v1667, %v1668
      %v1670 = vrot.slane %v1669, 2
      %v1671 = vadd.f32 %v1669, %v1670
      %v1672 = vrot.slane %v1671, 1
      %v1673 = vadd.f32 %v1671, %v1672
      %v1674 = vsel %vm1427, %v1654, 0.0
      %v1675 = vrot.slane %v1674, 4
      %v1676 = vadd.f32 %v1674, %v1675
      %v1677 = vrot.slane %v1676, 2
      %v1678 = vadd.f32 %v1676, %v1677
      %v1679 = vrot.slane %v1678, 1
      %v1680 = vadd.f32 %v1678, %v1679
      %v1681 = vsel %vm1427, %v1656, 0.0
      %v1682 = vrot.slane %v1681, 4
      %v1683 = vadd.f32 %v1681, %v1682
      %v1684 = vrot.slane %v1683, 2
      %v1685 = vadd.f32 %v1683, %v1684
      %v1686 = vrot.slane %v1685, 1
      %v1687 = vadd.f32 %v1685, %v1686
      %v1688 = vsel %vm1427, %v1658, 0.0
      %v1689 = vrot.slane %v1688, 4
      %v1690 = vadd.f32 %v1688, %v1689
      %v1691 = vrot.slane %v1690, 2
      %v1692 = vadd.f32 %v1690, %v1691
      %v1693 = vrot.slane %v1692, 1
      %v1694 = vadd.f32 %v1692, %v1693
      %v1695 = vsel %vm1427, %v1660, 0.0
      %v1696 = vrot.slane %v1695, 4
      %v1697 = vadd.f32 %v1695, %v1696
      %v1698 = vrot.slane %v1697, 2
      %v1699 = vadd.f32 %v1697, %v1698
      %v1700 = vrot.slane %v1699, 1
      %v1701 = vadd.f32 %v1699, %v1700
      %v1702 = vsel %vm1427, %v1662, 0.0
      %v1703 = vrot.slane %v1702, 4
      %v1704 = vadd.f32 %v1702, %v1703
      %v1705 = vrot.slane %v1704, 2
      %v1706 = vadd.f32 %v1704, %v1705
      %v1707 = vrot.slane %v1706, 1
      %v1708 = vadd.f32 %v1706, %v1707
      %v1709 = vsel %vm1427, %v1664, 0.0
      %v1710 = vrot.slane %v1709, 4
      %v1711 = vadd.f32 %v1709, %v1710
      %v1712 = vrot.slane %v1711, 2
      %v1713 = vadd.f32 %v1711, %v1712
      %v1714 = vrot.slane %v1713, 1
      %v1715 = vadd.f32 %v1713, %v1714
      %v1716 = vsel %vm1427, %v1666, 0.0
      %v1717 = vrot.slane %v1716, 4
      %v1718 = vadd.f32 %v1716, %v1717
      %v1719 = vrot.slane %v1718, 2
      %v1720 = vadd.f32 %v1718, %v1719
      %v1721 = vrot.slane %v1720, 1
      %v1722 = vadd.f32 %v1720, %v1721
      %v1723 = vrcp.pop %v1673
      %v1724 = vrcp.pop %v1680
      %v1725 = vrcp.pop %v1687
      %v1726 = vrcp.pop %v1694
      %v1727 = vrcp.pop %v1701
      %v1728 = vrcp.pop %v1708
      %v1729 = vrcp.pop %v1715
      %v1730 = vrcp.pop %v1722
      %v1731 = vmul.f32 %v1652, %v1723
      %v1732 = vmul.f32 %v1654, %v1724
      %v1733 = vmul.f32 %v1656, %v1725
      %v1734 = vmul.f32 %v1658, %v1726
      %v1735 = vmul.f32 %v1660, %v1727
      %v1736 = vmul.f32 %v1662, %v1728
      %v1737 = vmul.f32 %v1664, %v1729
      %v1738 = vmul.f32 %v1666, %v1730
      %v1739 = vmul.f32 %v1731, %v841
      %v1740 = vmul.f32 %v1732, %v841
      %v1741 = vmul.f32 %v1733, %v841
      %v1742 = vmul.f32 %v1734, %v841
      %v1743 = vmul.f32 %v1735, %v841
      %v1744 = vmul.f32 %v1736, %v841
      %v1745 = vmul.f32 %v1737, %v841
      %v1746 = vmul.f32 %v1738, %v841
      %v1747 = vsel %vm1427, %v1739, 0.0
      %v1748 = vrot.slane %v1747, 4
      %v1749 = vadd.f32 %v1747, %v1748
      %v1750 = vrot.slane %v1749, 2
      %v1751 = vadd.f32 %v1749, %v1750
      %v1752 = vrot.slane %v1751, 1
      %v1753 = vadd.f32 %v1751, %v1752
      %v1754 = vsel %vm1427, %v1740, 0.0
      %v1755 = vrot.slane %v1754, 4
      %v1756 = vadd.f32 %v1754, %v1755
      %v1757 = vrot.slane %v1756, 2
      %v1758 = vadd.f32 %v1756, %v1757
      %v1759 = vrot.slane %v1758, 1
      %v1760 = vadd.f32 %v1758, %v1759
      %v1761 = vsel %vm1427, %v1741, 0.0
      %v1762 = vrot.slane %v1761, 4
      %v1763 = vadd.f32 %v1761, %v1762
      %v1764 = vrot.slane %v1763, 2
      %v1765 = vadd.f32 %v1763, %v1764
      %v1766 = vrot.slane %v1765, 1
      %v1767 = vadd.f32 %v1765, %v1766
      %v1768 = vsel %vm1427, %v1742, 0.0
      %v1769 = vrot.slane %v1768, 4
      %v1770 = vadd.f32 %v1768, %v1769
      %v1771 = vrot.slane %v1770, 2
      %v1772 = vadd.f32 %v1770, %v1771
      %v1773 = vrot.slane %v1772, 1
      %v1774 = vadd.f32 %v1772, %v1773
      %v1775 = vsel %vm1427, %v1743, 0.0
      %v1776 = vrot.slane %v1775, 4
      %v1777 = vadd.f32 %v1775, %v1776
      %v1778 = vrot.slane %v1777, 2
      %v1779 = vadd.f32 %v1777, %v1778
      %v1780 = vrot.slane %v1779, 1
      %v1781 = vadd.f32 %v1779, %v1780
      %v1782 = vsel %vm1427, %v1744, 0.0
      %v1783 = vrot.slane %v1782, 4
      %v1784 = vadd.f32 %v1782, %v1783
      %v1785 = vrot.slane %v1784, 2
      %v1786 = vadd.f32 %v1784, %v1785
      %v1787 = vrot.slane %v1786, 1
      %v1788 = vadd.f32 %v1786, %v1787
      %v1789 = vsel %vm1427, %v1745, 0.0
      %v1790 = vrot.slane %v1789, 4
      %v1791 = vadd.f32 %v1789, %v1790
      %v1792 = vrot.slane %v1791, 2
      %v1793 = vadd.f32 %v1791, %v1792
      %v1794 = vrot.slane %v1793, 1
      %v1795 = vadd.f32 %v1793, %v1794
      %v1796 = vsel %vm1427, %v1746, 0.0
      %v1797 = vrot.slane %v1796, 4
      %v1798 = vadd.f32 %v1796, %v1797
      %v1799 = vrot.slane %v1798, 2
      %v1800 = vadd.f32 %v1798, %v1799
      %v1801 = vrot.slane %v1800, 1
      %v1802 = vadd.f32 %v1800, %v1801
      %v1803 = vld [vmem:[%s803] sm:$0x1]
      %v1804 = vld [vmem:[%s806] sm:$0x1]
      %v1806 = vlaneseq
      %v1807 = vshrl.u32 %v1806, 7
      %v1808 = vsub.s32 0, %v1807
      %v1809 = vrot.slane %v1804, %v1808
      %vm1819 = vcmask 1041409
      %v1820 = vsel %vm1819, %v1760, %v1753
      %vm1821 = vcmask 1042434
      %v1822 = vsel %vm1821, %v1767, %v1820
      %vm1823 = vcmask 1043459
      %v1824 = vsel %vm1823, %v1774, %v1822
      %vm1825 = vcmask 1044484
      %v1826 = vsel %vm1825, %v1781, %v1824
      %vm1827 = vcmask 1045509
      %v1828 = vsel %vm1827, %v1788, %v1826
      %vm1829 = vcmask 1046534
      %v1830 = vsel %vm1829, %v1795, %v1828
      %vm1831 = vcmask 1047559
      %v1832 = vsel %vm1831, %v1802, %v1830
      %v1834 = vmul.f32 %v1809, %v1832
      %v1836 = vlaneseq
      %v1837 = vshrl.u32 %v1836, 7
      %v1838 = vsub.s32 0, %v1837
      %v1839 = vrot.slane %v1803, %v1838
      %v1841 = vadd.f32 %v1839, %v1834
      %v1842 = vld [vmem:[%s16] sm:$0xff]
      %v1843 = vld [vmem:[%s16 + $0x8] sm:$0xff]
      %v1844 = vld [vmem:[%s16 + $0x10] sm:$0xff]
      %v1845 = vld [vmem:[%s16 + $0x18] sm:$0xff]
      %v1846 = vld [vmem:[%s17] sm:$0x1]
      %v1848 = vlaneseq
      %v1849 = vshrl.u32 %v1848, 7
      %v1850 = vsub.s32 0, %v1849
      %v1851 = vrot.slane %v1846, %v1850
      %v1854 = vsel %vm1427, %v1841, 0
      %1856 = vmatprep.subr.mxu0 0.0
      %1857 = vmatpush1.msra.mxu0 %v1842
      %1858 = vmatprep.subr.mxu0 0.0
      %1859 = vmatpush1.msra.mxu0 %v1843
      %1860 = vmatprep.subr.mxu0 0.0
      %1861 = vmatpush1.msra.mxu0 %v1844
      %1862 = vmatprep.subr.mxu0 0.0
      %1863 = vmatpush1.msra.mxu0 %v1845
      %1864 = vmatprep.subr.mxu0 0.0
      %1865 = vmatpush1.msra.mxu0 0.0
      %1866 = vmatprep.subr.mxu0 0.0
      %1867 = vmatpush1.msra.mxu0 0.0
      %1868 = vmatprep.subr.mxu0 0.0
      %1869 = vmatpush1.msra.mxu0 0.0
      %1870 = vmatprep.subr.mxu0 0.0
      %1871 = vmatpush1.msra.mxu0 0.0
      %1872 = vmatprep.subr.mxu0 0.0
      %1873 = vmatpush1.msra.mxu0 0.0
      %1874 = vmatprep.subr.mxu0 0.0
      %1875 = vmatpush1.msra.mxu0 0.0
      %1876 = vmatprep.subr.mxu0 0.0
      %1877 = vmatpush1.msra.mxu0 0.0
      %1878 = vmatprep.subr.mxu0 0.0
      %1879 = vmatpush1.msra.mxu0 0.0
      %1880 = vmatprep.subr.mxu0 0.0
      %1881 = vmatpush1.msra.mxu0 0.0
      %1882 = vmatprep.subr.mxu0 0.0
      %1883 = vmatpush1.msra.mxu0 0.0
      %1884 = vmatprep.subr.mxu0 0.0
      %1885 = vmatpush1.msra.mxu0 0.0
      %1886 = vmatprep.subr.mxu0 0.0
      %1887 = vmatpush1.msra.mxu0 0.0
      %1888 = vmatprep.subr.mxu0 0.0
      %1889 = vmatpush1.msra.mxu0 0.0
      %1890 = vmatprep.subr.mxu0 0.0
      %1891 = vmatpush1.msra.mxu0 0.0
      %1892 = vmatprep.subr.mxu0 0.0
      %1893 = vmatpush1.msra.mxu0 0.0
      %1894 = vmatprep.subr.mxu0 0.0
      %1895 = vmatpush1.msra.mxu0 0.0
      %1896 = vmatprep.subr.mxu0 0.0
      %1897 = vmatpush1.msra.mxu0 0.0
      %1898 = vmatprep.subr.mxu0 0.0
      %1899 = vmatpush1.msra.mxu0 0.0
      %1900 = vmatprep.subr.mxu0 0.0
      %1901 = vmatpush1.msra.mxu0 0.0
      %1902 = vmatprep.subr.mxu0 0.0
      %1903 = vmatpush1.msra.mxu0 0.0
      %1904 = vmatprep.subr.mxu0 0.0
      %1905 = vmatpush1.msra.mxu0 0.0
      %1906 = vmatprep.subr.mxu0 0.0
      %1907 = vmatpush1.msra.mxu0 0.0
      %1908 = vmatprep.subr.mxu0 0.0
      %1909 = vmatpush1.msra.mxu0 0.0
      %1910 = vmatprep.subr.mxu0 0.0
      %1911 = vmatpush1.msra.mxu0 0.0
      %1912 = vmatprep.subr.mxu0 0.0
      %1913 = vmatpush1.msra.mxu0 0.0
      %1914 = vmatprep.subr.mxu0 0.0
      %1915 = vmatpush1.msra.mxu0 0.0
      %1916 = vmatprep.subr.mxu0 0.0
      %1917 = vmatpush1.msra.mxu0 0.0
      %1918 = vmatprep.subr.mxu0 0.0
      %1919 = vmatpush1.msra.mxu0 0.0
      %1920 = vmatprep.mubr.f32.mxu0 0.0
      %1921 = vmatmul.mubr.f32.gmra.mrb[0].mxu0 %v1854
      %v1922 = vpop.f32.mrb[0].mxu0
      %v1923 = vadd.f32 %v1851, %v1922
      %v1924 = vpop.f32.mrb[0].mxu0
      %1925 = vdwg.mxu0
      %v1926 = vmul.f32 %v1923, %v830
      %1927 = vst.msk [vmem:[%s823] sm:$0xff] %vm1427, %v1926
      %s1928 = smul.u32 8, %s36
      %p1929 = scmp.lt.s32.totalorder %s35, 1
      %s1930 = scalar_select %p1929, %s35, 1
      %p1931 = scmp.lt.s32.totalorder %s1928, 7
      %s1932 = scalar_select %p1931, %s1928, 7
      %s1933 = smul.addr %s1930, 8
      %s1934 = sadd.s32 %s1932, %s1933
      %s1935 = smul.addr %s1934, 8
      %s1936 = scalar_lea.vmem %s18, %s1935
      %p1937 = scmp.lt.s32.totalorder %s35, 1
      %s1938 = scalar_select %p1937, %s35, 1
      %p1939 = scmp.lt.s32.totalorder %s36, 0
      %s1940 = scalar_select %p1939, %s36, 0
      %s1941 = sadd.s32 %s1940, %s1938
      %s1942 = smul.addr %s1941, 8
      %s1943 = scalar_lea.vmem %s19, %s1942
      // Predicated region
      $region93: #{xey_transformer_layer.5} parent=91 // pred_check
        %p1944 = pneg %p497
      $region94: #{xey_transformer_layer.5} parent=91 // pred_check_branch
        %1946 = sbr.rel (%p1944) target = $region96
      $region95: #{xey_transformer_layer.5} parent=91 // pred_region
        %s1947 = smul.u32 8, %s36
      $region96: #{xey_transformer_layer.5} parent=91 // pred_fallthru
        _
      // Predicated region
      $region97: #{xey_transformer_layer.5} parent=91 // pred_check
        %p1948 = pneg %p525
      $region98: #{xey_transformer_layer.5} parent=91 // pred_check_branch
        %1950 = sbr.rel (%p1948) target = $region100
      $region99: #{xey_transformer_layer.5} parent=91 // pred_region
        _
      $region100: #{xey_transformer_layer.5} parent=91 // pred_fallthru
        _
    $region92: #{xey_transformer_layer.5} parent=5 // pred_fallthru
      _
    %p1951 = scmp.le.s32.totalorder 2, %s26
    // Predicated region
    $region101: #{xey_transformer_layer.5} parent=5 // pred_check
      %p1952 = pneg %p1951
    $region102: #{xey_transformer_layer.5} parent=5 // pred_check_branch
      %1954 = sbr.rel (%p1952) target = $region104
    $region103: #{xey_transformer_layer.5} parent=5 // pred_region
      %s1955 = ssub.s32 %s26, 2
      // Predicated region
      $region105: #{xey_transformer_layer.5} parent=103 // pred_check
        %p1956 = pneg %p503
      $region106: #{xey_transformer_layer.5} parent=103 // pred_check_branch
        %1958 = sbr.rel (%p1956) target = $region108
      $region107: #{xey_transformer_layer.5} parent=103 // pred_region
        %s1959 = smul.u32 8, %s38
        %p1960 = scmp.lt.s32.totalorder %s37, 1
        %s1961 = scalar_select %p1960, %s37, 1
        %p1962 = scmp.lt.s32.totalorder %s1959, 7
        %s1963 = scalar_select %p1962, %s1959, 7
        %s1964 = smul.addr %s1961, 8
        %s1965 = sadd.s32 %s1963, %s1964
        %s1966 = smul.addr %s1965, 8
        %s1967 = scalar_lea.vmem %s18, %s1966
      $region108: #{xey_transformer_layer.5} parent=103 // pred_fallthru
        _
      // Predicated region
      $region109: #{xey_transformer_layer.5} parent=103 // pred_check
        %p1968 = pneg %p531
      $region110: #{xey_transformer_layer.5} parent=103 // pred_check_branch
        %1970 = sbr.rel (%p1968) target = $region112
      $region111: #{xey_transformer_layer.5} parent=103 // pred_region
        %p1971 = scmp.lt.s32.totalorder %s37, 1
        %s1972 = scalar_select %p1971, %s37, 1
        %p1973 = scmp.lt.s32.totalorder %s38, 0
        %s1974 = scalar_select %p1973, %s38, 0
        %s1975 = sadd.s32 %s1974, %s1972
        %s1976 = smul.addr %s1975, 8
        %s1977 = scalar_lea.vmem %s19, %s1976
      $region112: #{xey_transformer_layer.5} parent=103 // pred_fallthru
        _
    $region104: #{xey_transformer_layer.5} parent=5 // pred_fallthru
      _
  $region6: #{xey_transformer_layer.5} parent=0 // loop_footer
    %s30 = sadd.s32 1, %s26
  $region7: #{xey_transformer_layer.5} parent=0 // loop_footer_branch
    %25 = sbr.rel target = $region3
  $region8: #{xey_transformer_layer.5} parent=0 // loop_exit
    _

</llo_original>
